<compile_context>
chip_gen: v5e
topology: v5e:2x2
jax: 0.10.0
libtpu: 0.0.40
codegen_flags: <defaults>
</compile_context>

<pallas_src>
import numpy as np

import jax
import jax.numpy as jnp
from jax import lax
from jax.experimental import pallas as pl
from jax.experimental.pallas import tpu as pltpu


# ---------------------------------------------------------------------------
# Host-side weight repacking ("block space"):
#   Every activation lives on a shared (H/4, W/4) block grid.  An activation
#   of spatial resolution R = G*bh with C channels is stored packed as
#   (G, G, bh*bh*C) with packed channel (py*bh + px)*C + c.
#   A stride-2 conv (iy = 2*y + k - 1) or a 2x-nearest-upsample + conv
#   (iy = (y + k - 1) // 2) then becomes a plain 3x3 conv over block indices
#   with scattered/combined weights.  Built once on host with numpy.
# ---------------------------------------------------------------------------
def _block_conv_params(w, b, bhi, bho, mode):
    """w: (3,3,cin,cout) f32, b: (cout,) f32.
    Returns (9*bhi*bhi*cin, bho*bho*cout) weight and (1, bho*bho*cout) bias."""
    cin, cout = w.shape[2], w.shape[3]
    cpi, cpo = bhi * bhi * cin, bho * bho * cout
    wb = np.zeros((3, 3, cpi, cpo), np.float32)
    bb = np.zeros((cpo,), np.float32)

    def rel(p, k):
        if mode == "stride2":              # 3x3 conv, stride 2, pad 1
            return 2 * p + k - 1
        elif mode == "up2":                # 2x nearest upsample, then 3x3 conv
            return (p + k - 1) // 2        # Python floor handles the -1 pad case
        raise ValueError(mode)

    for pyo in range(bho):
        for pxo in range(bho):
            for co in range(cout):
                oc = (pyo * bho + pxo) * cout + co
                bb[oc] = b[co]
                for ky in range(3):
                    for kx in range(3):
                        ry, rx = rel(pyo, ky), rel(pxo, kx)
                        dby, pyi = ry // bhi, ry % bhi
                        dbx, pxi = rx // bhi, rx % bhi
                        assert -1 <= dby <= 1 and -1 <= dbx <= 1
                        for ci in range(cin):
                            ic = (pyi * bhi + pxi) * cin + ci
                            # += : overlapping upsample taps combine (sub-pixel conv)
                            wb[dby + 1, dbx + 1, ic, oc] += w[ky, kx, ci, co]
    return wb.reshape(9 * cpi, cpo), bb.reshape(1, cpo)


# ---------------------------------------------------------------------------
# Parameters (same architecture / init as before)
# ---------------------------------------------------------------------------
def init_params(key):
    def conv_init(k, cin, cout):
        kw, kb = jax.random.split(k)
        fan_in = 3 * 3 * cin
        w = jax.random.normal(kw, (3, 3, cin, cout), jnp.float32) / jnp.sqrt(
            jnp.float32(fan_in))
        b = 0.01 * jax.random.normal(kb, (cout,), jnp.float32)
        return w, b

    k1, k2, k3, k4 = jax.random.split(key, 4)
    return {
        "enc1": conv_init(k1, 3, 8),     # 3 -> 8,  stride 2
        "enc2": conv_init(k2, 8, 16),    # 8 -> 16, stride 2
        "dec1": conv_init(k3, 16, 8),    # up2 + conv, 16 -> 8
        "disp": conv_init(k4, 8, 1),     # up2 + dispconv, 8 -> 1, sigmoid
    }


def pack_params(params):
    """One-time host-side repack of the conv weights into block space (bf16)."""
    def pack(name, bhi, bho, mode):
        w = np.asarray(params[name][0], np.float32)
        b = np.asarray(params[name][1], np.float32)
        wb, bb = _block_conv_params(w, b, bhi, bho, mode)
        return jnp.asarray(wb, jnp.bfloat16), jnp.asarray(bb, jnp.float32)

    w1, b1 = pack("enc1", 4, 2, "stride2")   # (432, 32)
    w2, b2 = pack("enc2", 2, 1, "stride2")   # (288, 16)
    w3, b3 = pack("dec1", 1, 2, "up2")       # (144, 32)
    w4, b4 = pack("disp", 2, 4, "up2")       # (288, 16)
    return {"w1": w1, "b1": b1, "w2": w2, "b2": b2,
            "w3": w3, "b3": b3, "w4": w4, "b4": b4}


# ---------------------------------------------------------------------------
# Fused forward: one pallas_call, grid over batch.
# ---------------------------------------------------------------------------
def depth_model_forward(x_nchw, packed):
    N, C, H, W = x_nchw.shape
    assert C == 3 and H % 4 == 0 and W % 4 == 0
    Gy, Gx = H // 4, W // 4          # shared block grid (total encoder stride = 4)
    M = Gy * Gx                      # number of blocks = im2col rows
    cpi_max = packed["w1"].shape[0] // 9     # 48

    # Wrapper-side space-to-depth of the input image (free XLA layout ops):
    # (N,3,H,W) -> (N, Gy*Gx, 4*4*3), packed channel = (py*4+px)*3 + c.
    x_nhwc = jnp.transpose(x_nchw, (0, 2, 3, 1))
    xb = x_nhwc.reshape(N, Gy, 4, Gx, 4, 3)
    xb = jnp.transpose(xb, (0, 1, 3, 2, 4, 5)).reshape(N, M, 48)

    def kernel(x_ref, w1, b1, w2, b2, w3, b3, w4, b4, o_ref,
               pad_a, pad_b, pad_c, pad_d, im_ref):

        def zero_border(pad):
            # Only the 1-block pad ring; the interior is fully overwritten below.
            gy2, gx2, cp = pad.shape
            z_row = jnp.zeros((1, gx2, cp), pad.dtype)
            z_col = jnp.zeros((gy2 - 2, 1, cp), pad.dtype)
            pad[0:1, :, :] = z_row
            pad[gy2 - 1:gy2, :, :] = z_row
            pad[1:gy2 - 1, 0:1, :] = z_col
            pad[1:gy2 - 1, gx2 - 1:gx2, :] = z_col

        def write_interior(pad, val):            # val: (M, cp) f32
            v = val.astype(pad.dtype)            # single cast to bf16 scratch
            for by in range(Gy):
                pad[by + 1, 1:Gx + 1, :] = v[by * Gx:(by + 1) * Gx, :]

        def block_conv(pad, w_ref, b_ref, act):
            cp = pad.shape[-1]
            # im2col: row = output block (by*Gx + bx), cols = tap*cp + packed chan.
            # Each tap is a unit-stride 2D slice, materialized exactly once.
            for t in range(9):
                dby, dbx = divmod(t, 3)
                for by in range(Gy):
                    im_ref[by * Gx:(by + 1) * Gx, t * cp:(t + 1) * cp] = (
                        pad[by + dby, dbx:dbx + Gx, :])
            y = jnp.dot(im_ref[:, :9 * cp], w_ref[...],
                        preferred_element_type=jnp.float32) + b_ref[...]
            return act(y)                        # fp32 epilogue

        relu = lambda v: jnp.maximum(v, 0.0)

        # enc1: packed 48 -> 32  (stride-2 folded into weights)
        zero_border(pad_a)
        write_interior(pad_a, x_ref[0])
        f1 = block_conv(pad_a, w1, b1, relu)                 # (M, 32)

        # enc2: packed 32 -> 16
        zero_border(pad_b)
        write_interior(pad_b, f1)
        f2 = block_conv(pad_b, w2, b2, relu)                 # (M, 16)

        # dec1: packed 16 -> 32  (2x nearest upsample folded into weights)
        zero_border(pad_c)
        write_interior(pad_c, f2)
        d1 = block_conv(pad_c, w3, b3, relu)                 # (M, 32)

        # dispconv: packed 32 -> 16, sigmoid (same matmul path, no VPU MAC loop)
        zero_border(pad_d)
        write_interior(pad_d, d1)
        disp = block_conv(pad_d, w4, b4, jax.nn.sigmoid)     # (M, 16)

        o_ref[0] = disp.astype(o_ref.dtype)

    grid_spec = pltpu.PrefetchScalarGridSpec(
        num_scalar_prefetch=0,
        grid=(N,),
        in_specs=[
            pl.BlockSpec((1, M, 48), lambda n: (n, 0, 0)),
            pl.BlockSpec(packed["w1"].shape, lambda n: (0, 0)),
            pl.BlockSpec(packed["b1"].shape, lambda n: (0, 0)),
            pl.BlockSpec(packed["w2"].shape, lambda n: (0, 0)),
            pl.BlockSpec(packed["b2"].shape, lambda n: (0, 0)),
            pl.BlockSpec(packed["w3"].shape, lambda n: (0, 0)),
            pl.BlockSpec(packed["b3"].shape, lambda n: (0, 0)),
            pl.BlockSpec(packed["w4"].shape, lambda n: (0, 0)),
            pl.BlockSpec(packed["b4"].shape, lambda n: (0, 0)),
        ],
        out_specs=pl.BlockSpec((1, M, 16), lambda n: (n, 0, 0)),
        scratch_shapes=[
            pltpu.VMEM((Gy + 2, Gx + 2, 48), jnp.bfloat16),   # padded enc1 input
            pltpu.VMEM((Gy + 2, Gx + 2, 32), jnp.bfloat16),   # padded enc2 input
            pltpu.VMEM((Gy + 2, Gx + 2, 16), jnp.bfloat16),   # padded dec1 input
            pltpu.VMEM((Gy + 2, Gx + 2, 32), jnp.bfloat16),   # padded disp input
            pltpu.VMEM((M, 9 * cpi_max), jnp.bfloat16),       # shared im2col buffer
        ],
    )

    disp_packed = pl.pallas_call(
        kernel,
        out_shape=jax.ShapeDtypeStruct((N, M, 16), jnp.float32),
        grid_spec=grid_spec,
        compiler_params=pltpu.CompilerParams(
            dimension_semantics=("parallel",),        # v7x: one batch elem per TC
            vmem_limit_bytes=32 * 1024 * 1024),
    )(xb, packed["w1"], packed["b1"], packed["w2"], packed["b2"],
      packed["w3"], packed["b3"], packed["w4"], packed["b4"])

    # Depth-to-space of the packed disparity back to NCHW (wrapper-side, free).
    dp = disp_packed.reshape(N, Gy, Gx, 4, 4)                  # (N, gy, gx, py, px)
    disp = jnp.transpose(dp, (0, 1, 3, 2, 4)).reshape(N, 1, H, W)

    outputs = {("disp", 0): disp}
    return outputs[("disp", 0)]


# ---------------------------------------------------------------------------
# Pure-JAX reference of the same encoder/decoder (fp32) for a tolerance check.
# ---------------------------------------------------------------------------
def _reference_forward(x_nchw, params):
    x = jnp.transpose(x_nchw, (0, 2, 3, 1))

    def conv(v, name, stride):
        w, b = params[name]
        y = lax.conv_general_dilated(
            v, w, window_strides=(stride, stride), padding=((1, 1), (1, 1)),
            dimension_numbers=("NHWC", "HWIO", "NHWC"))
        return y + b

    up = lambda v: jnp.repeat(jnp.repeat(v, 2, axis=1), 2, axis=2)

    f1 = jax.nn.relu(conv(x, "enc1", 2))
    f2 = jax.nn.relu(conv(f1, "enc2", 2))
    d1 = jax.nn.relu(conv(up(f2), "dec1", 1))
    disp = jax.nn.sigmoid(conv(up(d1), "disp", 1))
    return jnp.transpose(disp, (0, 3, 1, 2))


if __name__ == "__main__":
    key = jax.random.PRNGKey(0)
    pkey, xkey = jax.random.split(key)
    params = init_params(pkey)
    x = jax.random.normal(xkey, (2, 3, 16, 16), jnp.float32)  # NCHW input image

    packed = pack_params(params)
    disp = jax.jit(depth_model_forward)(x, packed)
    jax.block_until_ready(disp)

    assert disp.shape == (2, 1, 16, 16), disp.shape
    assert bool(jnp.all((disp >= 0.0) & (disp <= 1.0))), "disp must be sigmoid-bounded"

    # bf16 MXU inputs / fp32 accumulation vs fp32 reference -> explicit tolerance.
    ref = _reference_forward(x, params)
    err = float(jnp.max(jnp.abs(disp - ref)))
    assert err < 3e-2, f"max |pallas - reference| = {err}"

    print("KERNEL_OK")
</pallas_src>

<mosaic_0001>
module attributes {stable_mosaic.version = 11 : i64} {
  func.func @kernel(%arg0: i32, %arg1: memref<1x16x48xf32, #tpu.memory_space<vmem>>, %arg2: memref<432x32xbf16, #tpu.memory_space<vmem>>, %arg3: memref<1x32xf32, #tpu.memory_space<vmem>>, %arg4: memref<288x16xbf16, #tpu.memory_space<vmem>>, %arg5: memref<1x16xf32, #tpu.memory_space<vmem>>, %arg6: memref<144x32xbf16, #tpu.memory_space<vmem>>, %arg7: memref<1x32xf32, #tpu.memory_space<vmem>>, %arg8: memref<288x16xbf16, #tpu.memory_space<vmem>>, %arg9: memref<1x16xf32, #tpu.memory_space<vmem>>, %arg10: memref<1x16x16xf32, #tpu.memory_space<vmem>>, %arg11: memref<6x6x48xbf16, #tpu.memory_space<vmem>>, %arg12: memref<6x6x32xbf16, #tpu.memory_space<vmem>>, %arg13: memref<6x6x16xbf16, #tpu.memory_space<vmem>>, %arg14: memref<6x6x32xbf16, #tpu.memory_space<vmem>>, %arg15: memref<16x432xbf16, #tpu.memory_space<vmem>>) attributes {dimension_semantics = [#tpu.dimension_semantics<parallel>], iteration_bounds = array<i64: 2>, scalar_prefetch = 0 : i64, scratch_operands = 5 : i64, tpu.core_type = #tpu.core_type<tc>, window_params = [{transform_indices = @transform_0, window_bounds = array<i64: 1, 16, 48>}, {pipeline_mode = #tpu.pipeline_mode<synchronous>, transform_indices = @transform_1, window_bounds = array<i64: 432, 32>}, {pipeline_mode = #tpu.pipeline_mode<synchronous>, transform_indices = @transform_2, window_bounds = array<i64: 1, 32>}, {pipeline_mode = #tpu.pipeline_mode<synchronous>, transform_indices = @transform_3, window_bounds = array<i64: 288, 16>}, {pipeline_mode = #tpu.pipeline_mode<synchronous>, transform_indices = @transform_4, window_bounds = array<i64: 1, 16>}, {pipeline_mode = #tpu.pipeline_mode<synchronous>, transform_indices = @transform_5, window_bounds = array<i64: 144, 32>}, {pipeline_mode = #tpu.pipeline_mode<synchronous>, transform_indices = @transform_6, window_bounds = array<i64: 1, 32>}, {pipeline_mode = #tpu.pipeline_mode<synchronous>, transform_indices = @transform_7, window_bounds = array<i64: 288, 16>}, {pipeline_mode = #tpu.pipeline_mode<synchronous>, transform_indices = @transform_8, window_bounds = array<i64: 1, 16>}, {transform_indices = @transform_9, window_bounds = array<i64: 1, 16, 16>}]} {
    %cst = arith.constant 0.000000e+00 : bf16
    %0 = vector.broadcast %cst : bf16 to vector<1x6x48xbf16>
    %cst_0 = arith.constant 0.000000e+00 : bf16
    %1 = vector.broadcast %cst_0 : bf16 to vector<4x1x48xbf16>
    %c0 = arith.constant 0 : index
    %c0_1 = arith.constant 0 : index
    %c0_2 = arith.constant 0 : index
    %2 = vector.load %arg11[%c0, %c0_1, %c0_2] : memref<6x6x48xbf16, #tpu.memory_space<vmem>>, vector<1x6x48xbf16>
    tpu.vector_store %arg11[%c0, %c0_1, %c0_2], %0 {strides = array<i32>} : memref<6x6x48xbf16, #tpu.memory_space<vmem>>, vector<1x6x48xbf16>,
    %c5 = arith.constant 5 : index
    %c0_3 = arith.constant 0 : index
    %c0_4 = arith.constant 0 : index
    %3 = vector.load %arg11[%c5, %c0_3, %c0_4] : memref<6x6x48xbf16, #tpu.memory_space<vmem>>, vector<1x6x48xbf16>
    tpu.vector_store %arg11[%c5, %c0_3, %c0_4], %0 {strides = array<i32>} : memref<6x6x48xbf16, #tpu.memory_space<vmem>>, vector<1x6x48xbf16>,
    %c1 = arith.constant 1 : index
    %c0_5 = arith.constant 0 : index
    %c0_6 = arith.constant 0 : index
    %4 = vector.load %arg11[%c1, %c0_5, %c0_6] : memref<6x6x48xbf16, #tpu.memory_space<vmem>>, vector<4x1x48xbf16>
    tpu.vector_store %arg11[%c1, %c0_5, %c0_6], %1 {strides = array<i32>} : memref<6x6x48xbf16, #tpu.memory_space<vmem>>, vector<4x1x48xbf16>,
    %c1_7 = arith.constant 1 : index
    %c5_8 = arith.constant 5 : index
    %c0_9 = arith.constant 0 : index
    %5 = vector.load %arg11[%c1_7, %c5_8, %c0_9] : memref<6x6x48xbf16, #tpu.memory_space<vmem>>, vector<4x1x48xbf16>
    tpu.vector_store %arg11[%c1_7, %c5_8, %c0_9], %1 {strides = array<i32>} : memref<6x6x48xbf16, #tpu.memory_space<vmem>>, vector<4x1x48xbf16>,
    %c0_10 = arith.constant 0 : index
    %c0_11 = arith.constant 0 : index
    %c0_12 = arith.constant 0 : index
    %6 = vector.load %arg1[%c0_10, %c0_11, %c0_12] : memref<1x16x48xf32, #tpu.memory_space<vmem>>, vector<1x16x48xf32>
    %7 = vector.shape_cast %6 : vector<1x16x48xf32> to vector<16x48xf32>
    %8 = arith.truncf %7 : vector<16x48xf32> to vector<16x48xbf16>
    %9 = vector.extract_strided_slice %8 {offsets = [0, 0], sizes = [4, 48], strides = [1, 1]} : vector<16x48xbf16> to vector<4x48xbf16>
    %c1_13 = arith.constant 1 : index
    %c1_14 = arith.constant 1 : index
    %c0_15 = arith.constant 0 : index
    %10 = vector.load %arg11[%c1_13, %c1_14, %c0_15] : memref<6x6x48xbf16, #tpu.memory_space<vmem>>, vector<1x4x48xbf16>
    %11 = vector.shape_cast %10 : vector<1x4x48xbf16> to vector<4x48xbf16>
    %12 = vector.shape_cast %9 : vector<4x48xbf16> to vector<1x4x48xbf16>
    tpu.vector_store %arg11[%c1_13, %c1_14, %c0_15], %12 {strides = array<i32>} : memref<6x6x48xbf16, #tpu.memory_space<vmem>>, vector<1x4x48xbf16>,
    %13 = vector.extract_strided_slice %8 {offsets = [4, 0], sizes = [4, 48], strides = [1, 1]} : vector<16x48xbf16> to vector<4x48xbf16>
    %c2 = arith.constant 2 : index
    %c1_16 = arith.constant 1 : index
    %c0_17 = arith.constant 0 : index
    %14 = vector.load %arg11[%c2, %c1_16, %c0_17] : memref<6x6x48xbf16, #tpu.memory_space<vmem>>, vector<1x4x48xbf16>
    %15 = vector.shape_cast %14 : vector<1x4x48xbf16> to vector<4x48xbf16>
    %16 = vector.shape_cast %13 : vector<4x48xbf16> to vector<1x4x48xbf16>
    tpu.vector_store %arg11[%c2, %c1_16, %c0_17], %16 {strides = array<i32>} : memref<6x6x48xbf16, #tpu.memory_space<vmem>>, vector<1x4x48xbf16>,
    %17 = vector.extract_strided_slice %8 {offsets = [8, 0], sizes = [4, 48], strides = [1, 1]} : vector<16x48xbf16> to vector<4x48xbf16>
    %c3 = arith.constant 3 : index
    %c1_18 = arith.constant 1 : index
    %c0_19 = arith.constant 0 : index
    %18 = vector.load %arg11[%c3, %c1_18, %c0_19] : memref<6x6x48xbf16, #tpu.memory_space<vmem>>, vector<1x4x48xbf16>
    %19 = vector.shape_cast %18 : vector<1x4x48xbf16> to vector<4x48xbf16>
    %20 = vector.shape_cast %17 : vector<4x48xbf16> to vector<1x4x48xbf16>
    tpu.vector_store %arg11[%c3, %c1_18, %c0_19], %20 {strides = array<i32>} : memref<6x6x48xbf16, #tpu.memory_space<vmem>>, vector<1x4x48xbf16>,
    %21 = vector.extract_strided_slice %8 {offsets = [12, 0], sizes = [4, 48], strides = [1, 1]} : vector<16x48xbf16> to vector<4x48xbf16>
    %c4 = arith.constant 4 : index
    %c1_20 = arith.constant 1 : index
    %c0_21 = arith.constant 0 : index
    %22 = vector.load %arg11[%c4, %c1_20, %c0_21] : memref<6x6x48xbf16, #tpu.memory_space<vmem>>, vector<1x4x48xbf16>
    %23 = vector.shape_cast %22 : vector<1x4x48xbf16> to vector<4x48xbf16>
    %24 = vector.shape_cast %21 : vector<4x48xbf16> to vector<1x4x48xbf16>
    tpu.vector_store %arg11[%c4, %c1_20, %c0_21], %24 {strides = array<i32>} : memref<6x6x48xbf16, #tpu.memory_space<vmem>>, vector<1x4x48xbf16>,
    %c0_22 = arith.constant 0 : index
    %c0_23 = arith.constant 0 : index
    %c0_24 = arith.constant 0 : index
    %25 = vector.load %arg11[%c0_22, %c0_23, %c0_24] : memref<6x6x48xbf16, #tpu.memory_space<vmem>>, vector<1x4x48xbf16>
    %26 = vector.shape_cast %25 : vector<1x4x48xbf16> to vector<4x48xbf16>
    %c0_25 = arith.constant 0 : index
    %c0_26 = arith.constant 0 : index
    %27 = vector.load %arg15[%c0_25, %c0_26] : memref<16x432xbf16, #tpu.memory_space<vmem>>, vector<4x48xbf16>
    tpu.vector_store %arg15[%c0_25, %c0_26], %26 {strides = array<i32>} : memref<16x432xbf16, #tpu.memory_space<vmem>>, vector<4x48xbf16>,
    %c1_27 = arith.constant 1 : index
    %c0_28 = arith.constant 0 : index
    %c0_29 = arith.constant 0 : index
    %28 = vector.load %arg11[%c1_27, %c0_28, %c0_29] : memref<6x6x48xbf16, #tpu.memory_space<vmem>>, vector<1x4x48xbf16>
    %29 = vector.shape_cast %28 : vector<1x4x48xbf16> to vector<4x48xbf16>
    %c4_30 = arith.constant 4 : index
    %c0_31 = arith.constant 0 : index
    %30 = vector.load %arg15[%c4_30, %c0_31] : memref<16x432xbf16, #tpu.memory_space<vmem>>, vector<4x48xbf16>
    tpu.vector_store %arg15[%c4_30, %c0_31], %29 {strides = array<i32>} : memref<16x432xbf16, #tpu.memory_space<vmem>>, vector<4x48xbf16>,
    %c2_32 = arith.constant 2 : index
    %c0_33 = arith.constant 0 : index
    %c0_34 = arith.constant 0 : index
    %31 = vector.load %arg11[%c2_32, %c0_33, %c0_34] : memref<6x6x48xbf16, #tpu.memory_space<vmem>>, vector<1x4x48xbf16>
    %32 = vector.shape_cast %31 : vector<1x4x48xbf16> to vector<4x48xbf16>
    %c8 = arith.constant 8 : index
    %c0_35 = arith.constant 0 : index
    %33 = vector.load %arg15[%c8, %c0_35] : memref<16x432xbf16, #tpu.memory_space<vmem>>, vector<4x48xbf16>
    tpu.vector_store %arg15[%c8, %c0_35], %32 {strides = array<i32>} : memref<16x432xbf16, #tpu.memory_space<vmem>>, vector<4x48xbf16>,
    %c3_36 = arith.constant 3 : index
    %c0_37 = arith.constant 0 : index
    %c0_38 = arith.constant 0 : index
    %34 = vector.load %arg11[%c3_36, %c0_37, %c0_38] : memref<6x6x48xbf16, #tpu.memory_space<vmem>>, vector<1x4x48xbf16>
    %35 = vector.shape_cast %34 : vector<1x4x48xbf16> to vector<4x48xbf16>
    %c12 = arith.constant 12 : index
    %c0_39 = arith.constant 0 : index
    %36 = vector.load %arg15[%c12, %c0_39] : memref<16x432xbf16, #tpu.memory_space<vmem>>, vector<4x48xbf16>
    tpu.vector_store %arg15[%c12, %c0_39], %35 {strides = array<i32>} : memref<16x432xbf16, #tpu.memory_space<vmem>>, vector<4x48xbf16>,
    %c0_40 = arith.constant 0 : index
    %c1_41 = arith.constant 1 : index
    %c0_42 = arith.constant 0 : index
    %37 = vector.load %arg11[%c0_40, %c1_41, %c0_42] : memref<6x6x48xbf16, #tpu.memory_space<vmem>>, vector<1x4x48xbf16>
    %38 = vector.shape_cast %37 : vector<1x4x48xbf16> to vector<4x48xbf16>
    %c0_43 = arith.constant 0 : index
    %c48 = arith.constant 48 : index
    %39 = vector.load %arg15[%c0_43, %c48] : memref<16x432xbf16, #tpu.memory_space<vmem>>, vector<4x48xbf16>
    tpu.vector_store %arg15[%c0_43, %c48], %38 {strides = array<i32>} : memref<16x432xbf16, #tpu.memory_space<vmem>>, vector<4x48xbf16>,
    %c1_44 = arith.constant 1 : index
    %c1_45 = arith.constant 1 : index
    %c0_46 = arith.constant 0 : index
    %40 = vector.load %arg11[%c1_44, %c1_45, %c0_46] : memref<6x6x48xbf16, #tpu.memory_space<vmem>>, vector<1x4x48xbf16>
    %41 = vector.shape_cast %40 : vector<1x4x48xbf16> to vector<4x48xbf16>
    %c4_47 = arith.constant 4 : index
    %c48_48 = arith.constant 48 : index
    %42 = vector.load %arg15[%c4_47, %c48_48] : memref<16x432xbf16, #tpu.memory_space<vmem>>, vector<4x48xbf16>
    tpu.vector_store %arg15[%c4_47, %c48_48], %41 {strides = array<i32>} : memref<16x432xbf16, #tpu.memory_space<vmem>>, vector<4x48xbf16>,
    %c2_49 = arith.constant 2 : index
    %c1_50 = arith.constant 1 : index
    %c0_51 = arith.constant 0 : index
    %43 = vector.load %arg11[%c2_49, %c1_50, %c0_51] : memref<6x6x48xbf16, #tpu.memory_space<vmem>>, vector<1x4x48xbf16>
    %44 = vector.shape_cast %43 : vector<1x4x48xbf16> to vector<4x48xbf16>
    %c8_52 = arith.constant 8 : index
    %c48_53 = arith.constant 48 : index
    %45 = vector.load %arg15[%c8_52, %c48_53] : memref<16x432xbf16, #tpu.memory_space<vmem>>, vector<4x48xbf16>
    tpu.vector_store %arg15[%c8_52, %c48_53], %44 {strides = array<i32>} : memref<16x432xbf16, #tpu.memory_space<vmem>>, vector<4x48xbf16>,
    %c3_54 = arith.constant 3 : index
    %c1_55 = arith.constant 1 : index
    %c0_56 = arith.constant 0 : index
    %46 = vector.load %arg11[%c3_54, %c1_55, %c0_56] : memref<6x6x48xbf16, #tpu.memory_space<vmem>>, vector<1x4x48xbf16>
    %47 = vector.shape_cast %46 : vector<1x4x48xbf16> to vector<4x48xbf16>
    %c12_57 = arith.constant 12 : index
    %c48_58 = arith.constant 48 : index
    %48 = vector.load %arg15[%c12_57, %c48_58] : memref<16x432xbf16, #tpu.memory_space<vmem>>, vector<4x48xbf16>
    tpu.vector_store %arg15[%c12_57, %c48_58], %47 {strides = array<i32>} : memref<16x432xbf16, #tpu.memory_space<vmem>>, vector<4x48xbf16>,
    %c0_59 = arith.constant 0 : index
    %c2_60 = arith.constant 2 : index
    %c0_61 = arith.constant 0 : index
    %49 = vector.load %arg11[%c0_59, %c2_60, %c0_61] : memref<6x6x48xbf16, #tpu.memory_space<vmem>>, vector<1x4x48xbf16>
    %50 = vector.shape_cast %49 : vector<1x4x48xbf16> to vector<4x48xbf16>
    %c0_62 = arith.constant 0 : index
    %c96 = arith.constant 96 : index
    %51 = vector.load %arg15[%c0_62, %c96] : memref<16x432xbf16, #tpu.memory_space<vmem>>, vector<4x48xbf16>
    tpu.vector_store %arg15[%c0_62, %c96], %50 {strides = array<i32>} : memref<16x432xbf16, #tpu.memory_space<vmem>>, vector<4x48xbf16>,
    %c1_63 = arith.constant 1 : index
    %c2_64 = arith.constant 2 : index
    %c0_65 = arith.constant 0 : index
    %52 = vector.load %arg11[%c1_63, %c2_64, %c0_65] : memref<6x6x48xbf16, #tpu.memory_space<vmem>>, vector<1x4x48xbf16>
    %53 = vector.shape_cast %52 : vector<1x4x48xbf16> to vector<4x48xbf16>
    %c4_66 = arith.constant 4 : index
    %c96_67 = arith.constant 96 : index
    %54 = vector.load %arg15[%c4_66, %c96_67] : memref<16x432xbf16, #tpu.memory_space<vmem>>, vector<4x48xbf16>
    tpu.vector_store %arg15[%c4_66, %c96_67], %53 {strides = array<i32>} : memref<16x432xbf16, #tpu.memory_space<vmem>>, vector<4x48xbf16>,
    %c2_68 = arith.constant 2 : index
    %c2_69 = arith.constant 2 : index
    %c0_70 = arith.constant 0 : index
    %55 = vector.load %arg11[%c2_68, %c2_69, %c0_70] : memref<6x6x48xbf16, #tpu.memory_space<vmem>>, vector<1x4x48xbf16>
    %56 = vector.shape_cast %55 : vector<1x4x48xbf16> to vector<4x48xbf16>
    %c8_71 = arith.constant 8 : index
    %c96_72 = arith.constant 96 : index
    %57 = vector.load %arg15[%c8_71, %c96_72] : memref<16x432xbf16, #tpu.memory_space<vmem>>, vector<4x48xbf16>
    tpu.vector_store %arg15[%c8_71, %c96_72], %56 {strides = array<i32>} : memref<16x432xbf16, #tpu.memory_space<vmem>>, vector<4x48xbf16>,
    %c3_73 = arith.constant 3 : index
    %c2_74 = arith.constant 2 : index
    %c0_75 = arith.constant 0 : index
    %58 = vector.load %arg11[%c3_73, %c2_74, %c0_75] : memref<6x6x48xbf16, #tpu.memory_space<vmem>>, vector<1x4x48xbf16>
    %59 = vector.shape_cast %58 : vector<1x4x48xbf16> to vector<4x48xbf16>
    %c12_76 = arith.constant 12 : index
    %c96_77 = arith.constant 96 : index
    %60 = vector.load %arg15[%c12_76, %c96_77] : memref<16x432xbf16, #tpu.memory_space<vmem>>, vector<4x48xbf16>
    tpu.vector_store %arg15[%c12_76, %c96_77], %59 {strides = array<i32>} : memref<16x432xbf16, #tpu.memory_space<vmem>>, vector<4x48xbf16>,
    %c1_78 = arith.constant 1 : index
    %c0_79 = arith.constant 0 : index
    %c0_80 = arith.constant 0 : index
    %61 = vector.load %arg11[%c1_78, %c0_79, %c0_80] : memref<6x6x48xbf16, #tpu.memory_space<vmem>>, vector<1x4x48xbf16>
    %62 = vector.shape_cast %61 : vector<1x4x48xbf16> to vector<4x48xbf16>
    %c0_81 = arith.constant 0 : index
    %c144 = arith.constant 144 : index
    %63 = vector.load %arg15[%c0_81, %c144] : memref<16x432xbf16, #tpu.memory_space<vmem>>, vector<4x48xbf16>
    tpu.vector_store %arg15[%c0_81, %c144], %62 {strides = array<i32>} : memref<16x432xbf16, #tpu.memory_space<vmem>>, vector<4x48xbf16>,
    %c2_82 = arith.constant 2 : index
    %c0_83 = arith.constant 0 : index
    %c0_84 = arith.constant 0 : index
    %64 = vector.load %arg11[%c2_82, %c0_83, %c0_84] : memref<6x6x48xbf16, #tpu.memory_space<vmem>>, vector<1x4x48xbf16>
    %65 = vector.shape_cast %64 : vector<1x4x48xbf16> to vector<4x48xbf16>
    %c4_85 = arith.constant 4 : index
    %c144_86 = arith.constant 144 : index
    %66 = vector.load %arg15[%c4_85, %c144_86] : memref<16x432xbf16, #tpu.memory_space<vmem>>, vector<4x48xbf16>
    tpu.vector_store %arg15[%c4_85, %c144_86], %65 {strides = array<i32>} : memref<16x432xbf16, #tpu.memory_space<vmem>>, vector<4x48xbf16>,
    %c3_87 = arith.constant 3 : index
    %c0_88 = arith.constant 0 : index
    %c0_89 = arith.constant 0 : index
    %67 = vector.load %arg11[%c3_87, %c0_88, %c0_89] : memref<6x6x48xbf16, #tpu.memory_space<vmem>>, vector<1x4x48xbf16>
    %68 = vector.shape_cast %67 : vector<1x4x48xbf16> to vector<4x48xbf16>
    %c8_90 = arith.constant 8 : index
    %c144_91 = arith.constant 144 : index
    %69 = vector.load %arg15[%c8_90, %c144_91] : memref<16x432xbf16, #tpu.memory_space<vmem>>, vector<4x48xbf16>
    tpu.vector_store %arg15[%c8_90, %c144_91], %68 {strides = array<i32>} : memref<16x432xbf16, #tpu.memory_space<vmem>>, vector<4x48xbf16>,
    %c4_92 = arith.constant 4 : index
    %c0_93 = arith.constant 0 : index
    %c0_94 = arith.constant 0 : index
    %70 = vector.load %arg11[%c4_92, %c0_93, %c0_94] : memref<6x6x48xbf16, #tpu.memory_space<vmem>>, vector<1x4x48xbf16>
    %71 = vector.shape_cast %70 : vector<1x4x48xbf16> to vector<4x48xbf16>
    %c12_95 = arith.constant 12 : index
    %c144_96 = arith.constant 144 : index
    %72 = vector.load %arg15[%c12_95, %c144_96] : memref<16x432xbf16, #tpu.memory_space<vmem>>, vector<4x48xbf16>
    tpu.vector_store %arg15[%c12_95, %c144_96], %71 {strides = array<i32>} : memref<16x432xbf16, #tpu.memory_space<vmem>>, vector<4x48xbf16>,
    %c1_97 = arith.constant 1 : index
    %c1_98 = arith.constant 1 : index
    %c0_99 = arith.constant 0 : index
    %73 = vector.load %arg11[%c1_97, %c1_98, %c0_99] : memref<6x6x48xbf16, #tpu.memory_space<vmem>>, vector<1x4x48xbf16>
    %74 = vector.shape_cast %73 : vector<1x4x48xbf16> to vector<4x48xbf16>
    %c0_100 = arith.constant 0 : index
    %c192 = arith.constant 192 : index
    %75 = vector.load %arg15[%c0_100, %c192] : memref<16x432xbf16, #tpu.memory_space<vmem>>, vector<4x48xbf16>
    tpu.vector_store %arg15[%c0_100, %c192], %74 {strides = array<i32>} : memref<16x432xbf16, #tpu.memory_space<vmem>>, vector<4x48xbf16>,
    %c2_101 = arith.constant 2 : index
    %c1_102 = arith.constant 1 : index
    %c0_103 = arith.constant 0 : index
    %76 = vector.load %arg11[%c2_101, %c1_102, %c0_103] : memref<6x6x48xbf16, #tpu.memory_space<vmem>>, vector<1x4x48xbf16>
    %77 = vector.shape_cast %76 : vector<1x4x48xbf16> to vector<4x48xbf16>
    %c4_104 = arith.constant 4 : index
    %c192_105 = arith.constant 192 : index
    %78 = vector.load %arg15[%c4_104, %c192_105] : memref<16x432xbf16, #tpu.memory_space<vmem>>, vector<4x48xbf16>
    tpu.vector_store %arg15[%c4_104, %c192_105], %77 {strides = array<i32>} : memref<16x432xbf16, #tpu.memory_space<vmem>>, vector<4x48xbf16>,
    %c3_106 = arith.constant 3 : index
    %c1_107 = arith.constant 1 : index
    %c0_108 = arith.constant 0 : index
    %79 = vector.load %arg11[%c3_106, %c1_107, %c0_108] : memref<6x6x48xbf16, #tpu.memory_space<vmem>>, vector<1x4x48xbf16>
    %80 = vector.shape_cast %79 : vector<1x4x48xbf16> to vector<4x48xbf16>
    %c8_109 = arith.constant 8 : index
    %c192_110 = arith.constant 192 : index
    %81 = vector.load %arg15[%c8_109, %c192_110] : memref<16x432xbf16, #tpu.memory_space<vmem>>, vector<4x48xbf16>
    tpu.vector_store %arg15[%c8_109, %c192_110], %80 {strides = array<i32>} : memref<16x432xbf16, #tpu.memory_space<vmem>>, vector<4x48xbf16>,
    %c4_111 = arith.constant 4 : index
    %c1_112 = arith.constant 1 : index
    %c0_113 = arith.constant 0 : index
    %82 = vector.load %arg11[%c4_111, %c1_112, %c0_113] : memref<6x6x48xbf16, #tpu.memory_space<vmem>>, vector<1x4x48xbf16>
    %83 = vector.shape_cast %82 : vector<1x4x48xbf16> to vector<4x48xbf16>
    %c12_114 = arith.constant 12 : index
    %c192_115 = arith.constant 192 : index
    %84 = vector.load %arg15[%c12_114, %c192_115] : memref<16x432xbf16, #tpu.memory_space<vmem>>, vector<4x48xbf16>
    tpu.vector_store %arg15[%c12_114, %c192_115], %83 {strides = array<i32>} : memref<16x432xbf16, #tpu.memory_space<vmem>>, vector<4x48xbf16>,
    %c1_116 = arith.constant 1 : index
    %c2_117 = arith.constant 2 : index
    %c0_118 = arith.constant 0 : index
    %85 = vector.load %arg11[%c1_116, %c2_117, %c0_118] : memref<6x6x48xbf16, #tpu.memory_space<vmem>>, vector<1x4x48xbf16>
    %86 = vector.shape_cast %85 : vector<1x4x48xbf16> to vector<4x48xbf16>
    %c0_119 = arith.constant 0 : index
    %c240 = arith.constant 240 : index
    %87 = vector.load %arg15[%c0_119, %c240] : memref<16x432xbf16, #tpu.memory_space<vmem>>, vector<4x48xbf16>
    tpu.vector_store %arg15[%c0_119, %c240], %86 {strides = array<i32>} : memref<16x432xbf16, #tpu.memory_space<vmem>>, vector<4x48xbf16>,
    %c2_120 = arith.constant 2 : index
    %c2_121 = arith.constant 2 : index
    %c0_122 = arith.constant 0 : index
    %88 = vector.load %arg11[%c2_120, %c2_121, %c0_122] : memref<6x6x48xbf16, #tpu.memory_space<vmem>>, vector<1x4x48xbf16>
    %89 = vector.shape_cast %88 : vector<1x4x48xbf16> to vector<4x48xbf16>
    %c4_123 = arith.constant 4 : index
    %c240_124 = arith.constant 240 : index
    %90 = vector.load %arg15[%c4_123, %c240_124] : memref<16x432xbf16, #tpu.memory_space<vmem>>, vector<4x48xbf16>
    tpu.vector_store %arg15[%c4_123, %c240_124], %89 {strides = array<i32>} : memref<16x432xbf16, #tpu.memory_space<vmem>>, vector<4x48xbf16>,
    %c3_125 = arith.constant 3 : index
    %c2_126 = arith.constant 2 : index
    %c0_127 = arith.constant 0 : index
    %91 = vector.load %arg11[%c3_125, %c2_126, %c0_127] : memref<6x6x48xbf16, #tpu.memory_space<vmem>>, vector<1x4x48xbf16>
    %92 = vector.shape_cast %91 : vector<1x4x48xbf16> to vector<4x48xbf16>
    %c8_128 = arith.constant 8 : index
    %c240_129 = arith.constant 240 : index
    %93 = vector.load %arg15[%c8_128, %c240_129] : memref<16x432xbf16, #tpu.memory_space<vmem>>, vector<4x48xbf16>
    tpu.vector_store %arg15[%c8_128, %c240_129], %92 {strides = array<i32>} : memref<16x432xbf16, #tpu.memory_space<vmem>>, vector<4x48xbf16>,
    %c4_130 = arith.constant 4 : index
    %c2_131 = arith.constant 2 : index
    %c0_132 = arith.constant 0 : index
    %94 = vector.load %arg11[%c4_130, %c2_131, %c0_132] : memref<6x6x48xbf16, #tpu.memory_space<vmem>>, vector<1x4x48xbf16>
    %95 = vector.shape_cast %94 : vector<1x4x48xbf16> to vector<4x48xbf16>
    %c12_133 = arith.constant 12 : index
    %c240_134 = arith.constant 240 : index
    %96 = vector.load %arg15[%c12_133, %c240_134] : memref<16x432xbf16, #tpu.memory_space<vmem>>, vector<4x48xbf16>
    tpu.vector_store %arg15[%c12_133, %c240_134], %95 {strides = array<i32>} : memref<16x432xbf16, #tpu.memory_space<vmem>>, vector<4x48xbf16>,
    %c2_135 = arith.constant 2 : index
    %c0_136 = arith.constant 0 : index
    %c0_137 = arith.constant 0 : index
    %97 = vector.load %arg11[%c2_135, %c0_136, %c0_137] : memref<6x6x48xbf16, #tpu.memory_space<vmem>>, vector<1x4x48xbf16>
    %98 = vector.shape_cast %97 : vector<1x4x48xbf16> to vector<4x48xbf16>
    %c0_138 = arith.constant 0 : index
    %c288 = arith.constant 288 : index
    %99 = vector.load %arg15[%c0_138, %c288] : memref<16x432xbf16, #tpu.memory_space<vmem>>, vector<4x48xbf16>
    tpu.vector_store %arg15[%c0_138, %c288], %98 {strides = array<i32>} : memref<16x432xbf16, #tpu.memory_space<vmem>>, vector<4x48xbf16>,
    %c3_139 = arith.constant 3 : index
    %c0_140 = arith.constant 0 : index
    %c0_141 = arith.constant 0 : index
    %100 = vector.load %arg11[%c3_139, %c0_140, %c0_141] : memref<6x6x48xbf16, #tpu.memory_space<vmem>>, vector<1x4x48xbf16>
    %101 = vector.shape_cast %100 : vector<1x4x48xbf16> to vector<4x48xbf16>
    %c4_142 = arith.constant 4 : index
    %c288_143 = arith.constant 288 : index
    %102 = vector.load %arg15[%c4_142, %c288_143] : memref<16x432xbf16, #tpu.memory_space<vmem>>, vector<4x48xbf16>
    tpu.vector_store %arg15[%c4_142, %c288_143], %101 {strides = array<i32>} : memref<16x432xbf16, #tpu.memory_space<vmem>>, vector<4x48xbf16>,
    %c4_144 = arith.constant 4 : index
    %c0_145 = arith.constant 0 : index
    %c0_146 = arith.constant 0 : index
    %103 = vector.load %arg11[%c4_144, %c0_145, %c0_146] : memref<6x6x48xbf16, #tpu.memory_space<vmem>>, vector<1x4x48xbf16>
    %104 = vector.shape_cast %103 : vector<1x4x48xbf16> to vector<4x48xbf16>
    %c8_147 = arith.constant 8 : index
    %c288_148 = arith.constant 288 : index
    %105 = vector.load %arg15[%c8_147, %c288_148] : memref<16x432xbf16, #tpu.memory_space<vmem>>, vector<4x48xbf16>
    tpu.vector_store %arg15[%c8_147, %c288_148], %104 {strides = array<i32>} : memref<16x432xbf16, #tpu.memory_space<vmem>>, vector<4x48xbf16>,
    %c5_149 = arith.constant 5 : index
    %c0_150 = arith.constant 0 : index
    %c0_151 = arith.constant 0 : index
    %106 = vector.load %arg11[%c5_149, %c0_150, %c0_151] : memref<6x6x48xbf16, #tpu.memory_space<vmem>>, vector<1x4x48xbf16>
    %107 = vector.shape_cast %106 : vector<1x4x48xbf16> to vector<4x48xbf16>
    %c12_152 = arith.constant 12 : index
    %c288_153 = arith.constant 288 : index
    %108 = vector.load %arg15[%c12_152, %c288_153] : memref<16x432xbf16, #tpu.memory_space<vmem>>, vector<4x48xbf16>
    tpu.vector_store %arg15[%c12_152, %c288_153], %107 {strides = array<i32>} : memref<16x432xbf16, #tpu.memory_space<vmem>>, vector<4x48xbf16>,
    %c2_154 = arith.constant 2 : index
    %c1_155 = arith.constant 1 : index
    %c0_156 = arith.constant 0 : index
    %109 = vector.load %arg11[%c2_154, %c1_155, %c0_156] : memref<6x6x48xbf16, #tpu.memory_space<vmem>>, vector<1x4x48xbf16>
    %110 = vector.shape_cast %109 : vector<1x4x48xbf16> to vector<4x48xbf16>
    %c0_157 = arith.constant 0 : index
    %c336 = arith.constant 336 : index
    %111 = vector.load %arg15[%c0_157, %c336] : memref<16x432xbf16, #tpu.memory_space<vmem>>, vector<4x48xbf16>
    tpu.vector_store %arg15[%c0_157, %c336], %110 {strides = array<i32>} : memref<16x432xbf16, #tpu.memory_space<vmem>>, vector<4x48xbf16>,
    %c3_158 = arith.constant 3 : index
    %c1_159 = arith.constant 1 : index
    %c0_160 = arith.constant 0 : index
    %112 = vector.load %arg11[%c3_158, %c1_159, %c0_160] : memref<6x6x48xbf16, #tpu.memory_space<vmem>>, vector<1x4x48xbf16>
    %113 = vector.shape_cast %112 : vector<1x4x48xbf16> to vector<4x48xbf16>
    %c4_161 = arith.constant 4 : index
    %c336_162 = arith.constant 336 : index
    %114 = vector.load %arg15[%c4_161, %c336_162] : memref<16x432xbf16, #tpu.memory_space<vmem>>, vector<4x48xbf16>
    tpu.vector_store %arg15[%c4_161, %c336_162], %113 {strides = array<i32>} : memref<16x432xbf16, #tpu.memory_space<vmem>>, vector<4x48xbf16>,
    %c4_163 = arith.constant 4 : index
    %c1_164 = arith.constant 1 : index
    %c0_165 = arith.constant 0 : index
    %115 = vector.load %arg11[%c4_163, %c1_164, %c0_165] : memref<6x6x48xbf16, #tpu.memory_space<vmem>>, vector<1x4x48xbf16>
    %116 = vector.shape_cast %115 : vector<1x4x48xbf16> to vector<4x48xbf16>
    %c8_166 = arith.constant 8 : index
    %c336_167 = arith.constant 336 : index
    %117 = vector.load %arg15[%c8_166, %c336_167] : memref<16x432xbf16, #tpu.memory_space<vmem>>, vector<4x48xbf16>
    tpu.vector_store %arg15[%c8_166, %c336_167], %116 {strides = array<i32>} : memref<16x432xbf16, #tpu.memory_space<vmem>>, vector<4x48xbf16>,
    %c5_168 = arith.constant 5 : index
    %c1_169 = arith.constant 1 : index
    %c0_170 = arith.constant 0 : index
    %118 = vector.load %arg11[%c5_168, %c1_169, %c0_170] : memref<6x6x48xbf16, #tpu.memory_space<vmem>>, vector<1x4x48xbf16>
    %119 = vector.shape_cast %118 : vector<1x4x48xbf16> to vector<4x48xbf16>
    %c12_171 = arith.constant 12 : index
    %c336_172 = arith.constant 336 : index
    %120 = vector.load %arg15[%c12_171, %c336_172] : memref<16x432xbf16, #tpu.memory_space<vmem>>, vector<4x48xbf16>
    tpu.vector_store %arg15[%c12_171, %c336_172], %119 {strides = array<i32>} : memref<16x432xbf16, #tpu.memory_space<vmem>>, vector<4x48xbf16>,
    %c2_173 = arith.constant 2 : index
    %c2_174 = arith.constant 2 : index
    %c0_175 = arith.constant 0 : index
    %121 = vector.load %arg11[%c2_173, %c2_174, %c0_175] : memref<6x6x48xbf16, #tpu.memory_space<vmem>>, vector<1x4x48xbf16>
    %122 = vector.shape_cast %121 : vector<1x4x48xbf16> to vector<4x48xbf16>
    %c0_176 = arith.constant 0 : index
    %c384 = arith.constant 384 : index
    %123 = vector.load %arg15[%c0_176, %c384] : memref<16x432xbf16, #tpu.memory_space<vmem>>, vector<4x48xbf16>
    tpu.vector_store %arg15[%c0_176, %c384], %122 {strides = array<i32>} : memref<16x432xbf16, #tpu.memory_space<vmem>>, vector<4x48xbf16>,
    %c3_177 = arith.constant 3 : index
    %c2_178 = arith.constant 2 : index
    %c0_179 = arith.constant 0 : index
    %124 = vector.load %arg11[%c3_177, %c2_178, %c0_179] : memref<6x6x48xbf16, #tpu.memory_space<vmem>>, vector<1x4x48xbf16>
    %125 = vector.shape_cast %124 : vector<1x4x48xbf16> to vector<4x48xbf16>
    %c4_180 = arith.constant 4 : index
    %c384_181 = arith.constant 384 : index
    %126 = vector.load %arg15[%c4_180, %c384_181] : memref<16x432xbf16, #tpu.memory_space<vmem>>, vector<4x48xbf16>
    tpu.vector_store %arg15[%c4_180, %c384_181], %125 {strides = array<i32>} : memref<16x432xbf16, #tpu.memory_space<vmem>>, vector<4x48xbf16>,
    %c4_182 = arith.constant 4 : index
    %c2_183 = arith.constant 2 : index
    %c0_184 = arith.constant 0 : index
    %127 = vector.load %arg11[%c4_182, %c2_183, %c0_184] : memref<6x6x48xbf16, #tpu.memory_space<vmem>>, vector<1x4x48xbf16>
    %128 = vector.shape_cast %127 : vector<1x4x48xbf16> to vector<4x48xbf16>
    %c8_185 = arith.constant 8 : index
    %c384_186 = arith.constant 384 : index
    %129 = vector.load %arg15[%c8_185, %c384_186] : memref<16x432xbf16, #tpu.memory_space<vmem>>, vector<4x48xbf16>
    tpu.vector_store %arg15[%c8_185, %c384_186], %128 {strides = array<i32>} : memref<16x432xbf16, #tpu.memory_space<vmem>>, vector<4x48xbf16>,
    %c5_187 = arith.constant 5 : index
    %c2_188 = arith.constant 2 : index
    %c0_189 = arith.constant 0 : index
    %130 = vector.load %arg11[%c5_187, %c2_188, %c0_189] : memref<6x6x48xbf16, #tpu.memory_space<vmem>>, vector<1x4x48xbf16>
    %131 = vector.shape_cast %130 : vector<1x4x48xbf16> to vector<4x48xbf16>
    %c12_190 = arith.constant 12 : index
    %c384_191 = arith.constant 384 : index
    %132 = vector.load %arg15[%c12_190, %c384_191] : memref<16x432xbf16, #tpu.memory_space<vmem>>, vector<4x48xbf16>
    tpu.vector_store %arg15[%c12_190, %c384_191], %131 {strides = array<i32>} : memref<16x432xbf16, #tpu.memory_space<vmem>>, vector<4x48xbf16>,
    %c0_192 = arith.constant 0 : index
    %c0_193 = arith.constant 0 : index
    %133 = vector.load %arg15[%c0_192, %c0_193] : memref<16x432xbf16, #tpu.memory_space<vmem>>, vector<16x432xbf16>
    %c0_194 = arith.constant 0 : index
    %c0_195 = arith.constant 0 : index
    %134 = vector.load %arg2[%c0_194, %c0_195] : memref<432x32xbf16, #tpu.memory_space<vmem>>, vector<432x32xbf16>
    %cst_196 = arith.constant dense<0.000000e+00> : vector<16x32xf32>
    %135 = tpu.matmul %133, %134, %cst_196 {dimension_numbers = #tpu.dot_dimension_numbers<[1], [0], [0], [1], [0, 0, 1, 1], [], []>} : vector<16x432xbf16>, vector<432x32xbf16>, vector<16x32xf32> -> vector<16x32xf32>
    %c0_197 = arith.constant 0 : index
    %c0_198 = arith.constant 0 : index
    %136 = vector.load %arg3[%c0_197, %c0_198] : memref<1x32xf32, #tpu.memory_space<vmem>>, vector<1x32xf32>
    %137 = vector.broadcast %136 : vector<1x32xf32> to vector<16x32xf32>
    %138 = arith.addf %135, %137 : vector<16x32xf32>
    %cst_199 = arith.constant 0.000000e+00 : f32
    %139 = vector.broadcast %cst_199 : f32 to vector<16x32xf32>
    %140 = arith.maximumf %138, %139 : vector<16x32xf32>
    %cst_200 = arith.constant 0.000000e+00 : bf16
    %141 = vector.broadcast %cst_200 : bf16 to vector<1x6x32xbf16>
    %cst_201 = arith.constant 0.000000e+00 : bf16
    %142 = vector.broadcast %cst_201 : bf16 to vector<4x1x32xbf16>
    %c0_202 = arith.constant 0 : index
    %c0_203 = arith.constant 0 : index
    %c0_204 = arith.constant 0 : index
    %143 = vector.load %arg12[%c0_202, %c0_203, %c0_204] : memref<6x6x32xbf16, #tpu.memory_space<vmem>>, vector<1x6x32xbf16>
    tpu.vector_store %arg12[%c0_202, %c0_203, %c0_204], %141 {strides = array<i32>} : memref<6x6x32xbf16, #tpu.memory_space<vmem>>, vector<1x6x32xbf16>,
    %c5_205 = arith.constant 5 : index
    %c0_206 = arith.constant 0 : index
    %c0_207 = arith.constant 0 : index
    %144 = vector.load %arg12[%c5_205, %c0_206, %c0_207] : memref<6x6x32xbf16, #tpu.memory_space<vmem>>, vector<1x6x32xbf16>
    tpu.vector_store %arg12[%c5_205, %c0_206, %c0_207], %141 {strides = array<i32>} : memref<6x6x32xbf16, #tpu.memory_space<vmem>>, vector<1x6x32xbf16>,
    %c1_208 = arith.constant 1 : index
    %c0_209 = arith.constant 0 : index
    %c0_210 = arith.constant 0 : index
    %145 = vector.load %arg12[%c1_208, %c0_209, %c0_210] : memref<6x6x32xbf16, #tpu.memory_space<vmem>>, vector<4x1x32xbf16>
    tpu.vector_store %arg12[%c1_208, %c0_209, %c0_210], %142 {strides = array<i32>} : memref<6x6x32xbf16, #tpu.memory_space<vmem>>, vector<4x1x32xbf16>,
    %c1_211 = arith.constant 1 : index
    %c5_212 = arith.constant 5 : index
    %c0_213 = arith.constant 0 : index
    %146 = vector.load %arg12[%c1_211, %c5_212, %c0_213] : memref<6x6x32xbf16, #tpu.memory_space<vmem>>, vector<4x1x32xbf16>
    tpu.vector_store %arg12[%c1_211, %c5_212, %c0_213], %142 {strides = array<i32>} : memref<6x6x32xbf16, #tpu.memory_space<vmem>>, vector<4x1x32xbf16>,
    %147 = arith.truncf %140 : vector<16x32xf32> to vector<16x32xbf16>
    %148 = vector.extract_strided_slice %147 {offsets = [0, 0], sizes = [4, 32], strides = [1, 1]} : vector<16x32xbf16> to vector<4x32xbf16>
    %c1_214 = arith.constant 1 : index
    %c1_215 = arith.constant 1 : index
    %c0_216 = arith.constant 0 : index
    %149 = vector.load %arg12[%c1_214, %c1_215, %c0_216] : memref<6x6x32xbf16, #tpu.memory_space<vmem>>, vector<1x4x32xbf16>
    %150 = vector.shape_cast %149 : vector<1x4x32xbf16> to vector<4x32xbf16>
    %151 = vector.shape_cast %148 : vector<4x32xbf16> to vector<1x4x32xbf16>
    tpu.vector_store %arg12[%c1_214, %c1_215, %c0_216], %151 {strides = array<i32>} : memref<6x6x32xbf16, #tpu.memory_space<vmem>>, vector<1x4x32xbf16>,
    %152 = vector.extract_strided_slice %147 {offsets = [4, 0], sizes = [4, 32], strides = [1, 1]} : vector<16x32xbf16> to vector<4x32xbf16>
    %c2_217 = arith.constant 2 : index
    %c1_218 = arith.constant 1 : index
    %c0_219 = arith.constant 0 : index
    %153 = vector.load %arg12[%c2_217, %c1_218, %c0_219] : memref<6x6x32xbf16, #tpu.memory_space<vmem>>, vector<1x4x32xbf16>
    %154 = vector.shape_cast %153 : vector<1x4x32xbf16> to vector<4x32xbf16>
    %155 = vector.shape_cast %152 : vector<4x32xbf16> to vector<1x4x32xbf16>
    tpu.vector_store %arg12[%c2_217, %c1_218, %c0_219], %155 {strides = array<i32>} : memref<6x6x32xbf16, #tpu.memory_space<vmem>>, vector<1x4x32xbf16>,
    %156 = vector.extract_strided_slice %147 {offsets = [8, 0], sizes = [4, 32], strides = [1, 1]} : vector<16x32xbf16> to vector<4x32xbf16>
    %c3_220 = arith.constant 3 : index
    %c1_221 = arith.constant 1 : index
    %c0_222 = arith.constant 0 : index
    %157 = vector.load %arg12[%c3_220, %c1_221, %c0_222] : memref<6x6x32xbf16, #tpu.memory_space<vmem>>, vector<1x4x32xbf16>
    %158 = vector.shape_cast %157 : vector<1x4x32xbf16> to vector<4x32xbf16>
    %159 = vector.shape_cast %156 : vector<4x32xbf16> to vector<1x4x32xbf16>
    tpu.vector_store %arg12[%c3_220, %c1_221, %c0_222], %159 {strides = array<i32>} : memref<6x6x32xbf16, #tpu.memory_space<vmem>>, vector<1x4x32xbf16>,
    %160 = vector.extract_strided_slice %147 {offsets = [12, 0], sizes = [4, 32], strides = [1, 1]} : vector<16x32xbf16> to vector<4x32xbf16>
    %c4_223 = arith.constant 4 : index
    %c1_224 = arith.constant 1 : index
    %c0_225 = arith.constant 0 : index
    %161 = vector.load %arg12[%c4_223, %c1_224, %c0_225] : memref<6x6x32xbf16, #tpu.memory_space<vmem>>, vector<1x4x32xbf16>
    %162 = vector.shape_cast %161 : vector<1x4x32xbf16> to vector<4x32xbf16>
    %163 = vector.shape_cast %160 : vector<4x32xbf16> to vector<1x4x32xbf16>
    tpu.vector_store %arg12[%c4_223, %c1_224, %c0_225], %163 {strides = array<i32>} : memref<6x6x32xbf16, #tpu.memory_space<vmem>>, vector<1x4x32xbf16>,
    %c0_226 = arith.constant 0 : index
    %c0_227 = arith.constant 0 : index
    %c0_228 = arith.constant 0 : index
    %164 = vector.load %arg12[%c0_226, %c0_227, %c0_228] : memref<6x6x32xbf16, #tpu.memory_space<vmem>>, vector<1x4x32xbf16>
    %165 = vector.shape_cast %164 : vector<1x4x32xbf16> to vector<4x32xbf16>
    %c0_229 = arith.constant 0 : index
    %c0_230 = arith.constant 0 : index
    %166 = vector.load %arg15[%c0_229, %c0_230] : memref<16x432xbf16, #tpu.memory_space<vmem>>, vector<4x32xbf16>
    tpu.vector_store %arg15[%c0_229, %c0_230], %165 {strides = array<i32>} : memref<16x432xbf16, #tpu.memory_space<vmem>>, vector<4x32xbf16>,
    %c1_231 = arith.constant 1 : index
    %c0_232 = arith.constant 0 : index
    %c0_233 = arith.constant 0 : index
    %167 = vector.load %arg12[%c1_231, %c0_232, %c0_233] : memref<6x6x32xbf16, #tpu.memory_space<vmem>>, vector<1x4x32xbf16>
    %168 = vector.shape_cast %167 : vector<1x4x32xbf16> to vector<4x32xbf16>
    %c4_234 = arith.constant 4 : index
    %c0_235 = arith.constant 0 : index
    %169 = vector.load %arg15[%c4_234, %c0_235] : memref<16x432xbf16, #tpu.memory_space<vmem>>, vector<4x32xbf16>
    tpu.vector_store %arg15[%c4_234, %c0_235], %168 {strides = array<i32>} : memref<16x432xbf16, #tpu.memory_space<vmem>>, vector<4x32xbf16>,
    %c2_236 = arith.constant 2 : index
    %c0_237 = arith.constant 0 : index
    %c0_238 = arith.constant 0 : index
    %170 = vector.load %arg12[%c2_236, %c0_237, %c0_238] : memref<6x6x32xbf16, #tpu.memory_space<vmem>>, vector<1x4x32xbf16>
    %171 = vector.shape_cast %170 : vector<1x4x32xbf16> to vector<4x32xbf16>
    %c8_239 = arith.constant 8 : index
    %c0_240 = arith.constant 0 : index
    %172 = vector.load %arg15[%c8_239, %c0_240] : memref<16x432xbf16, #tpu.memory_space<vmem>>, vector<4x32xbf16>
    tpu.vector_store %arg15[%c8_239, %c0_240], %171 {strides = array<i32>} : memref<16x432xbf16, #tpu.memory_space<vmem>>, vector<4x32xbf16>,
    %c3_241 = arith.constant 3 : index
    %c0_242 = arith.constant 0 : index
    %c0_243 = arith.constant 0 : index
    %173 = vector.load %arg12[%c3_241, %c0_242, %c0_243] : memref<6x6x32xbf16, #tpu.memory_space<vmem>>, vector<1x4x32xbf16>
    %174 = vector.shape_cast %173 : vector<1x4x32xbf16> to vector<4x32xbf16>
    %c12_244 = arith.constant 12 : index
    %c0_245 = arith.constant 0 : index
    %175 = vector.load %arg15[%c12_244, %c0_245] : memref<16x432xbf16, #tpu.memory_space<vmem>>, vector<4x32xbf16>
    tpu.vector_store %arg15[%c12_244, %c0_245], %174 {strides = array<i32>} : memref<16x432xbf16, #tpu.memory_space<vmem>>, vector<4x32xbf16>,
    %c0_246 = arith.constant 0 : index
    %c1_247 = arith.constant 1 : index
    %c0_248 = arith.constant 0 : index
    %176 = vector.load %arg12[%c0_246, %c1_247, %c0_248] : memref<6x6x32xbf16, #tpu.memory_space<vmem>>, vector<1x4x32xbf16>
    %177 = vector.shape_cast %176 : vector<1x4x32xbf16> to vector<4x32xbf16>
    %c0_249 = arith.constant 0 : index
    %c32 = arith.constant 32 : index
    %178 = vector.load %arg15[%c0_249, %c32] : memref<16x432xbf16, #tpu.memory_space<vmem>>, vector<4x32xbf16>
    tpu.vector_store %arg15[%c0_249, %c32], %177 {strides = array<i32>} : memref<16x432xbf16, #tpu.memory_space<vmem>>, vector<4x32xbf16>,
    %c1_250 = arith.constant 1 : index
    %c1_251 = arith.constant 1 : index
    %c0_252 = arith.constant 0 : index
    %179 = vector.load %arg12[%c1_250, %c1_251, %c0_252] : memref<6x6x32xbf16, #tpu.memory_space<vmem>>, vector<1x4x32xbf16>
    %180 = vector.shape_cast %179 : vector<1x4x32xbf16> to vector<4x32xbf16>
    %c4_253 = arith.constant 4 : index
    %c32_254 = arith.constant 32 : index
    %181 = vector.load %arg15[%c4_253, %c32_254] : memref<16x432xbf16, #tpu.memory_space<vmem>>, vector<4x32xbf16>
    tpu.vector_store %arg15[%c4_253, %c32_254], %180 {strides = array<i32>} : memref<16x432xbf16, #tpu.memory_space<vmem>>, vector<4x32xbf16>,
    %c2_255 = arith.constant 2 : index
    %c1_256 = arith.constant 1 : index
    %c0_257 = arith.constant 0 : index
    %182 = vector.load %arg12[%c2_255, %c1_256, %c0_257] : memref<6x6x32xbf16, #tpu.memory_space<vmem>>, vector<1x4x32xbf16>
    %183 = vector.shape_cast %182 : vector<1x4x32xbf16> to vector<4x32xbf16>
    %c8_258 = arith.constant 8 : index
    %c32_259 = arith.constant 32 : index
    %184 = vector.load %arg15[%c8_258, %c32_259] : memref<16x432xbf16, #tpu.memory_space<vmem>>, vector<4x32xbf16>
    tpu.vector_store %arg15[%c8_258, %c32_259], %183 {strides = array<i32>} : memref<16x432xbf16, #tpu.memory_space<vmem>>, vector<4x32xbf16>,
    %c3_260 = arith.constant 3 : index
    %c1_261 = arith.constant 1 : index
    %c0_262 = arith.constant 0 : index
    %185 = vector.load %arg12[%c3_260, %c1_261, %c0_262] : memref<6x6x32xbf16, #tpu.memory_space<vmem>>, vector<1x4x32xbf16>
    %186 = vector.shape_cast %185 : vector<1x4x32xbf16> to vector<4x32xbf16>
    %c12_263 = arith.constant 12 : index
    %c32_264 = arith.constant 32 : index
    %187 = vector.load %arg15[%c12_263, %c32_264] : memref<16x432xbf16, #tpu.memory_space<vmem>>, vector<4x32xbf16>
    tpu.vector_store %arg15[%c12_263, %c32_264], %186 {strides = array<i32>} : memref<16x432xbf16, #tpu.memory_space<vmem>>, vector<4x32xbf16>,
    %c0_265 = arith.constant 0 : index
    %c2_266 = arith.constant 2 : index
    %c0_267 = arith.constant 0 : index
    %188 = vector.load %arg12[%c0_265, %c2_266, %c0_267] : memref<6x6x32xbf16, #tpu.memory_space<vmem>>, vector<1x4x32xbf16>
    %189 = vector.shape_cast %188 : vector<1x4x32xbf16> to vector<4x32xbf16>
    %c0_268 = arith.constant 0 : index
    %c64 = arith.constant 64 : index
    %190 = vector.load %arg15[%c0_268, %c64] : memref<16x432xbf16, #tpu.memory_space<vmem>>, vector<4x32xbf16>
    tpu.vector_store %arg15[%c0_268, %c64], %189 {strides = array<i32>} : memref<16x432xbf16, #tpu.memory_space<vmem>>, vector<4x32xbf16>,
    %c1_269 = arith.constant 1 : index
    %c2_270 = arith.constant 2 : index
    %c0_271 = arith.constant 0 : index
    %191 = vector.load %arg12[%c1_269, %c2_270, %c0_271] : memref<6x6x32xbf16, #tpu.memory_space<vmem>>, vector<1x4x32xbf16>
    %192 = vector.shape_cast %191 : vector<1x4x32xbf16> to vector<4x32xbf16>
    %c4_272 = arith.constant 4 : index
    %c64_273 = arith.constant 64 : index
    %193 = vector.load %arg15[%c4_272, %c64_273] : memref<16x432xbf16, #tpu.memory_space<vmem>>, vector<4x32xbf16>
    tpu.vector_store %arg15[%c4_272, %c64_273], %192 {strides = array<i32>} : memref<16x432xbf16, #tpu.memory_space<vmem>>, vector<4x32xbf16>,
    %c2_274 = arith.constant 2 : index
    %c2_275 = arith.constant 2 : index
    %c0_276 = arith.constant 0 : index
    %194 = vector.load %arg12[%c2_274, %c2_275, %c0_276] : memref<6x6x32xbf16, #tpu.memory_space<vmem>>, vector<1x4x32xbf16>
    %195 = vector.shape_cast %194 : vector<1x4x32xbf16> to vector<4x32xbf16>
    %c8_277 = arith.constant 8 : index
    %c64_278 = arith.constant 64 : index
    %196 = vector.load %arg15[%c8_277, %c64_278] : memref<16x432xbf16, #tpu.memory_space<vmem>>, vector<4x32xbf16>
    tpu.vector_store %arg15[%c8_277, %c64_278], %195 {strides = array<i32>} : memref<16x432xbf16, #tpu.memory_space<vmem>>, vector<4x32xbf16>,
    %c3_279 = arith.constant 3 : index
    %c2_280 = arith.constant 2 : index
    %c0_281 = arith.constant 0 : index
    %197 = vector.load %arg12[%c3_279, %c2_280, %c0_281] : memref<6x6x32xbf16, #tpu.memory_space<vmem>>, vector<1x4x32xbf16>
    %198 = vector.shape_cast %197 : vector<1x4x32xbf16> to vector<4x32xbf16>
    %c12_282 = arith.constant 12 : index
    %c64_283 = arith.constant 64 : index
    %199 = vector.load %arg15[%c12_282, %c64_283] : memref<16x432xbf16, #tpu.memory_space<vmem>>, vector<4x32xbf16>
    tpu.vector_store %arg15[%c12_282, %c64_283], %198 {strides = array<i32>} : memref<16x432xbf16, #tpu.memory_space<vmem>>, vector<4x32xbf16>,
    %c1_284 = arith.constant 1 : index
    %c0_285 = arith.constant 0 : index
    %c0_286 = arith.constant 0 : index
    %200 = vector.load %arg12[%c1_284, %c0_285, %c0_286] : memref<6x6x32xbf16, #tpu.memory_space<vmem>>, vector<1x4x32xbf16>
    %201 = vector.shape_cast %200 : vector<1x4x32xbf16> to vector<4x32xbf16>
    %c0_287 = arith.constant 0 : index
    %c96_288 = arith.constant 96 : index
    %202 = vector.load %arg15[%c0_287, %c96_288] : memref<16x432xbf16, #tpu.memory_space<vmem>>, vector<4x32xbf16>
    tpu.vector_store %arg15[%c0_287, %c96_288], %201 {strides = array<i32>} : memref<16x432xbf16, #tpu.memory_space<vmem>>, vector<4x32xbf16>,
    %c2_289 = arith.constant 2 : index
    %c0_290 = arith.constant 0 : index
    %c0_291 = arith.constant 0 : index
    %203 = vector.load %arg12[%c2_289, %c0_290, %c0_291] : memref<6x6x32xbf16, #tpu.memory_space<vmem>>, vector<1x4x32xbf16>
    %204 = vector.shape_cast %203 : vector<1x4x32xbf16> to vector<4x32xbf16>
    %c4_292 = arith.constant 4 : index
    %c96_293 = arith.constant 96 : index
    %205 = vector.load %arg15[%c4_292, %c96_293] : memref<16x432xbf16, #tpu.memory_space<vmem>>, vector<4x32xbf16>
    tpu.vector_store %arg15[%c4_292, %c96_293], %204 {strides = array<i32>} : memref<16x432xbf16, #tpu.memory_space<vmem>>, vector<4x32xbf16>,
    %c3_294 = arith.constant 3 : index
    %c0_295 = arith.constant 0 : index
    %c0_296 = arith.constant 0 : index
    %206 = vector.load %arg12[%c3_294, %c0_295, %c0_296] : memref<6x6x32xbf16, #tpu.memory_space<vmem>>, vector<1x4x32xbf16>
    %207 = vector.shape_cast %206 : vector<1x4x32xbf16> to vector<4x32xbf16>
    %c8_297 = arith.constant 8 : index
    %c96_298 = arith.constant 96 : index
    %208 = vector.load %arg15[%c8_297, %c96_298] : memref<16x432xbf16, #tpu.memory_space<vmem>>, vector<4x32xbf16>
    tpu.vector_store %arg15[%c8_297, %c96_298], %207 {strides = array<i32>} : memref<16x432xbf16, #tpu.memory_space<vmem>>, vector<4x32xbf16>,
    %c4_299 = arith.constant 4 : index
    %c0_300 = arith.constant 0 : index
    %c0_301 = arith.constant 0 : index
    %209 = vector.load %arg12[%c4_299, %c0_300, %c0_301] : memref<6x6x32xbf16, #tpu.memory_space<vmem>>, vector<1x4x32xbf16>
    %210 = vector.shape_cast %209 : vector<1x4x32xbf16> to vector<4x32xbf16>
    %c12_302 = arith.constant 12 : index
    %c96_303 = arith.constant 96 : index
    %211 = vector.load %arg15[%c12_302, %c96_303] : memref<16x432xbf16, #tpu.memory_space<vmem>>, vector<4x32xbf16>
    tpu.vector_store %arg15[%c12_302, %c96_303], %210 {strides = array<i32>} : memref<16x432xbf16, #tpu.memory_space<vmem>>, vector<4x32xbf16>,
    %c1_304 = arith.constant 1 : index
    %c1_305 = arith.constant 1 : index
    %c0_306 = arith.constant 0 : index
    %212 = vector.load %arg12[%c1_304, %c1_305, %c0_306] : memref<6x6x32xbf16, #tpu.memory_space<vmem>>, vector<1x4x32xbf16>
    %213 = vector.shape_cast %212 : vector<1x4x32xbf16> to vector<4x32xbf16>
    %c0_307 = arith.constant 0 : index
    %c128 = arith.constant 128 : index
    %214 = vector.load %arg15[%c0_307, %c128] : memref<16x432xbf16, #tpu.memory_space<vmem>>, vector<4x32xbf16>
    tpu.vector_store %arg15[%c0_307, %c128], %213 {strides = array<i32>} : memref<16x432xbf16, #tpu.memory_space<vmem>>, vector<4x32xbf16>,
    %c2_308 = arith.constant 2 : index
    %c1_309 = arith.constant 1 : index
    %c0_310 = arith.constant 0 : index
    %215 = vector.load %arg12[%c2_308, %c1_309, %c0_310] : memref<6x6x32xbf16, #tpu.memory_space<vmem>>, vector<1x4x32xbf16>
    %216 = vector.shape_cast %215 : vector<1x4x32xbf16> to vector<4x32xbf16>
    %c4_311 = arith.constant 4 : index
    %c128_312 = arith.constant 128 : index
    %217 = vector.load %arg15[%c4_311, %c128_312] : memref<16x432xbf16, #tpu.memory_space<vmem>>, vector<4x32xbf16>
    tpu.vector_store %arg15[%c4_311, %c128_312], %216 {strides = array<i32>} : memref<16x432xbf16, #tpu.memory_space<vmem>>, vector<4x32xbf16>,
    %c3_313 = arith.constant 3 : index
    %c1_314 = arith.constant 1 : index
    %c0_315 = arith.constant 0 : index
    %218 = vector.load %arg12[%c3_313, %c1_314, %c0_315] : memref<6x6x32xbf16, #tpu.memory_space<vmem>>, vector<1x4x32xbf16>
    %219 = vector.shape_cast %218 : vector<1x4x32xbf16> to vector<4x32xbf16>
    %c8_316 = arith.constant 8 : index
    %c128_317 = arith.constant 128 : index
    %220 = vector.load %arg15[%c8_316, %c128_317] : memref<16x432xbf16, #tpu.memory_space<vmem>>, vector<4x32xbf16>
    tpu.vector_store %arg15[%c8_316, %c128_317], %219 {strides = array<i32>} : memref<16x432xbf16, #tpu.memory_space<vmem>>, vector<4x32xbf16>,
    %c4_318 = arith.constant 4 : index
    %c1_319 = arith.constant 1 : index
    %c0_320 = arith.constant 0 : index
    %221 = vector.load %arg12[%c4_318, %c1_319, %c0_320] : memref<6x6x32xbf16, #tpu.memory_space<vmem>>, vector<1x4x32xbf16>
    %222 = vector.shape_cast %221 : vector<1x4x32xbf16> to vector<4x32xbf16>
    %c12_321 = arith.constant 12 : index
    %c128_322 = arith.constant 128 : index
    %223 = vector.load %arg15[%c12_321, %c128_322] : memref<16x432xbf16, #tpu.memory_space<vmem>>, vector<4x32xbf16>
    tpu.vector_store %arg15[%c12_321, %c128_322], %222 {strides = array<i32>} : memref<16x432xbf16, #tpu.memory_space<vmem>>, vector<4x32xbf16>,
    %c1_323 = arith.constant 1 : index
    %c2_324 = arith.constant 2 : index
    %c0_325 = arith.constant 0 : index
    %224 = vector.load %arg12[%c1_323, %c2_324, %c0_325] : memref<6x6x32xbf16, #tpu.memory_space<vmem>>, vector<1x4x32xbf16>
    %225 = vector.shape_cast %224 : vector<1x4x32xbf16> to vector<4x32xbf16>
    %c0_326 = arith.constant 0 : index
    %c160 = arith.constant 160 : index
    %226 = vector.load %arg15[%c0_326, %c160] : memref<16x432xbf16, #tpu.memory_space<vmem>>, vector<4x32xbf16>
    tpu.vector_store %arg15[%c0_326, %c160], %225 {strides = array<i32>} : memref<16x432xbf16, #tpu.memory_space<vmem>>, vector<4x32xbf16>,
    %c2_327 = arith.constant 2 : index
    %c2_328 = arith.constant 2 : index
    %c0_329 = arith.constant 0 : index
    %227 = vector.load %arg12[%c2_327, %c2_328, %c0_329] : memref<6x6x32xbf16, #tpu.memory_space<vmem>>, vector<1x4x32xbf16>
    %228 = vector.shape_cast %227 : vector<1x4x32xbf16> to vector<4x32xbf16>
    %c4_330 = arith.constant 4 : index
    %c160_331 = arith.constant 160 : index
    %229 = vector.load %arg15[%c4_330, %c160_331] : memref<16x432xbf16, #tpu.memory_space<vmem>>, vector<4x32xbf16>
    tpu.vector_store %arg15[%c4_330, %c160_331], %228 {strides = array<i32>} : memref<16x432xbf16, #tpu.memory_space<vmem>>, vector<4x32xbf16>,
    %c3_332 = arith.constant 3 : index
    %c2_333 = arith.constant 2 : index
    %c0_334 = arith.constant 0 : index
    %230 = vector.load %arg12[%c3_332, %c2_333, %c0_334] : memref<6x6x32xbf16, #tpu.memory_space<vmem>>, vector<1x4x32xbf16>
    %231 = vector.shape_cast %230 : vector<1x4x32xbf16> to vector<4x32xbf16>
    %c8_335 = arith.constant 8 : index
    %c160_336 = arith.constant 160 : index
    %232 = vector.load %arg15[%c8_335, %c160_336] : memref<16x432xbf16, #tpu.memory_space<vmem>>, vector<4x32xbf16>
    tpu.vector_store %arg15[%c8_335, %c160_336], %231 {strides = array<i32>} : memref<16x432xbf16, #tpu.memory_space<vmem>>, vector<4x32xbf16>,
    %c4_337 = arith.constant 4 : index
    %c2_338 = arith.constant 2 : index
    %c0_339 = arith.constant 0 : index
    %233 = vector.load %arg12[%c4_337, %c2_338, %c0_339] : memref<6x6x32xbf16, #tpu.memory_space<vmem>>, vector<1x4x32xbf16>
    %234 = vector.shape_cast %233 : vector<1x4x32xbf16> to vector<4x32xbf16>
    %c12_340 = arith.constant 12 : index
    %c160_341 = arith.constant 160 : index
    %235 = vector.load %arg15[%c12_340, %c160_341] : memref<16x432xbf16, #tpu.memory_space<vmem>>, vector<4x32xbf16>
    tpu.vector_store %arg15[%c12_340, %c160_341], %234 {strides = array<i32>} : memref<16x432xbf16, #tpu.memory_space<vmem>>, vector<4x32xbf16>,
    %c2_342 = arith.constant 2 : index
    %c0_343 = arith.constant 0 : index
    %c0_344 = arith.constant 0 : index
    %236 = vector.load %arg12[%c2_342, %c0_343, %c0_344] : memref<6x6x32xbf16, #tpu.memory_space<vmem>>, vector<1x4x32xbf16>
    %237 = vector.shape_cast %236 : vector<1x4x32xbf16> to vector<4x32xbf16>
    %c0_345 = arith.constant 0 : index
    %c192_346 = arith.constant 192 : index
    %238 = vector.load %arg15[%c0_345, %c192_346] : memref<16x432xbf16, #tpu.memory_space<vmem>>, vector<4x32xbf16>
    tpu.vector_store %arg15[%c0_345, %c192_346], %237 {strides = array<i32>} : memref<16x432xbf16, #tpu.memory_space<vmem>>, vector<4x32xbf16>,
    %c3_347 = arith.constant 3 : index
    %c0_348 = arith.constant 0 : index
    %c0_349 = arith.constant 0 : index
    %239 = vector.load %arg12[%c3_347, %c0_348, %c0_349] : memref<6x6x32xbf16, #tpu.memory_space<vmem>>, vector<1x4x32xbf16>
    %240 = vector.shape_cast %239 : vector<1x4x32xbf16> to vector<4x32xbf16>
    %c4_350 = arith.constant 4 : index
    %c192_351 = arith.constant 192 : index
    %241 = vector.load %arg15[%c4_350, %c192_351] : memref<16x432xbf16, #tpu.memory_space<vmem>>, vector<4x32xbf16>
    tpu.vector_store %arg15[%c4_350, %c192_351], %240 {strides = array<i32>} : memref<16x432xbf16, #tpu.memory_space<vmem>>, vector<4x32xbf16>,
    %c4_352 = arith.constant 4 : index
    %c0_353 = arith.constant 0 : index
    %c0_354 = arith.constant 0 : index
    %242 = vector.load %arg12[%c4_352, %c0_353, %c0_354] : memref<6x6x32xbf16, #tpu.memory_space<vmem>>, vector<1x4x32xbf16>
    %243 = vector.shape_cast %242 : vector<1x4x32xbf16> to vector<4x32xbf16>
    %c8_355 = arith.constant 8 : index
    %c192_356 = arith.constant 192 : index
    %244 = vector.load %arg15[%c8_355, %c192_356] : memref<16x432xbf16, #tpu.memory_space<vmem>>, vector<4x32xbf16>
    tpu.vector_store %arg15[%c8_355, %c192_356], %243 {strides = array<i32>} : memref<16x432xbf16, #tpu.memory_space<vmem>>, vector<4x32xbf16>,
    %c5_357 = arith.constant 5 : index
    %c0_358 = arith.constant 0 : index
    %c0_359 = arith.constant 0 : index
    %245 = vector.load %arg12[%c5_357, %c0_358, %c0_359] : memref<6x6x32xbf16, #tpu.memory_space<vmem>>, vector<1x4x32xbf16>
    %246 = vector.shape_cast %245 : vector<1x4x32xbf16> to vector<4x32xbf16>
    %c12_360 = arith.constant 12 : index
    %c192_361 = arith.constant 192 : index
    %247 = vector.load %arg15[%c12_360, %c192_361] : memref<16x432xbf16, #tpu.memory_space<vmem>>, vector<4x32xbf16>
    tpu.vector_store %arg15[%c12_360, %c192_361], %246 {strides = array<i32>} : memref<16x432xbf16, #tpu.memory_space<vmem>>, vector<4x32xbf16>,
    %c2_362 = arith.constant 2 : index
    %c1_363 = arith.constant 1 : index
    %c0_364 = arith.constant 0 : index
    %248 = vector.load %arg12[%c2_362, %c1_363, %c0_364] : memref<6x6x32xbf16, #tpu.memory_space<vmem>>, vector<1x4x32xbf16>
    %249 = vector.shape_cast %248 : vector<1x4x32xbf16> to vector<4x32xbf16>
    %c0_365 = arith.constant 0 : index
    %c224 = arith.constant 224 : index
    %250 = vector.load %arg15[%c0_365, %c224] : memref<16x432xbf16, #tpu.memory_space<vmem>>, vector<4x32xbf16>
    tpu.vector_store %arg15[%c0_365, %c224], %249 {strides = array<i32>} : memref<16x432xbf16, #tpu.memory_space<vmem>>, vector<4x32xbf16>,
    %c3_366 = arith.constant 3 : index
    %c1_367 = arith.constant 1 : index
    %c0_368 = arith.constant 0 : index
    %251 = vector.load %arg12[%c3_366, %c1_367, %c0_368] : memref<6x6x32xbf16, #tpu.memory_space<vmem>>, vector<1x4x32xbf16>
    %252 = vector.shape_cast %251 : vector<1x4x32xbf16> to vector<4x32xbf16>
    %c4_369 = arith.constant 4 : index
    %c224_370 = arith.constant 224 : index
    %253 = vector.load %arg15[%c4_369, %c224_370] : memref<16x432xbf16, #tpu.memory_space<vmem>>, vector<4x32xbf16>
    tpu.vector_store %arg15[%c4_369, %c224_370], %252 {strides = array<i32>} : memref<16x432xbf16, #tpu.memory_space<vmem>>, vector<4x32xbf16>,
    %c4_371 = arith.constant 4 : index
    %c1_372 = arith.constant 1 : index
    %c0_373 = arith.constant 0 : index
    %254 = vector.load %arg12[%c4_371, %c1_372, %c0_373] : memref<6x6x32xbf16, #tpu.memory_space<vmem>>, vector<1x4x32xbf16>
    %255 = vector.shape_cast %254 : vector<1x4x32xbf16> to vector<4x32xbf16>
    %c8_374 = arith.constant 8 : index
    %c224_375 = arith.constant 224 : index
    %256 = vector.load %arg15[%c8_374, %c224_375] : memref<16x432xbf16, #tpu.memory_space<vmem>>, vector<4x32xbf16>
    tpu.vector_store %arg15[%c8_374, %c224_375], %255 {strides = array<i32>} : memref<16x432xbf16, #tpu.memory_space<vmem>>, vector<4x32xbf16>,
    %c5_376 = arith.constant 5 : index
    %c1_377 = arith.constant 1 : index
    %c0_378 = arith.constant 0 : index
    %257 = vector.load %arg12[%c5_376, %c1_377, %c0_378] : memref<6x6x32xbf16, #tpu.memory_space<vmem>>, vector<1x4x32xbf16>
    %258 = vector.shape_cast %257 : vector<1x4x32xbf16> to vector<4x32xbf16>
    %c12_379 = arith.constant 12 : index
    %c224_380 = arith.constant 224 : index
    %259 = vector.load %arg15[%c12_379, %c224_380] : memref<16x432xbf16, #tpu.memory_space<vmem>>, vector<4x32xbf16>
    tpu.vector_store %arg15[%c12_379, %c224_380], %258 {strides = array<i32>} : memref<16x432xbf16, #tpu.memory_space<vmem>>, vector<4x32xbf16>,
    %c2_381 = arith.constant 2 : index
    %c2_382 = arith.constant 2 : index
    %c0_383 = arith.constant 0 : index
    %260 = vector.load %arg12[%c2_381, %c2_382, %c0_383] : memref<6x6x32xbf16, #tpu.memory_space<vmem>>, vector<1x4x32xbf16>
    %261 = vector.shape_cast %260 : vector<1x4x32xbf16> to vector<4x32xbf16>
    %c0_384 = arith.constant 0 : index
    %c256 = arith.constant 256 : index
    %262 = vector.load %arg15[%c0_384, %c256] : memref<16x432xbf16, #tpu.memory_space<vmem>>, vector<4x32xbf16>
    tpu.vector_store %arg15[%c0_384, %c256], %261 {strides = array<i32>} : memref<16x432xbf16, #tpu.memory_space<vmem>>, vector<4x32xbf16>,
    %c3_385 = arith.constant 3 : index
    %c2_386 = arith.constant 2 : index
    %c0_387 = arith.constant 0 : index
    %263 = vector.load %arg12[%c3_385, %c2_386, %c0_387] : memref<6x6x32xbf16, #tpu.memory_space<vmem>>, vector<1x4x32xbf16>
    %264 = vector.shape_cast %263 : vector<1x4x32xbf16> to vector<4x32xbf16>
    %c4_388 = arith.constant 4 : index
    %c256_389 = arith.constant 256 : index
    %265 = vector.load %arg15[%c4_388, %c256_389] : memref<16x432xbf16, #tpu.memory_space<vmem>>, vector<4x32xbf16>
    tpu.vector_store %arg15[%c4_388, %c256_389], %264 {strides = array<i32>} : memref<16x432xbf16, #tpu.memory_space<vmem>>, vector<4x32xbf16>,
    %c4_390 = arith.constant 4 : index
    %c2_391 = arith.constant 2 : index
    %c0_392 = arith.constant 0 : index
    %266 = vector.load %arg12[%c4_390, %c2_391, %c0_392] : memref<6x6x32xbf16, #tpu.memory_space<vmem>>, vector<1x4x32xbf16>
    %267 = vector.shape_cast %266 : vector<1x4x32xbf16> to vector<4x32xbf16>
    %c8_393 = arith.constant 8 : index
    %c256_394 = arith.constant 256 : index
    %268 = vector.load %arg15[%c8_393, %c256_394] : memref<16x432xbf16, #tpu.memory_space<vmem>>, vector<4x32xbf16>
    tpu.vector_store %arg15[%c8_393, %c256_394], %267 {strides = array<i32>} : memref<16x432xbf16, #tpu.memory_space<vmem>>, vector<4x32xbf16>,
    %c5_395 = arith.constant 5 : index
    %c2_396 = arith.constant 2 : index
    %c0_397 = arith.constant 0 : index
    %269 = vector.load %arg12[%c5_395, %c2_396, %c0_397] : memref<6x6x32xbf16, #tpu.memory_space<vmem>>, vector<1x4x32xbf16>
    %270 = vector.shape_cast %269 : vector<1x4x32xbf16> to vector<4x32xbf16>
    %c12_398 = arith.constant 12 : index
    %c256_399 = arith.constant 256 : index
    %271 = vector.load %arg15[%c12_398, %c256_399] : memref<16x432xbf16, #tpu.memory_space<vmem>>, vector<4x32xbf16>
    tpu.vector_store %arg15[%c12_398, %c256_399], %270 {strides = array<i32>} : memref<16x432xbf16, #tpu.memory_space<vmem>>, vector<4x32xbf16>,
    %c0_400 = arith.constant 0 : index
    %c0_401 = arith.constant 0 : index
    %272 = vector.load %arg15[%c0_400, %c0_401] : memref<16x432xbf16, #tpu.memory_space<vmem>>, vector<16x288xbf16>
    %c0_402 = arith.constant 0 : index
    %c0_403 = arith.constant 0 : index
    %273 = vector.load %arg4[%c0_402, %c0_403] : memref<288x16xbf16, #tpu.memory_space<vmem>>, vector<288x16xbf16>
    %cst_404 = arith.constant dense<0.000000e+00> : vector<16x16xf32>
    %274 = tpu.matmul %272, %273, %cst_404 {dimension_numbers = #tpu.dot_dimension_numbers<[1], [0], [0], [1], [0, 0, 1, 1], [], []>} : vector<16x288xbf16>, vector<288x16xbf16>, vector<16x16xf32> -> vector<16x16xf32>
    %c0_405 = arith.constant 0 : index
    %c0_406 = arith.constant 0 : index
    %275 = vector.load %arg5[%c0_405, %c0_406] : memref<1x16xf32, #tpu.memory_space<vmem>>, vector<1x16xf32>
    %276 = vector.broadcast %275 : vector<1x16xf32> to vector<16x16xf32>
    %277 = arith.addf %274, %276 : vector<16x16xf32>
    %cst_407 = arith.constant 0.000000e+00 : f32
    %278 = vector.broadcast %cst_407 : f32 to vector<16x16xf32>
    %279 = arith.maximumf %277, %278 : vector<16x16xf32>
    %cst_408 = arith.constant 0.000000e+00 : bf16
    %280 = vector.broadcast %cst_408 : bf16 to vector<1x6x16xbf16>
    %cst_409 = arith.constant 0.000000e+00 : bf16
    %281 = vector.broadcast %cst_409 : bf16 to vector<4x1x16xbf16>
    %c0_410 = arith.constant 0 : index
    %c0_411 = arith.constant 0 : index
    %c0_412 = arith.constant 0 : index
    %282 = vector.load %arg13[%c0_410, %c0_411, %c0_412] : memref<6x6x16xbf16, #tpu.memory_space<vmem>>, vector<1x6x16xbf16>
    tpu.vector_store %arg13[%c0_410, %c0_411, %c0_412], %280 {strides = array<i32>} : memref<6x6x16xbf16, #tpu.memory_space<vmem>>, vector<1x6x16xbf16>,
    %c5_413 = arith.constant 5 : index
    %c0_414 = arith.constant 0 : index
    %c0_415 = arith.constant 0 : index
    %283 = vector.load %arg13[%c5_413, %c0_414, %c0_415] : memref<6x6x16xbf16, #tpu.memory_space<vmem>>, vector<1x6x16xbf16>
    tpu.vector_store %arg13[%c5_413, %c0_414, %c0_415], %280 {strides = array<i32>} : memref<6x6x16xbf16, #tpu.memory_space<vmem>>, vector<1x6x16xbf16>,
    %c1_416 = arith.constant 1 : index
    %c0_417 = arith.constant 0 : index
    %c0_418 = arith.constant 0 : index
    %284 = vector.load %arg13[%c1_416, %c0_417, %c0_418] : memref<6x6x16xbf16, #tpu.memory_space<vmem>>, vector<4x1x16xbf16>
    tpu.vector_store %arg13[%c1_416, %c0_417, %c0_418], %281 {strides = array<i32>} : memref<6x6x16xbf16, #tpu.memory_space<vmem>>, vector<4x1x16xbf16>,
    %c1_419 = arith.constant 1 : index
    %c5_420 = arith.constant 5 : index
    %c0_421 = arith.constant 0 : index
    %285 = vector.load %arg13[%c1_419, %c5_420, %c0_421] : memref<6x6x16xbf16, #tpu.memory_space<vmem>>, vector<4x1x16xbf16>
    tpu.vector_store %arg13[%c1_419, %c5_420, %c0_421], %281 {strides = array<i32>} : memref<6x6x16xbf16, #tpu.memory_space<vmem>>, vector<4x1x16xbf16>,
    %286 = arith.truncf %279 : vector<16x16xf32> to vector<16x16xbf16>
    %287 = vector.extract_strided_slice %286 {offsets = [0, 0], sizes = [4, 16], strides = [1, 1]} : vector<16x16xbf16> to vector<4x16xbf16>
    %c1_422 = arith.constant 1 : index
    %c1_423 = arith.constant 1 : index
    %c0_424 = arith.constant 0 : index
    %288 = vector.load %arg13[%c1_422, %c1_423, %c0_424] : memref<6x6x16xbf16, #tpu.memory_space<vmem>>, vector<1x4x16xbf16>
    %289 = vector.shape_cast %288 : vector<1x4x16xbf16> to vector<4x16xbf16>
    %290 = vector.shape_cast %287 : vector<4x16xbf16> to vector<1x4x16xbf16>
    tpu.vector_store %arg13[%c1_422, %c1_423, %c0_424], %290 {strides = array<i32>} : memref<6x6x16xbf16, #tpu.memory_space<vmem>>, vector<1x4x16xbf16>,
    %291 = vector.extract_strided_slice %286 {offsets = [4, 0], sizes = [4, 16], strides = [1, 1]} : vector<16x16xbf16> to vector<4x16xbf16>
    %c2_425 = arith.constant 2 : index
    %c1_426 = arith.constant 1 : index
    %c0_427 = arith.constant 0 : index
    %292 = vector.load %arg13[%c2_425, %c1_426, %c0_427] : memref<6x6x16xbf16, #tpu.memory_space<vmem>>, vector<1x4x16xbf16>
    %293 = vector.shape_cast %292 : vector<1x4x16xbf16> to vector<4x16xbf16>
    %294 = vector.shape_cast %291 : vector<4x16xbf16> to vector<1x4x16xbf16>
    tpu.vector_store %arg13[%c2_425, %c1_426, %c0_427], %294 {strides = array<i32>} : memref<6x6x16xbf16, #tpu.memory_space<vmem>>, vector<1x4x16xbf16>,
    %295 = vector.extract_strided_slice %286 {offsets = [8, 0], sizes = [4, 16], strides = [1, 1]} : vector<16x16xbf16> to vector<4x16xbf16>
    %c3_428 = arith.constant 3 : index
    %c1_429 = arith.constant 1 : index
    %c0_430 = arith.constant 0 : index
    %296 = vector.load %arg13[%c3_428, %c1_429, %c0_430] : memref<6x6x16xbf16, #tpu.memory_space<vmem>>, vector<1x4x16xbf16>
    %297 = vector.shape_cast %296 : vector<1x4x16xbf16> to vector<4x16xbf16>
    %298 = vector.shape_cast %295 : vector<4x16xbf16> to vector<1x4x16xbf16>
    tpu.vector_store %arg13[%c3_428, %c1_429, %c0_430], %298 {strides = array<i32>} : memref<6x6x16xbf16, #tpu.memory_space<vmem>>, vector<1x4x16xbf16>,
    %299 = vector.extract_strided_slice %286 {offsets = [12, 0], sizes = [4, 16], strides = [1, 1]} : vector<16x16xbf16> to vector<4x16xbf16>
    %c4_431 = arith.constant 4 : index
    %c1_432 = arith.constant 1 : index
    %c0_433 = arith.constant 0 : index
    %300 = vector.load %arg13[%c4_431, %c1_432, %c0_433] : memref<6x6x16xbf16, #tpu.memory_space<vmem>>, vector<1x4x16xbf16>
    %301 = vector.shape_cast %300 : vector<1x4x16xbf16> to vector<4x16xbf16>
    %302 = vector.shape_cast %299 : vector<4x16xbf16> to vector<1x4x16xbf16>
    tpu.vector_store %arg13[%c4_431, %c1_432, %c0_433], %302 {strides = array<i32>} : memref<6x6x16xbf16, #tpu.memory_space<vmem>>, vector<1x4x16xbf16>,
    %c0_434 = arith.constant 0 : index
    %c0_435 = arith.constant 0 : index
    %c0_436 = arith.constant 0 : index
    %303 = vector.load %arg13[%c0_434, %c0_435, %c0_436] : memref<6x6x16xbf16, #tpu.memory_space<vmem>>, vector<1x4x16xbf16>
    %304 = vector.shape_cast %303 : vector<1x4x16xbf16> to vector<4x16xbf16>
    %c0_437 = arith.constant 0 : index
    %c0_438 = arith.constant 0 : index
    %305 = vector.load %arg15[%c0_437, %c0_438] : memref<16x432xbf16, #tpu.memory_space<vmem>>, vector<4x16xbf16>
    tpu.vector_store %arg15[%c0_437, %c0_438], %304 {strides = array<i32>} : memref<16x432xbf16, #tpu.memory_space<vmem>>, vector<4x16xbf16>,
    %c1_439 = arith.constant 1 : index
    %c0_440 = arith.constant 0 : index
    %c0_441 = arith.constant 0 : index
    %306 = vector.load %arg13[%c1_439, %c0_440, %c0_441] : memref<6x6x16xbf16, #tpu.memory_space<vmem>>, vector<1x4x16xbf16>
    %307 = vector.shape_cast %306 : vector<1x4x16xbf16> to vector<4x16xbf16>
    %c4_442 = arith.constant 4 : index
    %c0_443 = arith.constant 0 : index
    %308 = vector.load %arg15[%c4_442, %c0_443] : memref<16x432xbf16, #tpu.memory_space<vmem>>, vector<4x16xbf16>
    tpu.vector_store %arg15[%c4_442, %c0_443], %307 {strides = array<i32>} : memref<16x432xbf16, #tpu.memory_space<vmem>>, vector<4x16xbf16>,
    %c2_444 = arith.constant 2 : index
    %c0_445 = arith.constant 0 : index
    %c0_446 = arith.constant 0 : index
    %309 = vector.load %arg13[%c2_444, %c0_445, %c0_446] : memref<6x6x16xbf16, #tpu.memory_space<vmem>>, vector<1x4x16xbf16>
    %310 = vector.shape_cast %309 : vector<1x4x16xbf16> to vector<4x16xbf16>
    %c8_447 = arith.constant 8 : index
    %c0_448 = arith.constant 0 : index
    %311 = vector.load %arg15[%c8_447, %c0_448] : memref<16x432xbf16, #tpu.memory_space<vmem>>, vector<4x16xbf16>
    tpu.vector_store %arg15[%c8_447, %c0_448], %310 {strides = array<i32>} : memref<16x432xbf16, #tpu.memory_space<vmem>>, vector<4x16xbf16>,
    %c3_449 = arith.constant 3 : index
    %c0_450 = arith.constant 0 : index
    %c0_451 = arith.constant 0 : index
    %312 = vector.load %arg13[%c3_449, %c0_450, %c0_451] : memref<6x6x16xbf16, #tpu.memory_space<vmem>>, vector<1x4x16xbf16>
    %313 = vector.shape_cast %312 : vector<1x4x16xbf16> to vector<4x16xbf16>
    %c12_452 = arith.constant 12 : index
    %c0_453 = arith.constant 0 : index
    %314 = vector.load %arg15[%c12_452, %c0_453] : memref<16x432xbf16, #tpu.memory_space<vmem>>, vector<4x16xbf16>
    tpu.vector_store %arg15[%c12_452, %c0_453], %313 {strides = array<i32>} : memref<16x432xbf16, #tpu.memory_space<vmem>>, vector<4x16xbf16>,
    %c0_454 = arith.constant 0 : index
    %c1_455 = arith.constant 1 : index
    %c0_456 = arith.constant 0 : index
    %315 = vector.load %arg13[%c0_454, %c1_455, %c0_456] : memref<6x6x16xbf16, #tpu.memory_space<vmem>>, vector<1x4x16xbf16>
    %316 = vector.shape_cast %315 : vector<1x4x16xbf16> to vector<4x16xbf16>
    %c0_457 = arith.constant 0 : index
    %c16 = arith.constant 16 : index
    %317 = vector.load %arg15[%c0_457, %c16] : memref<16x432xbf16, #tpu.memory_space<vmem>>, vector<4x16xbf16>
    tpu.vector_store %arg15[%c0_457, %c16], %316 {strides = array<i32>} : memref<16x432xbf16, #tpu.memory_space<vmem>>, vector<4x16xbf16>,
    %c1_458 = arith.constant 1 : index
    %c1_459 = arith.constant 1 : index
    %c0_460 = arith.constant 0 : index
    %318 = vector.load %arg13[%c1_458, %c1_459, %c0_460] : memref<6x6x16xbf16, #tpu.memory_space<vmem>>, vector<1x4x16xbf16>
    %319 = vector.shape_cast %318 : vector<1x4x16xbf16> to vector<4x16xbf16>
    %c4_461 = arith.constant 4 : index
    %c16_462 = arith.constant 16 : index
    %320 = vector.load %arg15[%c4_461, %c16_462] : memref<16x432xbf16, #tpu.memory_space<vmem>>, vector<4x16xbf16>
    tpu.vector_store %arg15[%c4_461, %c16_462], %319 {strides = array<i32>} : memref<16x432xbf16, #tpu.memory_space<vmem>>, vector<4x16xbf16>,
    %c2_463 = arith.constant 2 : index
    %c1_464 = arith.constant 1 : index
    %c0_465 = arith.constant 0 : index
    %321 = vector.load %arg13[%c2_463, %c1_464, %c0_465] : memref<6x6x16xbf16, #tpu.memory_space<vmem>>, vector<1x4x16xbf16>
    %322 = vector.shape_cast %321 : vector<1x4x16xbf16> to vector<4x16xbf16>
    %c8_466 = arith.constant 8 : index
    %c16_467 = arith.constant 16 : index
    %323 = vector.load %arg15[%c8_466, %c16_467] : memref<16x432xbf16, #tpu.memory_space<vmem>>, vector<4x16xbf16>
    tpu.vector_store %arg15[%c8_466, %c16_467], %322 {strides = array<i32>} : memref<16x432xbf16, #tpu.memory_space<vmem>>, vector<4x16xbf16>,
    %c3_468 = arith.constant 3 : index
    %c1_469 = arith.constant 1 : index
    %c0_470 = arith.constant 0 : index
    %324 = vector.load %arg13[%c3_468, %c1_469, %c0_470] : memref<6x6x16xbf16, #tpu.memory_space<vmem>>, vector<1x4x16xbf16>
    %325 = vector.shape_cast %324 : vector<1x4x16xbf16> to vector<4x16xbf16>
    %c12_471 = arith.constant 12 : index
    %c16_472 = arith.constant 16 : index
    %326 = vector.load %arg15[%c12_471, %c16_472] : memref<16x432xbf16, #tpu.memory_space<vmem>>, vector<4x16xbf16>
    tpu.vector_store %arg15[%c12_471, %c16_472], %325 {strides = array<i32>} : memref<16x432xbf16, #tpu.memory_space<vmem>>, vector<4x16xbf16>,
    %c0_473 = arith.constant 0 : index
    %c2_474 = arith.constant 2 : index
    %c0_475 = arith.constant 0 : index
    %327 = vector.load %arg13[%c0_473, %c2_474, %c0_475] : memref<6x6x16xbf16, #tpu.memory_space<vmem>>, vector<1x4x16xbf16>
    %328 = vector.shape_cast %327 : vector<1x4x16xbf16> to vector<4x16xbf16>
    %c0_476 = arith.constant 0 : index
    %c32_477 = arith.constant 32 : index
    %329 = vector.load %arg15[%c0_476, %c32_477] : memref<16x432xbf16, #tpu.memory_space<vmem>>, vector<4x16xbf16>
    tpu.vector_store %arg15[%c0_476, %c32_477], %328 {strides = array<i32>} : memref<16x432xbf16, #tpu.memory_space<vmem>>, vector<4x16xbf16>,
    %c1_478 = arith.constant 1 : index
    %c2_479 = arith.constant 2 : index
    %c0_480 = arith.constant 0 : index
    %330 = vector.load %arg13[%c1_478, %c2_479, %c0_480] : memref<6x6x16xbf16, #tpu.memory_space<vmem>>, vector<1x4x16xbf16>
    %331 = vector.shape_cast %330 : vector<1x4x16xbf16> to vector<4x16xbf16>
    %c4_481 = arith.constant 4 : index
    %c32_482 = arith.constant 32 : index
    %332 = vector.load %arg15[%c4_481, %c32_482] : memref<16x432xbf16, #tpu.memory_space<vmem>>, vector<4x16xbf16>
    tpu.vector_store %arg15[%c4_481, %c32_482], %331 {strides = array<i32>} : memref<16x432xbf16, #tpu.memory_space<vmem>>, vector<4x16xbf16>,
    %c2_483 = arith.constant 2 : index
    %c2_484 = arith.constant 2 : index
    %c0_485 = arith.constant 0 : index
    %333 = vector.load %arg13[%c2_483, %c2_484, %c0_485] : memref<6x6x16xbf16, #tpu.memory_space<vmem>>, vector<1x4x16xbf16>
    %334 = vector.shape_cast %333 : vector<1x4x16xbf16> to vector<4x16xbf16>
    %c8_486 = arith.constant 8 : index
    %c32_487 = arith.constant 32 : index
    %335 = vector.load %arg15[%c8_486, %c32_487] : memref<16x432xbf16, #tpu.memory_space<vmem>>, vector<4x16xbf16>
    tpu.vector_store %arg15[%c8_486, %c32_487], %334 {strides = array<i32>} : memref<16x432xbf16, #tpu.memory_space<vmem>>, vector<4x16xbf16>,
    %c3_488 = arith.constant 3 : index
    %c2_489 = arith.constant 2 : index
    %c0_490 = arith.constant 0 : index
    %336 = vector.load %arg13[%c3_488, %c2_489, %c0_490] : memref<6x6x16xbf16, #tpu.memory_space<vmem>>, vector<1x4x16xbf16>
    %337 = vector.shape_cast %336 : vector<1x4x16xbf16> to vector<4x16xbf16>
    %c12_491 = arith.constant 12 : index
    %c32_492 = arith.constant 32 : index
    %338 = vector.load %arg15[%c12_491, %c32_492] : memref<16x432xbf16, #tpu.memory_space<vmem>>, vector<4x16xbf16>
    tpu.vector_store %arg15[%c12_491, %c32_492], %337 {strides = array<i32>} : memref<16x432xbf16, #tpu.memory_space<vmem>>, vector<4x16xbf16>,
    %c1_493 = arith.constant 1 : index
    %c0_494 = arith.constant 0 : index
    %c0_495 = arith.constant 0 : index
    %339 = vector.load %arg13[%c1_493, %c0_494, %c0_495] : memref<6x6x16xbf16, #tpu.memory_space<vmem>>, vector<1x4x16xbf16>
    %340 = vector.shape_cast %339 : vector<1x4x16xbf16> to vector<4x16xbf16>
    %c0_496 = arith.constant 0 : index
    %c48_497 = arith.constant 48 : index
    %341 = vector.load %arg15[%c0_496, %c48_497] : memref<16x432xbf16, #tpu.memory_space<vmem>>, vector<4x16xbf16>
    tpu.vector_store %arg15[%c0_496, %c48_497], %340 {strides = array<i32>} : memref<16x432xbf16, #tpu.memory_space<vmem>>, vector<4x16xbf16>,
    %c2_498 = arith.constant 2 : index
    %c0_499 = arith.constant 0 : index
    %c0_500 = arith.constant 0 : index
    %342 = vector.load %arg13[%c2_498, %c0_499, %c0_500] : memref<6x6x16xbf16, #tpu.memory_space<vmem>>, vector<1x4x16xbf16>
    %343 = vector.shape_cast %342 : vector<1x4x16xbf16> to vector<4x16xbf16>
    %c4_501 = arith.constant 4 : index
    %c48_502 = arith.constant 48 : index
    %344 = vector.load %arg15[%c4_501, %c48_502] : memref<16x432xbf16, #tpu.memory_space<vmem>>, vector<4x16xbf16>
    tpu.vector_store %arg15[%c4_501, %c48_502], %343 {strides = array<i32>} : memref<16x432xbf16, #tpu.memory_space<vmem>>, vector<4x16xbf16>,
    %c3_503 = arith.constant 3 : index
    %c0_504 = arith.constant 0 : index
    %c0_505 = arith.constant 0 : index
    %345 = vector.load %arg13[%c3_503, %c0_504, %c0_505] : memref<6x6x16xbf16, #tpu.memory_space<vmem>>, vector<1x4x16xbf16>
    %346 = vector.shape_cast %345 : vector<1x4x16xbf16> to vector<4x16xbf16>
    %c8_506 = arith.constant 8 : index
    %c48_507 = arith.constant 48 : index
    %347 = vector.load %arg15[%c8_506, %c48_507] : memref<16x432xbf16, #tpu.memory_space<vmem>>, vector<4x16xbf16>
    tpu.vector_store %arg15[%c8_506, %c48_507], %346 {strides = array<i32>} : memref<16x432xbf16, #tpu.memory_space<vmem>>, vector<4x16xbf16>,
    %c4_508 = arith.constant 4 : index
    %c0_509 = arith.constant 0 : index
    %c0_510 = arith.constant 0 : index
    %348 = vector.load %arg13[%c4_508, %c0_509, %c0_510] : memref<6x6x16xbf16, #tpu.memory_space<vmem>>, vector<1x4x16xbf16>
    %349 = vector.shape_cast %348 : vector<1x4x16xbf16> to vector<4x16xbf16>
    %c12_511 = arith.constant 12 : index
    %c48_512 = arith.constant 48 : index
    %350 = vector.load %arg15[%c12_511, %c48_512] : memref<16x432xbf16, #tpu.memory_space<vmem>>, vector<4x16xbf16>
    tpu.vector_store %arg15[%c12_511, %c48_512], %349 {strides = array<i32>} : memref<16x432xbf16, #tpu.memory_space<vmem>>, vector<4x16xbf16>,
    %c1_513 = arith.constant 1 : index
    %c1_514 = arith.constant 1 : index
    %c0_515 = arith.constant 0 : index
    %351 = vector.load %arg13[%c1_513, %c1_514, %c0_515] : memref<6x6x16xbf16, #tpu.memory_space<vmem>>, vector<1x4x16xbf16>
    %352 = vector.shape_cast %351 : vector<1x4x16xbf16> to vector<4x16xbf16>
    %c0_516 = arith.constant 0 : index
    %c64_517 = arith.constant 64 : index
    %353 = vector.load %arg15[%c0_516, %c64_517] : memref<16x432xbf16, #tpu.memory_space<vmem>>, vector<4x16xbf16>
    tpu.vector_store %arg15[%c0_516, %c64_517], %352 {strides = array<i32>} : memref<16x432xbf16, #tpu.memory_space<vmem>>, vector<4x16xbf16>,
    %c2_518 = arith.constant 2 : index
    %c1_519 = arith.constant 1 : index
    %c0_520 = arith.constant 0 : index
    %354 = vector.load %arg13[%c2_518, %c1_519, %c0_520] : memref<6x6x16xbf16, #tpu.memory_space<vmem>>, vector<1x4x16xbf16>
    %355 = vector.shape_cast %354 : vector<1x4x16xbf16> to vector<4x16xbf16>
    %c4_521 = arith.constant 4 : index
    %c64_522 = arith.constant 64 : index
    %356 = vector.load %arg15[%c4_521, %c64_522] : memref<16x432xbf16, #tpu.memory_space<vmem>>, vector<4x16xbf16>
    tpu.vector_store %arg15[%c4_521, %c64_522], %355 {strides = array<i32>} : memref<16x432xbf16, #tpu.memory_space<vmem>>, vector<4x16xbf16>,
    %c3_523 = arith.constant 3 : index
    %c1_524 = arith.constant 1 : index
    %c0_525 = arith.constant 0 : index
    %357 = vector.load %arg13[%c3_523, %c1_524, %c0_525] : memref<6x6x16xbf16, #tpu.memory_space<vmem>>, vector<1x4x16xbf16>
    %358 = vector.shape_cast %357 : vector<1x4x16xbf16> to vector<4x16xbf16>
    %c8_526 = arith.constant 8 : index
    %c64_527 = arith.constant 64 : index
    %359 = vector.load %arg15[%c8_526, %c64_527] : memref<16x432xbf16, #tpu.memory_space<vmem>>, vector<4x16xbf16>
    tpu.vector_store %arg15[%c8_526, %c64_527], %358 {strides = array<i32>} : memref<16x432xbf16, #tpu.memory_space<vmem>>, vector<4x16xbf16>,
    %c4_528 = arith.constant 4 : index
    %c1_529 = arith.constant 1 : index
    %c0_530 = arith.constant 0 : index
    %360 = vector.load %arg13[%c4_528, %c1_529, %c0_530] : memref<6x6x16xbf16, #tpu.memory_space<vmem>>, vector<1x4x16xbf16>
    %361 = vector.shape_cast %360 : vector<1x4x16xbf16> to vector<4x16xbf16>
    %c12_531 = arith.constant 12 : index
    %c64_532 = arith.constant 64 : index
    %362 = vector.load %arg15[%c12_531, %c64_532] : memref<16x432xbf16, #tpu.memory_space<vmem>>, vector<4x16xbf16>
    tpu.vector_store %arg15[%c12_531, %c64_532], %361 {strides = array<i32>} : memref<16x432xbf16, #tpu.memory_space<vmem>>, vector<4x16xbf16>,
    %c1_533 = arith.constant 1 : index
    %c2_534 = arith.constant 2 : index
    %c0_535 = arith.constant 0 : index
    %363 = vector.load %arg13[%c1_533, %c2_534, %c0_535] : memref<6x6x16xbf16, #tpu.memory_space<vmem>>, vector<1x4x16xbf16>
    %364 = vector.shape_cast %363 : vector<1x4x16xbf16> to vector<4x16xbf16>
    %c0_536 = arith.constant 0 : index
    %c80 = arith.constant 80 : index
    %365 = vector.load %arg15[%c0_536, %c80] : memref<16x432xbf16, #tpu.memory_space<vmem>>, vector<4x16xbf16>
    tpu.vector_store %arg15[%c0_536, %c80], %364 {strides = array<i32>} : memref<16x432xbf16, #tpu.memory_space<vmem>>, vector<4x16xbf16>,
    %c2_537 = arith.constant 2 : index
    %c2_538 = arith.constant 2 : index
    %c0_539 = arith.constant 0 : index
    %366 = vector.load %arg13[%c2_537, %c2_538, %c0_539] : memref<6x6x16xbf16, #tpu.memory_space<vmem>>, vector<1x4x16xbf16>
    %367 = vector.shape_cast %366 : vector<1x4x16xbf16> to vector<4x16xbf16>
    %c4_540 = arith.constant 4 : index
    %c80_541 = arith.constant 80 : index
    %368 = vector.load %arg15[%c4_540, %c80_541] : memref<16x432xbf16, #tpu.memory_space<vmem>>, vector<4x16xbf16>
    tpu.vector_store %arg15[%c4_540, %c80_541], %367 {strides = array<i32>} : memref<16x432xbf16, #tpu.memory_space<vmem>>, vector<4x16xbf16>,
    %c3_542 = arith.constant 3 : index
    %c2_543 = arith.constant 2 : index
    %c0_544 = arith.constant 0 : index
    %369 = vector.load %arg13[%c3_542, %c2_543, %c0_544] : memref<6x6x16xbf16, #tpu.memory_space<vmem>>, vector<1x4x16xbf16>
    %370 = vector.shape_cast %369 : vector<1x4x16xbf16> to vector<4x16xbf16>
    %c8_545 = arith.constant 8 : index
    %c80_546 = arith.constant 80 : index
    %371 = vector.load %arg15[%c8_545, %c80_546] : memref<16x432xbf16, #tpu.memory_space<vmem>>, vector<4x16xbf16>
    tpu.vector_store %arg15[%c8_545, %c80_546], %370 {strides = array<i32>} : memref<16x432xbf16, #tpu.memory_space<vmem>>, vector<4x16xbf16>,
    %c4_547 = arith.constant 4 : index
    %c2_548 = arith.constant 2 : index
    %c0_549 = arith.constant 0 : index
    %372 = vector.load %arg13[%c4_547, %c2_548, %c0_549] : memref<6x6x16xbf16, #tpu.memory_space<vmem>>, vector<1x4x16xbf16>
    %373 = vector.shape_cast %372 : vector<1x4x16xbf16> to vector<4x16xbf16>
    %c12_550 = arith.constant 12 : index
    %c80_551 = arith.constant 80 : index
    %374 = vector.load %arg15[%c12_550, %c80_551] : memref<16x432xbf16, #tpu.memory_space<vmem>>, vector<4x16xbf16>
    tpu.vector_store %arg15[%c12_550, %c80_551], %373 {strides = array<i32>} : memref<16x432xbf16, #tpu.memory_space<vmem>>, vector<4x16xbf16>,
    %c2_552 = arith.constant 2 : index
    %c0_553 = arith.constant 0 : index
    %c0_554 = arith.constant 0 : index
    %375 = vector.load %arg13[%c2_552, %c0_553, %c0_554] : memref<6x6x16xbf16, #tpu.memory_space<vmem>>, vector<1x4x16xbf16>
    %376 = vector.shape_cast %375 : vector<1x4x16xbf16> to vector<4x16xbf16>
    %c0_555 = arith.constant 0 : index
    %c96_556 = arith.constant 96 : index
    %377 = vector.load %arg15[%c0_555, %c96_556] : memref<16x432xbf16, #tpu.memory_space<vmem>>, vector<4x16xbf16>
    tpu.vector_store %arg15[%c0_555, %c96_556], %376 {strides = array<i32>} : memref<16x432xbf16, #tpu.memory_space<vmem>>, vector<4x16xbf16>,
    %c3_557 = arith.constant 3 : index
    %c0_558 = arith.constant 0 : index
    %c0_559 = arith.constant 0 : index
    %378 = vector.load %arg13[%c3_557, %c0_558, %c0_559] : memref<6x6x16xbf16, #tpu.memory_space<vmem>>, vector<1x4x16xbf16>
    %379 = vector.shape_cast %378 : vector<1x4x16xbf16> to vector<4x16xbf16>
    %c4_560 = arith.constant 4 : index
    %c96_561 = arith.constant 96 : index
    %380 = vector.load %arg15[%c4_560, %c96_561] : memref<16x432xbf16, #tpu.memory_space<vmem>>, vector<4x16xbf16>
    tpu.vector_store %arg15[%c4_560, %c96_561], %379 {strides = array<i32>} : memref<16x432xbf16, #tpu.memory_space<vmem>>, vector<4x16xbf16>,
    %c4_562 = arith.constant 4 : index
    %c0_563 = arith.constant 0 : index
    %c0_564 = arith.constant 0 : index
    %381 = vector.load %arg13[%c4_562, %c0_563, %c0_564] : memref<6x6x16xbf16, #tpu.memory_space<vmem>>, vector<1x4x16xbf16>
    %382 = vector.shape_cast %381 : vector<1x4x16xbf16> to vector<4x16xbf16>
    %c8_565 = arith.constant 8 : index
    %c96_566 = arith.constant 96 : index
    %383 = vector.load %arg15[%c8_565, %c96_566] : memref<16x432xbf16, #tpu.memory_space<vmem>>, vector<4x16xbf16>
    tpu.vector_store %arg15[%c8_565, %c96_566], %382 {strides = array<i32>} : memref<16x432xbf16, #tpu.memory_space<vmem>>, vector<4x16xbf16>,
    %c5_567 = arith.constant 5 : index
    %c0_568 = arith.constant 0 : index
    %c0_569 = arith.constant 0 : index
    %384 = vector.load %arg13[%c5_567, %c0_568, %c0_569] : memref<6x6x16xbf16, #tpu.memory_space<vmem>>, vector<1x4x16xbf16>
    %385 = vector.shape_cast %384 : vector<1x4x16xbf16> to vector<4x16xbf16>
    %c12_570 = arith.constant 12 : index
    %c96_571 = arith.constant 96 : index
    %386 = vector.load %arg15[%c12_570, %c96_571] : memref<16x432xbf16, #tpu.memory_space<vmem>>, vector<4x16xbf16>
    tpu.vector_store %arg15[%c12_570, %c96_571], %385 {strides = array<i32>} : memref<16x432xbf16, #tpu.memory_space<vmem>>, vector<4x16xbf16>,
    %c2_572 = arith.constant 2 : index
    %c1_573 = arith.constant 1 : index
    %c0_574 = arith.constant 0 : index
    %387 = vector.load %arg13[%c2_572, %c1_573, %c0_574] : memref<6x6x16xbf16, #tpu.memory_space<vmem>>, vector<1x4x16xbf16>
    %388 = vector.shape_cast %387 : vector<1x4x16xbf16> to vector<4x16xbf16>
    %c0_575 = arith.constant 0 : index
    %c112 = arith.constant 112 : index
    %389 = vector.load %arg15[%c0_575, %c112] : memref<16x432xbf16, #tpu.memory_space<vmem>>, vector<4x16xbf16>
    tpu.vector_store %arg15[%c0_575, %c112], %388 {strides = array<i32>} : memref<16x432xbf16, #tpu.memory_space<vmem>>, vector<4x16xbf16>,
    %c3_576 = arith.constant 3 : index
    %c1_577 = arith.constant 1 : index
    %c0_578 = arith.constant 0 : index
    %390 = vector.load %arg13[%c3_576, %c1_577, %c0_578] : memref<6x6x16xbf16, #tpu.memory_space<vmem>>, vector<1x4x16xbf16>
    %391 = vector.shape_cast %390 : vector<1x4x16xbf16> to vector<4x16xbf16>
    %c4_579 = arith.constant 4 : index
    %c112_580 = arith.constant 112 : index
    %392 = vector.load %arg15[%c4_579, %c112_580] : memref<16x432xbf16, #tpu.memory_space<vmem>>, vector<4x16xbf16>
    tpu.vector_store %arg15[%c4_579, %c112_580], %391 {strides = array<i32>} : memref<16x432xbf16, #tpu.memory_space<vmem>>, vector<4x16xbf16>,
    %c4_581 = arith.constant 4 : index
    %c1_582 = arith.constant 1 : index
    %c0_583 = arith.constant 0 : index
    %393 = vector.load %arg13[%c4_581, %c1_582, %c0_583] : memref<6x6x16xbf16, #tpu.memory_space<vmem>>, vector<1x4x16xbf16>
    %394 = vector.shape_cast %393 : vector<1x4x16xbf16> to vector<4x16xbf16>
    %c8_584 = arith.constant 8 : index
    %c112_585 = arith.constant 112 : index
    %395 = vector.load %arg15[%c8_584, %c112_585] : memref<16x432xbf16, #tpu.memory_space<vmem>>, vector<4x16xbf16>
    tpu.vector_store %arg15[%c8_584, %c112_585], %394 {strides = array<i32>} : memref<16x432xbf16, #tpu.memory_space<vmem>>, vector<4x16xbf16>,
    %c5_586 = arith.constant 5 : index
    %c1_587 = arith.constant 1 : index
    %c0_588 = arith.constant 0 : index
    %396 = vector.load %arg13[%c5_586, %c1_587, %c0_588] : memref<6x6x16xbf16, #tpu.memory_space<vmem>>, vector<1x4x16xbf16>
    %397 = vector.shape_cast %396 : vector<1x4x16xbf16> to vector<4x16xbf16>
    %c12_589 = arith.constant 12 : index
    %c112_590 = arith.constant 112 : index
    %398 = vector.load %arg15[%c12_589, %c112_590] : memref<16x432xbf16, #tpu.memory_space<vmem>>, vector<4x16xbf16>
    tpu.vector_store %arg15[%c12_589, %c112_590], %397 {strides = array<i32>} : memref<16x432xbf16, #tpu.memory_space<vmem>>, vector<4x16xbf16>,
    %c2_591 = arith.constant 2 : index
    %c2_592 = arith.constant 2 : index
    %c0_593 = arith.constant 0 : index
    %399 = vector.load %arg13[%c2_591, %c2_592, %c0_593] : memref<6x6x16xbf16, #tpu.memory_space<vmem>>, vector<1x4x16xbf16>
    %400 = vector.shape_cast %399 : vector<1x4x16xbf16> to vector<4x16xbf16>
    %c0_594 = arith.constant 0 : index
    %c128_595 = arith.constant 128 : index
    %401 = vector.load %arg15[%c0_594, %c128_595] : memref<16x432xbf16, #tpu.memory_space<vmem>>, vector<4x16xbf16>
    tpu.vector_store %arg15[%c0_594, %c128_595], %400 {strides = array<i32>} : memref<16x432xbf16, #tpu.memory_space<vmem>>, vector<4x16xbf16>,
    %c3_596 = arith.constant 3 : index
    %c2_597 = arith.constant 2 : index
    %c0_598 = arith.constant 0 : index
    %402 = vector.load %arg13[%c3_596, %c2_597, %c0_598] : memref<6x6x16xbf16, #tpu.memory_space<vmem>>, vector<1x4x16xbf16>
    %403 = vector.shape_cast %402 : vector<1x4x16xbf16> to vector<4x16xbf16>
    %c4_599 = arith.constant 4 : index
    %c128_600 = arith.constant 128 : index
    %404 = vector.load %arg15[%c4_599, %c128_600] : memref<16x432xbf16, #tpu.memory_space<vmem>>, vector<4x16xbf16>
    tpu.vector_store %arg15[%c4_599, %c128_600], %403 {strides = array<i32>} : memref<16x432xbf16, #tpu.memory_space<vmem>>, vector<4x16xbf16>,
    %c4_601 = arith.constant 4 : index
    %c2_602 = arith.constant 2 : index
    %c0_603 = arith.constant 0 : index
    %405 = vector.load %arg13[%c4_601, %c2_602, %c0_603] : memref<6x6x16xbf16, #tpu.memory_space<vmem>>, vector<1x4x16xbf16>
    %406 = vector.shape_cast %405 : vector<1x4x16xbf16> to vector<4x16xbf16>
    %c8_604 = arith.constant 8 : index
    %c128_605 = arith.constant 128 : index
    %407 = vector.load %arg15[%c8_604, %c128_605] : memref<16x432xbf16, #tpu.memory_space<vmem>>, vector<4x16xbf16>
    tpu.vector_store %arg15[%c8_604, %c128_605], %406 {strides = array<i32>} : memref<16x432xbf16, #tpu.memory_space<vmem>>, vector<4x16xbf16>,
    %c5_606 = arith.constant 5 : index
    %c2_607 = arith.constant 2 : index
    %c0_608 = arith.constant 0 : index
    %408 = vector.load %arg13[%c5_606, %c2_607, %c0_608] : memref<6x6x16xbf16, #tpu.memory_space<vmem>>, vector<1x4x16xbf16>
    %409 = vector.shape_cast %408 : vector<1x4x16xbf16> to vector<4x16xbf16>
    %c12_609 = arith.constant 12 : index
    %c128_610 = arith.constant 128 : index
    %410 = vector.load %arg15[%c12_609, %c128_610] : memref<16x432xbf16, #tpu.memory_space<vmem>>, vector<4x16xbf16>
    tpu.vector_store %arg15[%c12_609, %c128_610], %409 {strides = array<i32>} : memref<16x432xbf16, #tpu.memory_space<vmem>>, vector<4x16xbf16>,
    %c0_611 = arith.constant 0 : index
    %c0_612 = arith.constant 0 : index
    %411 = vector.load %arg15[%c0_611, %c0_612] : memref<16x432xbf16, #tpu.memory_space<vmem>>, vector<16x144xbf16>
    %c0_613 = arith.constant 0 : index
    %c0_614 = arith.constant 0 : index
    %412 = vector.load %arg6[%c0_613, %c0_614] : memref<144x32xbf16, #tpu.memory_space<vmem>>, vector<144x32xbf16>
    %cst_615 = arith.constant dense<0.000000e+00> : vector<16x32xf32>
    %413 = tpu.matmul %411, %412, %cst_615 {dimension_numbers = #tpu.dot_dimension_numbers<[1], [0], [0], [1], [0, 0, 1, 1], [], []>} : vector<16x144xbf16>, vector<144x32xbf16>, vector<16x32xf32> -> vector<16x32xf32>
    %c0_616 = arith.constant 0 : index
    %c0_617 = arith.constant 0 : index
    %414 = vector.load %arg7[%c0_616, %c0_617] : memref<1x32xf32, #tpu.memory_space<vmem>>, vector<1x32xf32>
    %415 = vector.broadcast %414 : vector<1x32xf32> to vector<16x32xf32>
    %416 = arith.addf %413, %415 : vector<16x32xf32>
    %cst_618 = arith.constant 0.000000e+00 : f32
    %417 = vector.broadcast %cst_618 : f32 to vector<16x32xf32>
    %418 = arith.maximumf %416, %417 : vector<16x32xf32>
    %cst_619 = arith.constant 0.000000e+00 : bf16
    %419 = vector.broadcast %cst_619 : bf16 to vector<1x6x32xbf16>
    %cst_620 = arith.constant 0.000000e+00 : bf16
    %420 = vector.broadcast %cst_620 : bf16 to vector<4x1x32xbf16>
    %c0_621 = arith.constant 0 : index
    %c0_622 = arith.constant 0 : index
    %c0_623 = arith.constant 0 : index
    %421 = vector.load %arg14[%c0_621, %c0_622, %c0_623] : memref<6x6x32xbf16, #tpu.memory_space<vmem>>, vector<1x6x32xbf16>
    tpu.vector_store %arg14[%c0_621, %c0_622, %c0_623], %419 {strides = array<i32>} : memref<6x6x32xbf16, #tpu.memory_space<vmem>>, vector<1x6x32xbf16>,
    %c5_624 = arith.constant 5 : index
    %c0_625 = arith.constant 0 : index
    %c0_626 = arith.constant 0 : index
    %422 = vector.load %arg14[%c5_624, %c0_625, %c0_626] : memref<6x6x32xbf16, #tpu.memory_space<vmem>>, vector<1x6x32xbf16>
    tpu.vector_store %arg14[%c5_624, %c0_625, %c0_626], %419 {strides = array<i32>} : memref<6x6x32xbf16, #tpu.memory_space<vmem>>, vector<1x6x32xbf16>,
    %c1_627 = arith.constant 1 : index
    %c0_628 = arith.constant 0 : index
    %c0_629 = arith.constant 0 : index
    %423 = vector.load %arg14[%c1_627, %c0_628, %c0_629] : memref<6x6x32xbf16, #tpu.memory_space<vmem>>, vector<4x1x32xbf16>
    tpu.vector_store %arg14[%c1_627, %c0_628, %c0_629], %420 {strides = array<i32>} : memref<6x6x32xbf16, #tpu.memory_space<vmem>>, vector<4x1x32xbf16>,
    %c1_630 = arith.constant 1 : index
    %c5_631 = arith.constant 5 : index
    %c0_632 = arith.constant 0 : index
    %424 = vector.load %arg14[%c1_630, %c5_631, %c0_632] : memref<6x6x32xbf16, #tpu.memory_space<vmem>>, vector<4x1x32xbf16>
    tpu.vector_store %arg14[%c1_630, %c5_631, %c0_632], %420 {strides = array<i32>} : memref<6x6x32xbf16, #tpu.memory_space<vmem>>, vector<4x1x32xbf16>,
    %425 = arith.truncf %418 : vector<16x32xf32> to vector<16x32xbf16>
    %426 = vector.extract_strided_slice %425 {offsets = [0, 0], sizes = [4, 32], strides = [1, 1]} : vector<16x32xbf16> to vector<4x32xbf16>
    %c1_633 = arith.constant 1 : index
    %c1_634 = arith.constant 1 : index
    %c0_635 = arith.constant 0 : index
    %427 = vector.load %arg14[%c1_633, %c1_634, %c0_635] : memref<6x6x32xbf16, #tpu.memory_space<vmem>>, vector<1x4x32xbf16>
    %428 = vector.shape_cast %427 : vector<1x4x32xbf16> to vector<4x32xbf16>
    %429 = vector.shape_cast %426 : vector<4x32xbf16> to vector<1x4x32xbf16>
    tpu.vector_store %arg14[%c1_633, %c1_634, %c0_635], %429 {strides = array<i32>} : memref<6x6x32xbf16, #tpu.memory_space<vmem>>, vector<1x4x32xbf16>,
    %430 = vector.extract_strided_slice %425 {offsets = [4, 0], sizes = [4, 32], strides = [1, 1]} : vector<16x32xbf16> to vector<4x32xbf16>
    %c2_636 = arith.constant 2 : index
    %c1_637 = arith.constant 1 : index
    %c0_638 = arith.constant 0 : index
    %431 = vector.load %arg14[%c2_636, %c1_637, %c0_638] : memref<6x6x32xbf16, #tpu.memory_space<vmem>>, vector<1x4x32xbf16>
    %432 = vector.shape_cast %431 : vector<1x4x32xbf16> to vector<4x32xbf16>
    %433 = vector.shape_cast %430 : vector<4x32xbf16> to vector<1x4x32xbf16>
    tpu.vector_store %arg14[%c2_636, %c1_637, %c0_638], %433 {strides = array<i32>} : memref<6x6x32xbf16, #tpu.memory_space<vmem>>, vector<1x4x32xbf16>,
    %434 = vector.extract_strided_slice %425 {offsets = [8, 0], sizes = [4, 32], strides = [1, 1]} : vector<16x32xbf16> to vector<4x32xbf16>
    %c3_639 = arith.constant 3 : index
    %c1_640 = arith.constant 1 : index
    %c0_641 = arith.constant 0 : index
    %435 = vector.load %arg14[%c3_639, %c1_640, %c0_641] : memref<6x6x32xbf16, #tpu.memory_space<vmem>>, vector<1x4x32xbf16>
    %436 = vector.shape_cast %435 : vector<1x4x32xbf16> to vector<4x32xbf16>
    %437 = vector.shape_cast %434 : vector<4x32xbf16> to vector<1x4x32xbf16>
    tpu.vector_store %arg14[%c3_639, %c1_640, %c0_641], %437 {strides = array<i32>} : memref<6x6x32xbf16, #tpu.memory_space<vmem>>, vector<1x4x32xbf16>,
    %438 = vector.extract_strided_slice %425 {offsets = [12, 0], sizes = [4, 32], strides = [1, 1]} : vector<16x32xbf16> to vector<4x32xbf16>
    %c4_642 = arith.constant 4 : index
    %c1_643 = arith.constant 1 : index
    %c0_644 = arith.constant 0 : index
    %439 = vector.load %arg14[%c4_642, %c1_643, %c0_644] : memref<6x6x32xbf16, #tpu.memory_space<vmem>>, vector<1x4x32xbf16>
    %440 = vector.shape_cast %439 : vector<1x4x32xbf16> to vector<4x32xbf16>
    %441 = vector.shape_cast %438 : vector<4x32xbf16> to vector<1x4x32xbf16>
    tpu.vector_store %arg14[%c4_642, %c1_643, %c0_644], %441 {strides = array<i32>} : memref<6x6x32xbf16, #tpu.memory_space<vmem>>, vector<1x4x32xbf16>,
    %c0_645 = arith.constant 0 : index
    %c0_646 = arith.constant 0 : index
    %c0_647 = arith.constant 0 : index
    %442 = vector.load %arg14[%c0_645, %c0_646, %c0_647] : memref<6x6x32xbf16, #tpu.memory_space<vmem>>, vector<1x4x32xbf16>
    %443 = vector.shape_cast %442 : vector<1x4x32xbf16> to vector<4x32xbf16>
    %c0_648 = arith.constant 0 : index
    %c0_649 = arith.constant 0 : index
    %444 = vector.load %arg15[%c0_648, %c0_649] : memref<16x432xbf16, #tpu.memory_space<vmem>>, vector<4x32xbf16>
    tpu.vector_store %arg15[%c0_648, %c0_649], %443 {strides = array<i32>} : memref<16x432xbf16, #tpu.memory_space<vmem>>, vector<4x32xbf16>,
    %c1_650 = arith.constant 1 : index
    %c0_651 = arith.constant 0 : index
    %c0_652 = arith.constant 0 : index
    %445 = vector.load %arg14[%c1_650, %c0_651, %c0_652] : memref<6x6x32xbf16, #tpu.memory_space<vmem>>, vector<1x4x32xbf16>
    %446 = vector.shape_cast %445 : vector<1x4x32xbf16> to vector<4x32xbf16>
    %c4_653 = arith.constant 4 : index
    %c0_654 = arith.constant 0 : index
    %447 = vector.load %arg15[%c4_653, %c0_654] : memref<16x432xbf16, #tpu.memory_space<vmem>>, vector<4x32xbf16>
    tpu.vector_store %arg15[%c4_653, %c0_654], %446 {strides = array<i32>} : memref<16x432xbf16, #tpu.memory_space<vmem>>, vector<4x32xbf16>,
    %c2_655 = arith.constant 2 : index
    %c0_656 = arith.constant 0 : index
    %c0_657 = arith.constant 0 : index
    %448 = vector.load %arg14[%c2_655, %c0_656, %c0_657] : memref<6x6x32xbf16, #tpu.memory_space<vmem>>, vector<1x4x32xbf16>
    %449 = vector.shape_cast %448 : vector<1x4x32xbf16> to vector<4x32xbf16>
    %c8_658 = arith.constant 8 : index
    %c0_659 = arith.constant 0 : index
    %450 = vector.load %arg15[%c8_658, %c0_659] : memref<16x432xbf16, #tpu.memory_space<vmem>>, vector<4x32xbf16>
    tpu.vector_store %arg15[%c8_658, %c0_659], %449 {strides = array<i32>} : memref<16x432xbf16, #tpu.memory_space<vmem>>, vector<4x32xbf16>,
    %c3_660 = arith.constant 3 : index
    %c0_661 = arith.constant 0 : index
    %c0_662 = arith.constant 0 : index
    %451 = vector.load %arg14[%c3_660, %c0_661, %c0_662] : memref<6x6x32xbf16, #tpu.memory_space<vmem>>, vector<1x4x32xbf16>
    %452 = vector.shape_cast %451 : vector<1x4x32xbf16> to vector<4x32xbf16>
    %c12_663 = arith.constant 12 : index
    %c0_664 = arith.constant 0 : index
    %453 = vector.load %arg15[%c12_663, %c0_664] : memref<16x432xbf16, #tpu.memory_space<vmem>>, vector<4x32xbf16>
    tpu.vector_store %arg15[%c12_663, %c0_664], %452 {strides = array<i32>} : memref<16x432xbf16, #tpu.memory_space<vmem>>, vector<4x32xbf16>,
    %c0_665 = arith.constant 0 : index
    %c1_666 = arith.constant 1 : index
    %c0_667 = arith.constant 0 : index
    %454 = vector.load %arg14[%c0_665, %c1_666, %c0_667] : memref<6x6x32xbf16, #tpu.memory_space<vmem>>, vector<1x4x32xbf16>
    %455 = vector.shape_cast %454 : vector<1x4x32xbf16> to vector<4x32xbf16>
    %c0_668 = arith.constant 0 : index
    %c32_669 = arith.constant 32 : index
    %456 = vector.load %arg15[%c0_668, %c32_669] : memref<16x432xbf16, #tpu.memory_space<vmem>>, vector<4x32xbf16>
    tpu.vector_store %arg15[%c0_668, %c32_669], %455 {strides = array<i32>} : memref<16x432xbf16, #tpu.memory_space<vmem>>, vector<4x32xbf16>,
    %c1_670 = arith.constant 1 : index
    %c1_671 = arith.constant 1 : index
    %c0_672 = arith.constant 0 : index
    %457 = vector.load %arg14[%c1_670, %c1_671, %c0_672] : memref<6x6x32xbf16, #tpu.memory_space<vmem>>, vector<1x4x32xbf16>
    %458 = vector.shape_cast %457 : vector<1x4x32xbf16> to vector<4x32xbf16>
    %c4_673 = arith.constant 4 : index
    %c32_674 = arith.constant 32 : index
    %459 = vector.load %arg15[%c4_673, %c32_674] : memref<16x432xbf16, #tpu.memory_space<vmem>>, vector<4x32xbf16>
    tpu.vector_store %arg15[%c4_673, %c32_674], %458 {strides = array<i32>} : memref<16x432xbf16, #tpu.memory_space<vmem>>, vector<4x32xbf16>,
    %c2_675 = arith.constant 2 : index
    %c1_676 = arith.constant 1 : index
    %c0_677 = arith.constant 0 : index
    %460 = vector.load %arg14[%c2_675, %c1_676, %c0_677] : memref<6x6x32xbf16, #tpu.memory_space<vmem>>, vector<1x4x32xbf16>
    %461 = vector.shape_cast %460 : vector<1x4x32xbf16> to vector<4x32xbf16>
    %c8_678 = arith.constant 8 : index
    %c32_679 = arith.constant 32 : index
    %462 = vector.load %arg15[%c8_678, %c32_679] : memref<16x432xbf16, #tpu.memory_space<vmem>>, vector<4x32xbf16>
    tpu.vector_store %arg15[%c8_678, %c32_679], %461 {strides = array<i32>} : memref<16x432xbf16, #tpu.memory_space<vmem>>, vector<4x32xbf16>,
    %c3_680 = arith.constant 3 : index
    %c1_681 = arith.constant 1 : index
    %c0_682 = arith.constant 0 : index
    %463 = vector.load %arg14[%c3_680, %c1_681, %c0_682] : memref<6x6x32xbf16, #tpu.memory_space<vmem>>, vector<1x4x32xbf16>
    %464 = vector.shape_cast %463 : vector<1x4x32xbf16> to vector<4x32xbf16>
    %c12_683 = arith.constant 12 : index
    %c32_684 = arith.constant 32 : index
    %465 = vector.load %arg15[%c12_683, %c32_684] : memref<16x432xbf16, #tpu.memory_space<vmem>>, vector<4x32xbf16>
    tpu.vector_store %arg15[%c12_683, %c32_684], %464 {strides = array<i32>} : memref<16x432xbf16, #tpu.memory_space<vmem>>, vector<4x32xbf16>,
    %c0_685 = arith.constant 0 : index
    %c2_686 = arith.constant 2 : index
    %c0_687 = arith.constant 0 : index
    %466 = vector.load %arg14[%c0_685, %c2_686, %c0_687] : memref<6x6x32xbf16, #tpu.memory_space<vmem>>, vector<1x4x32xbf16>
    %467 = vector.shape_cast %466 : vector<1x4x32xbf16> to vector<4x32xbf16>
    %c0_688 = arith.constant 0 : index
    %c64_689 = arith.constant 64 : index
    %468 = vector.load %arg15[%c0_688, %c64_689] : memref<16x432xbf16, #tpu.memory_space<vmem>>, vector<4x32xbf16>
    tpu.vector_store %arg15[%c0_688, %c64_689], %467 {strides = array<i32>} : memref<16x432xbf16, #tpu.memory_space<vmem>>, vector<4x32xbf16>,
    %c1_690 = arith.constant 1 : index
    %c2_691 = arith.constant 2 : index
    %c0_692 = arith.constant 0 : index
    %469 = vector.load %arg14[%c1_690, %c2_691, %c0_692] : memref<6x6x32xbf16, #tpu.memory_space<vmem>>, vector<1x4x32xbf16>
    %470 = vector.shape_cast %469 : vector<1x4x32xbf16> to vector<4x32xbf16>
    %c4_693 = arith.constant 4 : index
    %c64_694 = arith.constant 64 : index
    %471 = vector.load %arg15[%c4_693, %c64_694] : memref<16x432xbf16, #tpu.memory_space<vmem>>, vector<4x32xbf16>
    tpu.vector_store %arg15[%c4_693, %c64_694], %470 {strides = array<i32>} : memref<16x432xbf16, #tpu.memory_space<vmem>>, vector<4x32xbf16>,
    %c2_695 = arith.constant 2 : index
    %c2_696 = arith.constant 2 : index
    %c0_697 = arith.constant 0 : index
    %472 = vector.load %arg14[%c2_695, %c2_696, %c0_697] : memref<6x6x32xbf16, #tpu.memory_space<vmem>>, vector<1x4x32xbf16>
    %473 = vector.shape_cast %472 : vector<1x4x32xbf16> to vector<4x32xbf16>
    %c8_698 = arith.constant 8 : index
    %c64_699 = arith.constant 64 : index
    %474 = vector.load %arg15[%c8_698, %c64_699] : memref<16x432xbf16, #tpu.memory_space<vmem>>, vector<4x32xbf16>
    tpu.vector_store %arg15[%c8_698, %c64_699], %473 {strides = array<i32>} : memref<16x432xbf16, #tpu.memory_space<vmem>>, vector<4x32xbf16>,
    %c3_700 = arith.constant 3 : index
    %c2_701 = arith.constant 2 : index
    %c0_702 = arith.constant 0 : index
    %475 = vector.load %arg14[%c3_700, %c2_701, %c0_702] : memref<6x6x32xbf16, #tpu.memory_space<vmem>>, vector<1x4x32xbf16>
    %476 = vector.shape_cast %475 : vector<1x4x32xbf16> to vector<4x32xbf16>
    %c12_703 = arith.constant 12 : index
    %c64_704 = arith.constant 64 : index
    %477 = vector.load %arg15[%c12_703, %c64_704] : memref<16x432xbf16, #tpu.memory_space<vmem>>, vector<4x32xbf16>
    tpu.vector_store %arg15[%c12_703, %c64_704], %476 {strides = array<i32>} : memref<16x432xbf16, #tpu.memory_space<vmem>>, vector<4x32xbf16>,
    %c1_705 = arith.constant 1 : index
    %c0_706 = arith.constant 0 : index
    %c0_707 = arith.constant 0 : index
    %478 = vector.load %arg14[%c1_705, %c0_706, %c0_707] : memref<6x6x32xbf16, #tpu.memory_space<vmem>>, vector<1x4x32xbf16>
    %479 = vector.shape_cast %478 : vector<1x4x32xbf16> to vector<4x32xbf16>
    %c0_708 = arith.constant 0 : index
    %c96_709 = arith.constant 96 : index
    %480 = vector.load %arg15[%c0_708, %c96_709] : memref<16x432xbf16, #tpu.memory_space<vmem>>, vector<4x32xbf16>
    tpu.vector_store %arg15[%c0_708, %c96_709], %479 {strides = array<i32>} : memref<16x432xbf16, #tpu.memory_space<vmem>>, vector<4x32xbf16>,
    %c2_710 = arith.constant 2 : index
    %c0_711 = arith.constant 0 : index
    %c0_712 = arith.constant 0 : index
    %481 = vector.load %arg14[%c2_710, %c0_711, %c0_712] : memref<6x6x32xbf16, #tpu.memory_space<vmem>>, vector<1x4x32xbf16>
    %482 = vector.shape_cast %481 : vector<1x4x32xbf16> to vector<4x32xbf16>
    %c4_713 = arith.constant 4 : index
    %c96_714 = arith.constant 96 : index
    %483 = vector.load %arg15[%c4_713, %c96_714] : memref<16x432xbf16, #tpu.memory_space<vmem>>, vector<4x32xbf16>
    tpu.vector_store %arg15[%c4_713, %c96_714], %482 {strides = array<i32>} : memref<16x432xbf16, #tpu.memory_space<vmem>>, vector<4x32xbf16>,
    %c3_715 = arith.constant 3 : index
    %c0_716 = arith.constant 0 : index
    %c0_717 = arith.constant 0 : index
    %484 = vector.load %arg14[%c3_715, %c0_716, %c0_717] : memref<6x6x32xbf16, #tpu.memory_space<vmem>>, vector<1x4x32xbf16>
    %485 = vector.shape_cast %484 : vector<1x4x32xbf16> to vector<4x32xbf16>
    %c8_718 = arith.constant 8 : index
    %c96_719 = arith.constant 96 : index
    %486 = vector.load %arg15[%c8_718, %c96_719] : memref<16x432xbf16, #tpu.memory_space<vmem>>, vector<4x32xbf16>
    tpu.vector_store %arg15[%c8_718, %c96_719], %485 {strides = array<i32>} : memref<16x432xbf16, #tpu.memory_space<vmem>>, vector<4x32xbf16>,
    %c4_720 = arith.constant 4 : index
    %c0_721 = arith.constant 0 : index
    %c0_722 = arith.constant 0 : index
    %487 = vector.load %arg14[%c4_720, %c0_721, %c0_722] : memref<6x6x32xbf16, #tpu.memory_space<vmem>>, vector<1x4x32xbf16>
    %488 = vector.shape_cast %487 : vector<1x4x32xbf16> to vector<4x32xbf16>
    %c12_723 = arith.constant 12 : index
    %c96_724 = arith.constant 96 : index
    %489 = vector.load %arg15[%c12_723, %c96_724] : memref<16x432xbf16, #tpu.memory_space<vmem>>, vector<4x32xbf16>
    tpu.vector_store %arg15[%c12_723, %c96_724], %488 {strides = array<i32>} : memref<16x432xbf16, #tpu.memory_space<vmem>>, vector<4x32xbf16>,
    %c1_725 = arith.constant 1 : index
    %c1_726 = arith.constant 1 : index
    %c0_727 = arith.constant 0 : index
    %490 = vector.load %arg14[%c1_725, %c1_726, %c0_727] : memref<6x6x32xbf16, #tpu.memory_space<vmem>>, vector<1x4x32xbf16>
    %491 = vector.shape_cast %490 : vector<1x4x32xbf16> to vector<4x32xbf16>
    %c0_728 = arith.constant 0 : index
    %c128_729 = arith.constant 128 : index
    %492 = vector.load %arg15[%c0_728, %c128_729] : memref<16x432xbf16, #tpu.memory_space<vmem>>, vector<4x32xbf16>
    tpu.vector_store %arg15[%c0_728, %c128_729], %491 {strides = array<i32>} : memref<16x432xbf16, #tpu.memory_space<vmem>>, vector<4x32xbf16>,
    %c2_730 = arith.constant 2 : index
    %c1_731 = arith.constant 1 : index
    %c0_732 = arith.constant 0 : index
    %493 = vector.load %arg14[%c2_730, %c1_731, %c0_732] : memref<6x6x32xbf16, #tpu.memory_space<vmem>>, vector<1x4x32xbf16>
    %494 = vector.shape_cast %493 : vector<1x4x32xbf16> to vector<4x32xbf16>
    %c4_733 = arith.constant 4 : index
    %c128_734 = arith.constant 128 : index
    %495 = vector.load %arg15[%c4_733, %c128_734] : memref<16x432xbf16, #tpu.memory_space<vmem>>, vector<4x32xbf16>
    tpu.vector_store %arg15[%c4_733, %c128_734], %494 {strides = array<i32>} : memref<16x432xbf16, #tpu.memory_space<vmem>>, vector<4x32xbf16>,
    %c3_735 = arith.constant 3 : index
    %c1_736 = arith.constant 1 : index
    %c0_737 = arith.constant 0 : index
    %496 = vector.load %arg14[%c3_735, %c1_736, %c0_737] : memref<6x6x32xbf16, #tpu.memory_space<vmem>>, vector<1x4x32xbf16>
    %497 = vector.shape_cast %496 : vector<1x4x32xbf16> to vector<4x32xbf16>
    %c8_738 = arith.constant 8 : index
    %c128_739 = arith.constant 128 : index
    %498 = vector.load %arg15[%c8_738, %c128_739] : memref<16x432xbf16, #tpu.memory_space<vmem>>, vector<4x32xbf16>
    tpu.vector_store %arg15[%c8_738, %c128_739], %497 {strides = array<i32>} : memref<16x432xbf16, #tpu.memory_space<vmem>>, vector<4x32xbf16>,
    %c4_740 = arith.constant 4 : index
    %c1_741 = arith.constant 1 : index
    %c0_742 = arith.constant 0 : index
    %499 = vector.load %arg14[%c4_740, %c1_741, %c0_742] : memref<6x6x32xbf16, #tpu.memory_space<vmem>>, vector<1x4x32xbf16>
    %500 = vector.shape_cast %499 : vector<1x4x32xbf16> to vector<4x32xbf16>
    %c12_743 = arith.constant 12 : index
    %c128_744 = arith.constant 128 : index
    %501 = vector.load %arg15[%c12_743, %c128_744] : memref<16x432xbf16, #tpu.memory_space<vmem>>, vector<4x32xbf16>
    tpu.vector_store %arg15[%c12_743, %c128_744], %500 {strides = array<i32>} : memref<16x432xbf16, #tpu.memory_space<vmem>>, vector<4x32xbf16>,
    %c1_745 = arith.constant 1 : index
    %c2_746 = arith.constant 2 : index
    %c0_747 = arith.constant 0 : index
    %502 = vector.load %arg14[%c1_745, %c2_746, %c0_747] : memref<6x6x32xbf16, #tpu.memory_space<vmem>>, vector<1x4x32xbf16>
    %503 = vector.shape_cast %502 : vector<1x4x32xbf16> to vector<4x32xbf16>
    %c0_748 = arith.constant 0 : index
    %c160_749 = arith.constant 160 : index
    %504 = vector.load %arg15[%c0_748, %c160_749] : memref<16x432xbf16, #tpu.memory_space<vmem>>, vector<4x32xbf16>
    tpu.vector_store %arg15[%c0_748, %c160_749], %503 {strides = array<i32>} : memref<16x432xbf16, #tpu.memory_space<vmem>>, vector<4x32xbf16>,
    %c2_750 = arith.constant 2 : index
    %c2_751 = arith.constant 2 : index
    %c0_752 = arith.constant 0 : index
    %505 = vector.load %arg14[%c2_750, %c2_751, %c0_752] : memref<6x6x32xbf16, #tpu.memory_space<vmem>>, vector<1x4x32xbf16>
    %506 = vector.shape_cast %505 : vector<1x4x32xbf16> to vector<4x32xbf16>
    %c4_753 = arith.constant 4 : index
    %c160_754 = arith.constant 160 : index
    %507 = vector.load %arg15[%c4_753, %c160_754] : memref<16x432xbf16, #tpu.memory_space<vmem>>, vector<4x32xbf16>
    tpu.vector_store %arg15[%c4_753, %c160_754], %506 {strides = array<i32>} : memref<16x432xbf16, #tpu.memory_space<vmem>>, vector<4x32xbf16>,
    %c3_755 = arith.constant 3 : index
    %c2_756 = arith.constant 2 : index
    %c0_757 = arith.constant 0 : index
    %508 = vector.load %arg14[%c3_755, %c2_756, %c0_757] : memref<6x6x32xbf16, #tpu.memory_space<vmem>>, vector<1x4x32xbf16>
    %509 = vector.shape_cast %508 : vector<1x4x32xbf16> to vector<4x32xbf16>
    %c8_758 = arith.constant 8 : index
    %c160_759 = arith.constant 160 : index
    %510 = vector.load %arg15[%c8_758, %c160_759] : memref<16x432xbf16, #tpu.memory_space<vmem>>, vector<4x32xbf16>
    tpu.vector_store %arg15[%c8_758, %c160_759], %509 {strides = array<i32>} : memref<16x432xbf16, #tpu.memory_space<vmem>>, vector<4x32xbf16>,
    %c4_760 = arith.constant 4 : index
    %c2_761 = arith.constant 2 : index
    %c0_762 = arith.constant 0 : index
    %511 = vector.load %arg14[%c4_760, %c2_761, %c0_762] : memref<6x6x32xbf16, #tpu.memory_space<vmem>>, vector<1x4x32xbf16>
    %512 = vector.shape_cast %511 : vector<1x4x32xbf16> to vector<4x32xbf16>
    %c12_763 = arith.constant 12 : index
    %c160_764 = arith.constant 160 : index
    %513 = vector.load %arg15[%c12_763, %c160_764] : memref<16x432xbf16, #tpu.memory_space<vmem>>, vector<4x32xbf16>
    tpu.vector_store %arg15[%c12_763, %c160_764], %512 {strides = array<i32>} : memref<16x432xbf16, #tpu.memory_space<vmem>>, vector<4x32xbf16>,
    %c2_765 = arith.constant 2 : index
    %c0_766 = arith.constant 0 : index
    %c0_767 = arith.constant 0 : index
    %514 = vector.load %arg14[%c2_765, %c0_766, %c0_767] : memref<6x6x32xbf16, #tpu.memory_space<vmem>>, vector<1x4x32xbf16>
    %515 = vector.shape_cast %514 : vector<1x4x32xbf16> to vector<4x32xbf16>
    %c0_768 = arith.constant 0 : index
    %c192_769 = arith.constant 192 : index
    %516 = vector.load %arg15[%c0_768, %c192_769] : memref<16x432xbf16, #tpu.memory_space<vmem>>, vector<4x32xbf16>
    tpu.vector_store %arg15[%c0_768, %c192_769], %515 {strides = array<i32>} : memref<16x432xbf16, #tpu.memory_space<vmem>>, vector<4x32xbf16>,
    %c3_770 = arith.constant 3 : index
    %c0_771 = arith.constant 0 : index
    %c0_772 = arith.constant 0 : index
    %517 = vector.load %arg14[%c3_770, %c0_771, %c0_772] : memref<6x6x32xbf16, #tpu.memory_space<vmem>>, vector<1x4x32xbf16>
    %518 = vector.shape_cast %517 : vector<1x4x32xbf16> to vector<4x32xbf16>
    %c4_773 = arith.constant 4 : index
    %c192_774 = arith.constant 192 : index
    %519 = vector.load %arg15[%c4_773, %c192_774] : memref<16x432xbf16, #tpu.memory_space<vmem>>, vector<4x32xbf16>
    tpu.vector_store %arg15[%c4_773, %c192_774], %518 {strides = array<i32>} : memref<16x432xbf16, #tpu.memory_space<vmem>>, vector<4x32xbf16>,
    %c4_775 = arith.constant 4 : index
    %c0_776 = arith.constant 0 : index
    %c0_777 = arith.constant 0 : index
    %520 = vector.load %arg14[%c4_775, %c0_776, %c0_777] : memref<6x6x32xbf16, #tpu.memory_space<vmem>>, vector<1x4x32xbf16>
    %521 = vector.shape_cast %520 : vector<1x4x32xbf16> to vector<4x32xbf16>
    %c8_778 = arith.constant 8 : index
    %c192_779 = arith.constant 192 : index
    %522 = vector.load %arg15[%c8_778, %c192_779] : memref<16x432xbf16, #tpu.memory_space<vmem>>, vector<4x32xbf16>
    tpu.vector_store %arg15[%c8_778, %c192_779], %521 {strides = array<i32>} : memref<16x432xbf16, #tpu.memory_space<vmem>>, vector<4x32xbf16>,
    %c5_780 = arith.constant 5 : index
    %c0_781 = arith.constant 0 : index
    %c0_782 = arith.constant 0 : index
    %523 = vector.load %arg14[%c5_780, %c0_781, %c0_782] : memref<6x6x32xbf16, #tpu.memory_space<vmem>>, vector<1x4x32xbf16>
    %524 = vector.shape_cast %523 : vector<1x4x32xbf16> to vector<4x32xbf16>
    %c12_783 = arith.constant 12 : index
    %c192_784 = arith.constant 192 : index
    %525 = vector.load %arg15[%c12_783, %c192_784] : memref<16x432xbf16, #tpu.memory_space<vmem>>, vector<4x32xbf16>
    tpu.vector_store %arg15[%c12_783, %c192_784], %524 {strides = array<i32>} : memref<16x432xbf16, #tpu.memory_space<vmem>>, vector<4x32xbf16>,
    %c2_785 = arith.constant 2 : index
    %c1_786 = arith.constant 1 : index
    %c0_787 = arith.constant 0 : index
    %526 = vector.load %arg14[%c2_785, %c1_786, %c0_787] : memref<6x6x32xbf16, #tpu.memory_space<vmem>>, vector<1x4x32xbf16>
    %527 = vector.shape_cast %526 : vector<1x4x32xbf16> to vector<4x32xbf16>
    %c0_788 = arith.constant 0 : index
    %c224_789 = arith.constant 224 : index
    %528 = vector.load %arg15[%c0_788, %c224_789] : memref<16x432xbf16, #tpu.memory_space<vmem>>, vector<4x32xbf16>
    tpu.vector_store %arg15[%c0_788, %c224_789], %527 {strides = array<i32>} : memref<16x432xbf16, #tpu.memory_space<vmem>>, vector<4x32xbf16>,
    %c3_790 = arith.constant 3 : index
    %c1_791 = arith.constant 1 : index
    %c0_792 = arith.constant 0 : index
    %529 = vector.load %arg14[%c3_790, %c1_791, %c0_792] : memref<6x6x32xbf16, #tpu.memory_space<vmem>>, vector<1x4x32xbf16>
    %530 = vector.shape_cast %529 : vector<1x4x32xbf16> to vector<4x32xbf16>
    %c4_793 = arith.constant 4 : index
    %c224_794 = arith.constant 224 : index
    %531 = vector.load %arg15[%c4_793, %c224_794] : memref<16x432xbf16, #tpu.memory_space<vmem>>, vector<4x32xbf16>
    tpu.vector_store %arg15[%c4_793, %c224_794], %530 {strides = array<i32>} : memref<16x432xbf16, #tpu.memory_space<vmem>>, vector<4x32xbf16>,
    %c4_795 = arith.constant 4 : index
    %c1_796 = arith.constant 1 : index
    %c0_797 = arith.constant 0 : index
    %532 = vector.load %arg14[%c4_795, %c1_796, %c0_797] : memref<6x6x32xbf16, #tpu.memory_space<vmem>>, vector<1x4x32xbf16>
    %533 = vector.shape_cast %532 : vector<1x4x32xbf16> to vector<4x32xbf16>
    %c8_798 = arith.constant 8 : index
    %c224_799 = arith.constant 224 : index
    %534 = vector.load %arg15[%c8_798, %c224_799] : memref<16x432xbf16, #tpu.memory_space<vmem>>, vector<4x32xbf16>
    tpu.vector_store %arg15[%c8_798, %c224_799], %533 {strides = array<i32>} : memref<16x432xbf16, #tpu.memory_space<vmem>>, vector<4x32xbf16>,
    %c5_800 = arith.constant 5 : index
    %c1_801 = arith.constant 1 : index
    %c0_802 = arith.constant 0 : index
    %535 = vector.load %arg14[%c5_800, %c1_801, %c0_802] : memref<6x6x32xbf16, #tpu.memory_space<vmem>>, vector<1x4x32xbf16>
    %536 = vector.shape_cast %535 : vector<1x4x32xbf16> to vector<4x32xbf16>
    %c12_803 = arith.constant 12 : index
    %c224_804 = arith.constant 224 : index
    %537 = vector.load %arg15[%c12_803, %c224_804] : memref<16x432xbf16, #tpu.memory_space<vmem>>, vector<4x32xbf16>
    tpu.vector_store %arg15[%c12_803, %c224_804], %536 {strides = array<i32>} : memref<16x432xbf16, #tpu.memory_space<vmem>>, vector<4x32xbf16>,
    %c2_805 = arith.constant 2 : index
    %c2_806 = arith.constant 2 : index
    %c0_807 = arith.constant 0 : index
    %538 = vector.load %arg14[%c2_805, %c2_806, %c0_807] : memref<6x6x32xbf16, #tpu.memory_space<vmem>>, vector<1x4x32xbf16>
    %539 = vector.shape_cast %538 : vector<1x4x32xbf16> to vector<4x32xbf16>
    %c0_808 = arith.constant 0 : index
    %c256_809 = arith.constant 256 : index
    %540 = vector.load %arg15[%c0_808, %c256_809] : memref<16x432xbf16, #tpu.memory_space<vmem>>, vector<4x32xbf16>
    tpu.vector_store %arg15[%c0_808, %c256_809], %539 {strides = array<i32>} : memref<16x432xbf16, #tpu.memory_space<vmem>>, vector<4x32xbf16>,
    %c3_810 = arith.constant 3 : index
    %c2_811 = arith.constant 2 : index
    %c0_812 = arith.constant 0 : index
    %541 = vector.load %arg14[%c3_810, %c2_811, %c0_812] : memref<6x6x32xbf16, #tpu.memory_space<vmem>>, vector<1x4x32xbf16>
    %542 = vector.shape_cast %541 : vector<1x4x32xbf16> to vector<4x32xbf16>
    %c4_813 = arith.constant 4 : index
    %c256_814 = arith.constant 256 : index
    %543 = vector.load %arg15[%c4_813, %c256_814] : memref<16x432xbf16, #tpu.memory_space<vmem>>, vector<4x32xbf16>
    tpu.vector_store %arg15[%c4_813, %c256_814], %542 {strides = array<i32>} : memref<16x432xbf16, #tpu.memory_space<vmem>>, vector<4x32xbf16>,
    %c4_815 = arith.constant 4 : index
    %c2_816 = arith.constant 2 : index
    %c0_817 = arith.constant 0 : index
    %544 = vector.load %arg14[%c4_815, %c2_816, %c0_817] : memref<6x6x32xbf16, #tpu.memory_space<vmem>>, vector<1x4x32xbf16>
    %545 = vector.shape_cast %544 : vector<1x4x32xbf16> to vector<4x32xbf16>
    %c8_818 = arith.constant 8 : index
    %c256_819 = arith.constant 256 : index
    %546 = vector.load %arg15[%c8_818, %c256_819] : memref<16x432xbf16, #tpu.memory_space<vmem>>, vector<4x32xbf16>
    tpu.vector_store %arg15[%c8_818, %c256_819], %545 {strides = array<i32>} : memref<16x432xbf16, #tpu.memory_space<vmem>>, vector<4x32xbf16>,
    %c5_820 = arith.constant 5 : index
    %c2_821 = arith.constant 2 : index
    %c0_822 = arith.constant 0 : index
    %547 = vector.load %arg14[%c5_820, %c2_821, %c0_822] : memref<6x6x32xbf16, #tpu.memory_space<vmem>>, vector<1x4x32xbf16>
    %548 = vector.shape_cast %547 : vector<1x4x32xbf16> to vector<4x32xbf16>
    %c12_823 = arith.constant 12 : index
    %c256_824 = arith.constant 256 : index
    %549 = vector.load %arg15[%c12_823, %c256_824] : memref<16x432xbf16, #tpu.memory_space<vmem>>, vector<4x32xbf16>
    tpu.vector_store %arg15[%c12_823, %c256_824], %548 {strides = array<i32>} : memref<16x432xbf16, #tpu.memory_space<vmem>>, vector<4x32xbf16>,
    %c0_825 = arith.constant 0 : index
    %c0_826 = arith.constant 0 : index
    %550 = vector.load %arg15[%c0_825, %c0_826] : memref<16x432xbf16, #tpu.memory_space<vmem>>, vector<16x288xbf16>
    %c0_827 = arith.constant 0 : index
    %c0_828 = arith.constant 0 : index
    %551 = vector.load %arg8[%c0_827, %c0_828] : memref<288x16xbf16, #tpu.memory_space<vmem>>, vector<288x16xbf16>
    %cst_829 = arith.constant dense<0.000000e+00> : vector<16x16xf32>
    %552 = tpu.matmul %550, %551, %cst_829 {dimension_numbers = #tpu.dot_dimension_numbers<[1], [0], [0], [1], [0, 0, 1, 1], [], []>} : vector<16x288xbf16>, vector<288x16xbf16>, vector<16x16xf32> -> vector<16x16xf32>
    %c0_830 = arith.constant 0 : index
    %c0_831 = arith.constant 0 : index
    %553 = vector.load %arg9[%c0_830, %c0_831] : memref<1x16xf32, #tpu.memory_space<vmem>>, vector<1x16xf32>
    %554 = vector.broadcast %553 : vector<1x16xf32> to vector<16x16xf32>
    %555 = arith.addf %552, %554 : vector<16x16xf32>
    %556 = arith.negf %555 : vector<16x16xf32>
    %557 = math.exp %556 : vector<16x16xf32>
    %cst_832 = arith.constant 1.000000e+00 : f32
    %558 = vector.broadcast %cst_832 : f32 to vector<16x16xf32>
    %559 = arith.addf %558, %557 : vector<16x16xf32>
    %560 = arith.divf %558, %559 : vector<16x16xf32>
    %c0_833 = arith.constant 0 : index
    %c0_834 = arith.constant 0 : index
    %c0_835 = arith.constant 0 : index
    %561 = vector.load %arg10[%c0_833, %c0_834, %c0_835] : memref<1x16x16xf32, #tpu.memory_space<vmem>>, vector<1x16x16xf32>
    %562 = vector.shape_cast %561 : vector<1x16x16xf32> to vector<16x16xf32>
    %563 = vector.shape_cast %560 : vector<16x16xf32> to vector<1x16x16xf32>
    tpu.vector_store %arg10[%c0_833, %c0_834, %c0_835], %563 {strides = array<i32>} : memref<1x16x16xf32, #tpu.memory_space<vmem>>, vector<1x16x16xf32>,
    return
  }
  func.func @transform_0(%arg0: i32) -> (i32, i32, i32) {
    %c0_i32 = arith.constant 0 : i32
    %c0_i32_0 = arith.constant 0 : i32
    %c0_i32_1 = arith.constant 0 : i32
    return %arg0, %c0_i32, %c0_i32_0 : i32, i32, i32
  }
  func.func @transform_1(%arg0: i32) -> (i32, i32) {
    %c0_i32 = arith.constant 0 : i32
    %c0_i32_0 = arith.constant 0 : i32
    %c0_i32_1 = arith.constant 0 : i32
    return %c0_i32, %c0_i32_0 : i32, i32
  }
  func.func @transform_2(%arg0: i32) -> (i32, i32) {
    %c0_i32 = arith.constant 0 : i32
    %c0_i32_0 = arith.constant 0 : i32
    %c0_i32_1 = arith.constant 0 : i32
    return %c0_i32, %c0_i32_0 : i32, i32
  }
  func.func @transform_3(%arg0: i32) -> (i32, i32) {
    %c0_i32 = arith.constant 0 : i32
    %c0_i32_0 = arith.constant 0 : i32
    %c0_i32_1 = arith.constant 0 : i32
    return %c0_i32, %c0_i32_0 : i32, i32
  }
  func.func @transform_4(%arg0: i32) -> (i32, i32) {
    %c0_i32 = arith.constant 0 : i32
    %c0_i32_0 = arith.constant 0 : i32
    %c0_i32_1 = arith.constant 0 : i32
    return %c0_i32, %c0_i32_0 : i32, i32
  }
  func.func @transform_5(%arg0: i32) -> (i32, i32) {
    %c0_i32 = arith.constant 0 : i32
    %c0_i32_0 = arith.constant 0 : i32
    %c0_i32_1 = arith.constant 0 : i32
    return %c0_i32, %c0_i32_0 : i32, i32
  }
  func.func @transform_6(%arg0: i32) -> (i32, i32) {
    %c0_i32 = arith.constant 0 : i32
    %c0_i32_0 = arith.constant 0 : i32
    %c0_i32_1 = arith.constant 0 : i32
    return %c0_i32, %c0_i32_0 : i32, i32
  }
  func.func @transform_7(%arg0: i32) -> (i32, i32) {
    %c0_i32 = arith.constant 0 : i32
    %c0_i32_0 = arith.constant 0 : i32
    %c0_i32_1 = arith.constant 0 : i32
    return %c0_i32, %c0_i32_0 : i32, i32
  }
  func.func @transform_8(%arg0: i32) -> (i32, i32) {
    %c0_i32 = arith.constant 0 : i32
    %c0_i32_0 = arith.constant 0 : i32
    %c0_i32_1 = arith.constant 0 : i32
    return %c0_i32, %c0_i32_0 : i32, i32
  }
  func.func @transform_9(%arg0: i32) -> (i32, i32, i32) {
    %c0_i32 = arith.constant 0 : i32
    %c0_i32_0 = arith.constant 0 : i32
    %c0_i32_1 = arith.constant 0 : i32
    return %arg0, %c0_i32, %c0_i32_0 : i32, i32, i32
  }
}

</mosaic_0001>

<llo_original>
// kernel: depth_model_forward.1
$region0: #{depth_model_forward.1}
  #allocation0 [shape = 'u32[]', space=smem, size = 0x4, offset = 0x4, fixed_abs, tag = 'smem constant byte address 0x4 - core index']
  #allocation1 [shape = 'u32[72,128]{1,0:T(1,128)}', space=vmem, size = 0x9000, scoped, tag = 'internal scratch']
  #allocation2 [shape = 'bf16[6,6,48]{2,1,0:T(8,128)(2,1)}', space=vmem, size = 0x3000, scoped, tag = 'scratch operand']
  #allocation3 [shape = 'bf16[6,6,32]{2,1,0:T(8,128)(2,1)}', space=vmem, size = 0x3000, scoped, tag = 'scratch operand']
  #allocation4 [shape = 'bf16[6,6,16]{2,1,0:T(8,128)(2,1)}', space=vmem, size = 0x3000, scoped, tag = 'scratch operand']
  #allocation5 [shape = 'bf16[6,6,32]{2,1,0:T(8,128)(2,1)}', space=vmem, size = 0x3000, scoped, tag = 'scratch operand']
  #allocation6 [shape = 'bf16[16,432]{1,0:T(8,128)(2,1)}', space=vmem, size = 0x4000, scoped, tag = 'scratch operand']
  %s0 = inlined_call_operand.vmem [shape: f32[2,16,48], index: 0, kind: input, shape index: {}]
  %s1 = inlined_call_operand.vmem [shape: bf16[432,32], index: 1, kind: input, shape index: {}]
  %s2 = inlined_call_operand.vmem [shape: f32[1,32], index: 2, kind: input, shape index: {}]
  %s3 = inlined_call_operand.vmem [shape: bf16[288,16], index: 3, kind: input, shape index: {}]
  %s4 = inlined_call_operand.vmem [shape: f32[1,16], index: 4, kind: input, shape index: {}]
  %s5 = inlined_call_operand.vmem [shape: bf16[144,32], index: 5, kind: input, shape index: {}]
  %s6 = inlined_call_operand.vmem [shape: f32[1,32], index: 6, kind: input, shape index: {}]
  %s7 = inlined_call_operand.vmem [shape: bf16[288,16], index: 7, kind: input, shape index: {}]
  %s8 = inlined_call_operand.vmem [shape: f32[1,16], index: 8, kind: input, shape index: {}]
  %s9 = inlined_call_operand.vmem [shape: f32[2,16,16], index: 9, kind: output, shape index: {}]
  %s10 = sld [smem:[#allocation0]]
  $region69: #{depth_model_forward.1} parent=0
    _
  %s12 = ssub.s32 1, %s10
  %s13 = scalar_select 0, %s12, %s10
  loop: start=0, step=1, limit=4
  $region2: #{depth_model_forward.1} parent=0 // loop_pre_header
    _
  $region3: #{depth_model_forward.1} parent=0 // loop_header
    %s15 = sphi 0, %s19
    %p16 = scmp.ge.s32.totalorder %s15, 4
    %s25 = sphi 0, %s27
    %s28 = sphi 0, %s25
    %s29 = sphi 0, %s28
    %s45 = sphi 0, %s29
    %s49 = sphi 0, %s49
    %s51 = sphi 0, %s49
    %s52 = sphi 0, %s51
    %s66 = sphi 0, %s52
    %s70 = sphi 0, %s70
    %s72 = sphi 0, %s70
    %s73 = sphi 0, %s72
    %s87 = sphi 0, %s73
    %s91 = sphi 0, %s91
    %s93 = sphi 0, %s91
    %s94 = sphi 0, %s93
    %s108 = sphi 0, %s94
    %s112 = sphi 0, %s112
    %s114 = sphi 0, %s112
    %s115 = sphi 0, %s114
    %s129 = sphi 0, %s115
    %s133 = sphi 0, %s133
    %s135 = sphi 0, %s133
    %s136 = sphi 0, %s135
    %s150 = sphi 0, %s136
    %s154 = sphi 0, %s154
    %s156 = sphi 0, %s154
    %s157 = sphi 0, %s156
    %s171 = sphi 0, %s157
    %s175 = sphi 0, %s175
    %s177 = sphi 0, %s175
    %s178 = sphi 0, %s177
    %s192 = sphi 0, %s178
    %s196 = sphi 0, %s196
    %s198 = sphi 0, %s196
    %s199 = sphi 0, %s198
    %s213 = sphi 0, %s199
    %s219 = sphi 0, %s221
    %s222 = sphi 0, %s219
    %s223 = sphi 0, %s222
    %s239 = sphi 0, %s223
  $region4: #{depth_model_forward.1} parent=0 // loop_header_branch
    %18 = sbr.rel (%p16) target = $region8
  $region5: #{depth_model_forward.1} parent=0 // loop_body
    %s20 = ssub.s32 %s15, 1
    %s21 = ssub.s32 %s15, 2
    %s22 = sadd.s32 %s15, 1
    %s23 = ssub.s32 %s15, %s22
    %p24 = scmp.eq.s32.totalorder %s23, 0
    %s26 = sadd.s32 %s25, 1
    %s27 = scalar_select %p24, %s25, %s26
    %p30 = pneg %p24
    %p31 = scmp.eq.s32.totalorder %s15, 1
    %p32 = por %p30, %p31
    %p33 = scmp.ne.s32.totalorder %s25, %s28
    %p34 = scmp.eq.s32.totalorder %s15, 0
    %p35 = por %p33, %p34
    %p36 = scmp.ne.s32.totalorder %s25, %s28
    %p37 = scmp.eq.s32.totalorder %s20, 1
    %p38 = por %p36, %p37
    %p39 = scmp.ne.s32.totalorder %s28, %s29
    %p40 = scmp.eq.s32.totalorder %s20, 0
    %p41 = por %p39, %p40
    %p42 = scmp.ne.s32.totalorder %s28, %s29
    %p43 = scmp.eq.s32.totalorder %s21, 1
    %p44 = por %p42, %p43
    %p46 = scmp.ne.s32.totalorder %s29, %s45
    %p47 = scmp.eq.s32.totalorder %s21, 0
    %p48 = por %p46, %p47
    %s50 = sadd.s32 %s49, 1
    %p53 = scmp.eq.s32.totalorder %s15, 1
    %p54 = scmp.ne.s32.totalorder %s49, %s51
    %p55 = scmp.eq.s32.totalorder %s15, 0
    %p56 = por %p54, %p55
    %p57 = scmp.ne.s32.totalorder %s49, %s51
    %p58 = scmp.eq.s32.totalorder %s20, 1
    %p59 = por %p57, %p58
    %p60 = scmp.ne.s32.totalorder %s51, %s52
    %p61 = scmp.eq.s32.totalorder %s20, 0
    %p62 = por %p60, %p61
    %p63 = scmp.ne.s32.totalorder %s51, %s52
    %p64 = scmp.eq.s32.totalorder %s21, 1
    %p65 = por %p63, %p64
    %p67 = scmp.ne.s32.totalorder %s52, %s66
    %p68 = scmp.eq.s32.totalorder %s21, 0
    %p69 = por %p67, %p68
    %s71 = sadd.s32 %s70, 1
    %p74 = scmp.eq.s32.totalorder %s15, 1
    %p75 = scmp.ne.s32.totalorder %s70, %s72
    %p76 = scmp.eq.s32.totalorder %s15, 0
    %p77 = por %p75, %p76
    %p78 = scmp.ne.s32.totalorder %s70, %s72
    %p79 = scmp.eq.s32.totalorder %s20, 1
    %p80 = por %p78, %p79
    %p81 = scmp.ne.s32.totalorder %s72, %s73
    %p82 = scmp.eq.s32.totalorder %s20, 0
    %p83 = por %p81, %p82
    %p84 = scmp.ne.s32.totalorder %s72, %s73
    %p85 = scmp.eq.s32.totalorder %s21, 1
    %p86 = por %p84, %p85
    %p88 = scmp.ne.s32.totalorder %s73, %s87
    %p89 = scmp.eq.s32.totalorder %s21, 0
    %p90 = por %p88, %p89
    %s92 = sadd.s32 %s91, 1
    %p95 = scmp.eq.s32.totalorder %s15, 1
    %p96 = scmp.ne.s32.totalorder %s91, %s93
    %p97 = scmp.eq.s32.totalorder %s15, 0
    %p98 = por %p96, %p97
    %p99 = scmp.ne.s32.totalorder %s91, %s93
    %p100 = scmp.eq.s32.totalorder %s20, 1
    %p101 = por %p99, %p100
    %p102 = scmp.ne.s32.totalorder %s93, %s94
    %p103 = scmp.eq.s32.totalorder %s20, 0
    %p104 = por %p102, %p103
    %p105 = scmp.ne.s32.totalorder %s93, %s94
    %p106 = scmp.eq.s32.totalorder %s21, 1
    %p107 = por %p105, %p106
    %p109 = scmp.ne.s32.totalorder %s94, %s108
    %p110 = scmp.eq.s32.totalorder %s21, 0
    %p111 = por %p109, %p110
    %s113 = sadd.s32 %s112, 1
    %p116 = scmp.eq.s32.totalorder %s15, 1
    %p117 = scmp.ne.s32.totalorder %s112, %s114
    %p118 = scmp.eq.s32.totalorder %s15, 0
    %p119 = por %p117, %p118
    %p120 = scmp.ne.s32.totalorder %s112, %s114
    %p121 = scmp.eq.s32.totalorder %s20, 1
    %p122 = por %p120, %p121
    %p123 = scmp.ne.s32.totalorder %s114, %s115
    %p124 = scmp.eq.s32.totalorder %s20, 0
    %p125 = por %p123, %p124
    %p126 = scmp.ne.s32.totalorder %s114, %s115
    %p127 = scmp.eq.s32.totalorder %s21, 1
    %p128 = por %p126, %p127
    %p130 = scmp.ne.s32.totalorder %s115, %s129
    %p131 = scmp.eq.s32.totalorder %s21, 0
    %p132 = por %p130, %p131
    %s134 = sadd.s32 %s133, 1
    %p137 = scmp.eq.s32.totalorder %s15, 1
    %p138 = scmp.ne.s32.totalorder %s133, %s135
    %p139 = scmp.eq.s32.totalorder %s15, 0
    %p140 = por %p138, %p139
    %p141 = scmp.ne.s32.totalorder %s133, %s135
    %p142 = scmp.eq.s32.totalorder %s20, 1
    %p143 = por %p141, %p142
    %p144 = scmp.ne.s32.totalorder %s135, %s136
    %p145 = scmp.eq.s32.totalorder %s20, 0
    %p146 = por %p144, %p145
    %p147 = scmp.ne.s32.totalorder %s135, %s136
    %p148 = scmp.eq.s32.totalorder %s21, 1
    %p149 = por %p147, %p148
    %p151 = scmp.ne.s32.totalorder %s136, %s150
    %p152 = scmp.eq.s32.totalorder %s21, 0
    %p153 = por %p151, %p152
    %s155 = sadd.s32 %s154, 1
    %p158 = scmp.eq.s32.totalorder %s15, 1
    %p159 = scmp.ne.s32.totalorder %s154, %s156
    %p160 = scmp.eq.s32.totalorder %s15, 0
    %p161 = por %p159, %p160
    %p162 = scmp.ne.s32.totalorder %s154, %s156
    %p163 = scmp.eq.s32.totalorder %s20, 1
    %p164 = por %p162, %p163
    %p165 = scmp.ne.s32.totalorder %s156, %s157
    %p166 = scmp.eq.s32.totalorder %s20, 0
    %p167 = por %p165, %p166
    %p168 = scmp.ne.s32.totalorder %s156, %s157
    %p169 = scmp.eq.s32.totalorder %s21, 1
    %p170 = por %p168, %p169
    %p172 = scmp.ne.s32.totalorder %s157, %s171
    %p173 = scmp.eq.s32.totalorder %s21, 0
    %p174 = por %p172, %p173
    %s176 = sadd.s32 %s175, 1
    %p179 = scmp.eq.s32.totalorder %s15, 1
    %p180 = scmp.ne.s32.totalorder %s175, %s177
    %p181 = scmp.eq.s32.totalorder %s15, 0
    %p182 = por %p180, %p181
    %p183 = scmp.ne.s32.totalorder %s175, %s177
    %p184 = scmp.eq.s32.totalorder %s20, 1
    %p185 = por %p183, %p184
    %p186 = scmp.ne.s32.totalorder %s177, %s178
    %p187 = scmp.eq.s32.totalorder %s20, 0
    %p188 = por %p186, %p187
    %p189 = scmp.ne.s32.totalorder %s177, %s178
    %p190 = scmp.eq.s32.totalorder %s21, 1
    %p191 = por %p189, %p190
    %p193 = scmp.ne.s32.totalorder %s178, %s192
    %p194 = scmp.eq.s32.totalorder %s21, 0
    %p195 = por %p193, %p194
    %s197 = sadd.s32 %s196, 1
    %p200 = scmp.eq.s32.totalorder %s15, 1
    %p201 = scmp.ne.s32.totalorder %s196, %s198
    %p202 = scmp.eq.s32.totalorder %s15, 0
    %p203 = por %p201, %p202
    %p204 = scmp.ne.s32.totalorder %s196, %s198
    %p205 = scmp.eq.s32.totalorder %s20, 1
    %p206 = por %p204, %p205
    %p207 = scmp.ne.s32.totalorder %s198, %s199
    %p208 = scmp.eq.s32.totalorder %s20, 0
    %p209 = por %p207, %p208
    %p210 = scmp.ne.s32.totalorder %s198, %s199
    %p211 = scmp.eq.s32.totalorder %s21, 1
    %p212 = por %p210, %p211
    %p214 = scmp.ne.s32.totalorder %s199, %s213
    %p215 = scmp.eq.s32.totalorder %s21, 0
    %p216 = por %p214, %p215
    %s217 = ssub.s32 %s15, %s22
    %p218 = scmp.eq.s32.totalorder %s217, 0
    %s220 = sadd.s32 %s219, 1
    %s221 = scalar_select %p218, %s219, %s220
    %p224 = pneg %p218
    %p225 = scmp.eq.s32.totalorder %s15, 1
    %p226 = por %p224, %p225
    %p227 = scmp.ne.s32.totalorder %s219, %s222
    %p228 = scmp.eq.s32.totalorder %s15, 0
    %p229 = por %p227, %p228
    %p230 = scmp.ne.s32.totalorder %s219, %s222
    %p231 = scmp.eq.s32.totalorder %s20, 1
    %p232 = por %p230, %p231
    %p233 = scmp.ne.s32.totalorder %s222, %s223
    %p234 = scmp.eq.s32.totalorder %s20, 0
    %p235 = por %p233, %p234
    %p236 = scmp.ne.s32.totalorder %s222, %s223
    %p237 = scmp.eq.s32.totalorder %s21, 1
    %p238 = por %p236, %p237
    %p240 = scmp.ne.s32.totalorder %s223, %s239
    %p241 = scmp.eq.s32.totalorder %s21, 0
    %p242 = por %p240, %p241
    %p243 = scmp.le.s32.totalorder 1, %s15
    %p244 = scmp.lt.s32.totalorder %s15, 3
    %p245 = pnand %p243, %p244
    %p246 = pneg %p245
    // Predicated region
    $region9: #{depth_model_forward.1} parent=5 // pred_check
      _
    $region10: #{depth_model_forward.1} parent=5 // pred_check_branch
      %248 = sbr.rel (%p245) target = $region12
    $region11: #{depth_model_forward.1} parent=5 // pred_region
      %s249 = ssub.s32 %s15, 1
      // Predicated region
      $region13: #{depth_model_forward.1} parent=11 // pred_check
        %p250 = pneg %p62
      $region14: #{depth_model_forward.1} parent=11 // pred_check_branch
        %252 = sbr.rel (%p250) target = $region16
      $region15: #{depth_model_forward.1} parent=11 // pred_region
        _
      $region16: #{depth_model_forward.1} parent=11 // pred_fallthru
        _
      // Predicated region
      $region17: #{depth_model_forward.1} parent=11 // pred_check
        %p253 = pneg %p83
      $region18: #{depth_model_forward.1} parent=11 // pred_check_branch
        %255 = sbr.rel (%p253) target = $region20
      $region19: #{depth_model_forward.1} parent=11 // pred_region
        _
      $region20: #{depth_model_forward.1} parent=11 // pred_fallthru
        _
      // Predicated region
      $region21: #{depth_model_forward.1} parent=11 // pred_check
        %p256 = pneg %p104
      $region22: #{depth_model_forward.1} parent=11 // pred_check_branch
        %258 = sbr.rel (%p256) target = $region24
      $region23: #{depth_model_forward.1} parent=11 // pred_region
        _
      $region24: #{depth_model_forward.1} parent=11 // pred_fallthru
        _
      // Predicated region
      $region25: #{depth_model_forward.1} parent=11 // pred_check
        %p259 = pneg %p125
      $region26: #{depth_model_forward.1} parent=11 // pred_check_branch
        %261 = sbr.rel (%p259) target = $region28
      $region27: #{depth_model_forward.1} parent=11 // pred_region
        _
      $region28: #{depth_model_forward.1} parent=11 // pred_fallthru
        _
      // Predicated region
      $region29: #{depth_model_forward.1} parent=11 // pred_check
        %p262 = pneg %p146
      $region30: #{depth_model_forward.1} parent=11 // pred_check_branch
        %264 = sbr.rel (%p262) target = $region32
      $region31: #{depth_model_forward.1} parent=11 // pred_region
        _
      $region32: #{depth_model_forward.1} parent=11 // pred_fallthru
        _
      // Predicated region
      $region33: #{depth_model_forward.1} parent=11 // pred_check
        %p265 = pneg %p167
      $region34: #{depth_model_forward.1} parent=11 // pred_check_branch
        %267 = sbr.rel (%p265) target = $region36
      $region35: #{depth_model_forward.1} parent=11 // pred_region
        _
      $region36: #{depth_model_forward.1} parent=11 // pred_fallthru
        _
      // Predicated region
      $region37: #{depth_model_forward.1} parent=11 // pred_check
        %p268 = pneg %p188
      $region38: #{depth_model_forward.1} parent=11 // pred_check_branch
        %270 = sbr.rel (%p268) target = $region40
      $region39: #{depth_model_forward.1} parent=11 // pred_region
        _
      $region40: #{depth_model_forward.1} parent=11 // pred_fallthru
        _
      // Predicated region
      $region41: #{depth_model_forward.1} parent=11 // pred_check
        %p271 = pneg %p209
      $region42: #{depth_model_forward.1} parent=11 // pred_check_branch
        %273 = sbr.rel (%p271) target = $region44
      $region43: #{depth_model_forward.1} parent=11 // pred_region
        _
      $region44: #{depth_model_forward.1} parent=11 // pred_fallthru
        _
    $region12: #{depth_model_forward.1} parent=5 // pred_fallthru
      _
    %p274 = scmp.lt.s32.totalorder %s15, 2
    // Predicated region
    $region45: #{depth_model_forward.1} parent=5 // pred_check
      %p275 = pneg %p274
    $region46: #{depth_model_forward.1} parent=5 // pred_check_branch
      %277 = sbr.rel (%p275) target = $region48
    $region47: #{depth_model_forward.1} parent=5 // pred_region
      // Predicated region
      $region49: #{depth_model_forward.1} parent=47 // pred_check
        %p278 = pneg %p35
      $region50: #{depth_model_forward.1} parent=47 // pred_check_branch
        %280 = sbr.rel (%p278) target = $region52
      $region51: #{depth_model_forward.1} parent=47 // pred_region
        %p281 = scmp.lt.s32.totalorder %s15, 1
        %s282 = scalar_select %p281, %s15, 1
        %s283 = smul.addr %s282, 2
        %s284 = smul.addr %s283, 8
        %s285 = scalar_lea.vmem %s0, %s284
      $region52: #{depth_model_forward.1} parent=47 // pred_fallthru
        _
    $region48: #{depth_model_forward.1} parent=5 // pred_fallthru
      _
    %p286 = scmp.le.s32.totalorder 1, %s15
    %p287 = scmp.lt.s32.totalorder %s15, 3
    %p288 = pnand %p286, %p287
    %p289 = pneg %p288
    // Predicated region
    $region53: #{depth_model_forward.1} parent=5 // pred_check
      _
    $region54: #{depth_model_forward.1} parent=5 // pred_check_branch
      %291 = sbr.rel (%p288) target = $region56
    $region55: #{depth_model_forward.1} parent=5 // pred_region
      %s292 = ssub.s32 %s15, 1
      %p293 = scmp.lt.s32.totalorder %s20, 1
      %s294 = scalar_select %p293, %s20, 1
      %s295 = smul.addr %s294, 2
      %s296 = smul.addr %s295, 8
      %s297 = scalar_lea.vmem %s0, %s296
      %p298 = pneg %p41
      %p299 = pneg %p38
      %p300 = pneg %p62
      %p301 = pneg %p59
      %p302 = pneg %p83
      %p303 = pneg %p80
      %p304 = pneg %p104
      %p305 = pneg %p101
      %p306 = pneg %p125
      %p307 = pneg %p122
      %p308 = pneg %p146
      %p309 = pneg %p143
      %p310 = pneg %p167
      %p311 = pneg %p164
      %p312 = pneg %p188
      %p313 = pneg %p185
      %p314 = pneg %p209
      %p315 = pneg %p206
      %p316 = pneg %p235
      %p317 = pneg %p232
      %p318 = scmp.lt.s32.totalorder %s20, 1
      %s319 = scalar_select %p318, %s20, 1
      %s320 = smul.addr %s319, 2
      %s321 = smul.addr %s320, 8
      %s322 = scalar_lea.vmem %s9, %s321
      %p323 = scmp.lt.s32.totalorder %s20, 1
      %s324 = scalar_select %p323, %s20, 1
      %s325 = smul.addr %s324, 2
      %s326 = smul.addr %s325, 8
      %s327 = scalar_lea.vmem %s0, %s326
      %p328 = scmp.lt.s32.totalorder %s20, 1
      %s329 = scalar_select %p328, %s20, 1
      %s330 = smul.addr %s329, 2
      %s331 = smul.addr %s330, 8
      %s332 = scalar_lea.vmem %s9, %s331
      %vm334 = vcmask 387072
      %335 = vst.msk [vmem:[#allocation2] sm:$0x7] %vm334, 0
      %s336 = scalar_lea.vmem [#allocation2], 20
      %337 = vst.msk [vmem:[%s336] sm:$0x7] %vm334, 0
      %s338 = scalar_lea.vmem [#allocation2], 4
      %vm339 = vcmask 385024
      %vm340 = vsmask.f32 256
      %vm341 = vmand %vm339, %vm340
      %v342 = vld [vmem:[%s338] sm:$0x1]
      %v343 = vsel %vm341, 0, %v342
      %344 = vst [vmem:[%s338] sm:$0x1] %v343
      %v345 = vld [vmem:[%s338 + $0x4] sm:$0x1]
      %v346 = vsel %vm341, 0, %v345
      %347 = vst [vmem:[%s338 + $0x4] sm:$0x1] %v346
      %v348 = vld [vmem:[%s338 + $0x8] sm:$0x1]
      %v349 = vsel %vm341, 0, %v348
      %350 = vst [vmem:[%s338 + $0x8] sm:$0x1] %v349
      %v351 = vld [vmem:[%s338 + $0xc] sm:$0x1]
      %v352 = vsel %vm341, 0, %v351
      %353 = vst [vmem:[%s338 + $0xc] sm:$0x1] %v352
      %vm354 = vcmask 387074
      %vm355 = vsmask.f32 7946
      %vm356 = vmand %vm354, %vm355
      %v357 = vld [vmem:[%s338] sm:$0x4]
      %v358 = vsel %vm356, 0, %v357
      %359 = vst [vmem:[%s338] sm:$0x4] %v358
      %v360 = vld [vmem:[%s338 + $0x4] sm:$0x4]
      %v361 = vsel %vm356, 0, %v360
      %362 = vst [vmem:[%s338 + $0x4] sm:$0x4] %v361
      %v363 = vld [vmem:[%s338 + $0x8] sm:$0x4]
      %v364 = vsel %vm356, 0, %v363
      %365 = vst [vmem:[%s338 + $0x8] sm:$0x4] %v364
      %v366 = vld [vmem:[%s338 + $0xc] sm:$0x4]
      %v367 = vsel %vm356, 0, %v366
      %368 = vst [vmem:[%s338 + $0xc] sm:$0x4] %v367
      %v369 = vld [vmem:[%s327] sm:$0xff]
      %v370 = vld [vmem:[%s327 + $0x8] sm:$0xff]
      %v371 = vpack.c.bf16 %v369, %v369
      %v372 = vpack.c.bf16 %v370, %v370
      %v374 = vshrl.u32 %v371, 16
      %v376 = vrot.slane %v374, 7
      %v377 = vshll.u32 %v371, 16
      %v379 = vor.u32 %v376, %v377
      %vm381 = vcmask 387072
      %vm382 = vsmask.f32 2306
      %vm383 = vmand %vm381, %vm382
      %v384 = vld [vmem:[%s338] sm:$0x7]
      %v385 = vsel %vm383, %v379, %v384
      %386 = vst [vmem:[%s338] sm:$0x7] %v385
      %v387 = vrot.slane %v374, 5
      %v388 = vrot.slane %v377, 6
      %v389 = vor.u32 %v387, %v388
      %v390 = vrot.slane %v389, 4
      %s392 = scalar_lea.vmem [#allocation2], 8
      %v393 = vld [vmem:[%s392] sm:$0x7]
      %v394 = vsel %vm383, %v390, %v393
      %395 = vst [vmem:[%s392] sm:$0x7] %v394
      %v397 = vshrl.u32 %v372, 16
      %v399 = vrot.slane %v397, 7
      %v400 = vshll.u32 %v372, 16
      %v402 = vor.u32 %v399, %v400
      %s404 = scalar_lea.vmem [#allocation2], 12
      %v405 = vld [vmem:[%s404] sm:$0x7]
      %v406 = vsel %vm383, %v402, %v405
      %407 = vst [vmem:[%s404] sm:$0x7] %v406
      %v408 = vrot.slane %v397, 5
      %v409 = vrot.slane %v400, 6
      %v410 = vor.u32 %v408, %v409
      %v411 = vrot.slane %v410, 4
      %s413 = scalar_lea.vmem [#allocation2], 16
      %v414 = vld [vmem:[%s413] sm:$0x7]
      %v415 = vsel %vm383, %v411, %v414
      %416 = vst [vmem:[%s413] sm:$0x7] %v415
      %v417 = vld [vmem:[#allocation2] sm:$0x3]
      %vm418 = vcmask 386048
      %419 = vst.msk [vmem:[#allocation6] sm:$0x3] %vm418, %v417
      %v420 = vld [vmem:[%s338] sm:$0x3]
      %v422 = vrot.slane %v420, 6
      %vm424 = vcmask 388098
      %425 = vst.msk [vmem:[#allocation6] sm:$0xc] %vm424, %v422
      %v426 = vld [vmem:[%s392] sm:$0x3]
      %427 = vst.msk [vmem:[#allocation6 + $0x10] sm:$0x3] %vm418, %v426
      %v428 = vld [vmem:[%s404] sm:$0x3]
      %v430 = vrot.slane %v428, 6
      %432 = vst.msk [vmem:[#allocation6 + $0x10] sm:$0xc] %vm424, %v430
      %v433 = vld [vmem:[#allocation2] sm:$0x7]
      %v435 = vshrl.u32 %v433, 16
      %v437 = vrot.slane %v435, 4
      %v438 = vshll.u32 %v433, 16
      %v440 = vrot.slane %v438, 5
      %v441 = vor.u32 %v437, %v440
      %v442 = vrot.slane %v441, 4
      %443 = vrot.lane.b32.xlu0 %v442, 48
      %v444 = vpop.permute.xlu0 %443
      %vm446 = vcmask 779648
      %447 = vst.msk [vmem:[#allocation6] sm:$0x3] %vm446, %v444
      %v448 = vld [vmem:[%s338] sm:$0x7]
      %v450 = vshrl.u32 %v448, 16
      %v452 = vrot.slane %v450, 6
      %v453 = vshll.u32 %v448, 16
      %v455 = vrot.slane %v453, 7
      %v456 = vor.u32 %v452, %v455
      %457 = vrot.lane.b32.xlu0 %v456, 48
      %v458 = vpop.permute.xlu0 %457
      %vm460 = vcmask 781698
      %461 = vst.msk [vmem:[#allocation6] sm:$0xc] %vm460, %v458
      %v462 = vld [vmem:[%s392] sm:$0x7]
      %v464 = vshrl.u32 %v462, 16
      %v466 = vrot.slane %v464, 4
      %v467 = vshll.u32 %v462, 16
      %v469 = vrot.slane %v467, 5
      %v470 = vor.u32 %v466, %v469
      %v471 = vrot.slane %v470, 4
      %472 = vrot.lane.b32.xlu0 %v471, 48
      %v473 = vpop.permute.xlu0 %472
      %475 = vst.msk [vmem:[#allocation6 + $0x10] sm:$0x3] %vm446, %v473
      %v476 = vld [vmem:[%s404] sm:$0x7]
      %v478 = vshrl.u32 %v476, 16
      %v480 = vrot.slane %v478, 6
      %v481 = vshll.u32 %v476, 16
      %v483 = vrot.slane %v481, 7
      %v484 = vor.u32 %v480, %v483
      %485 = vrot.lane.b32.xlu0 %v484, 48
      %v486 = vpop.permute.xlu0 %485
      %488 = vst.msk [vmem:[#allocation6 + $0x10] sm:$0xc] %vm460, %v486
      %v489 = vld [vmem:[#allocation2] sm:$0x6]
      %v491 = vrot.slane %v489, 5
      %v492 = vrot.slane %v491, 4
      %493 = vrot.lane.b32.xlu0 %v492, 96
      %v494 = vpop.permute.xlu0 %493
      %v495 = vrot.slane %v494, 4
      %vm496 = vcmask 785408
      %v497 = vsel %vm496, %v495, %v494
      %vm499 = vcmask 1042176
      %vm500 = vcmask 128004
      %vm501 = vmor %vm500, %vm499
      %502 = vst.msk [vmem:[#allocation6] sm:$0x33] %vm501, %v497
      %v503 = vld [vmem:[%s338] sm:$0x6]
      %v505 = vrot.slane %v503, 7
      %506 = vrot.lane.b32.xlu0 %v505, 96
      %v507 = vpop.permute.xlu0 %506
      %v508 = vrot.slane %v507, 4
      %v509 = vsel %vm496, %v508, %v507
      %vm511 = vcmask 1044226
      %vm512 = vcmask 130054
      %vm513 = vmor %vm512, %vm511
      %514 = vst.msk [vmem:[#allocation6] sm:$0xcc] %vm513, %v509
      %v515 = vld [vmem:[%s392] sm:$0x6]
      %v517 = vrot.slane %v515, 5
      %v518 = vrot.slane %v517, 4
      %519 = vrot.lane.b32.xlu0 %v518, 96
      %v520 = vpop.permute.xlu0 %519
      %v521 = vrot.slane %v520, 4
      %v522 = vsel %vm496, %v521, %v520
      %524 = vst.msk [vmem:[#allocation6 + $0x10] sm:$0x33] %vm501, %v522
      %v525 = vld [vmem:[%s404] sm:$0x6]
      %v527 = vrot.slane %v525, 7
      %528 = vrot.lane.b32.xlu0 %v527, 96
      %v529 = vpop.permute.xlu0 %528
      %v530 = vrot.slane %v529, 4
      %v531 = vsel %vm496, %v530, %v529
      %533 = vst.msk [vmem:[#allocation6 + $0x10] sm:$0xcc] %vm513, %v531
      %v534 = vld [vmem:[%s338] sm:$0x3]
      %536 = vrot.lane.b32.xlu0 %v534, 16
      %v537 = vpop.permute.xlu0 %536
      %vm539 = vcmask 517248
      %540 = vst.msk [vmem:[#allocation6 + $0x4] sm:$0x3] %vm539, %v537
      %v541 = vld [vmem:[%s392] sm:$0x3]
      %v543 = vrot.slane %v541, 6
      %544 = vrot.lane.b32.xlu0 %v543, 16
      %v545 = vpop.permute.xlu0 %544
      %vm547 = vcmask 519298
      %548 = vst.msk [vmem:[#allocation6 + $0x4] sm:$0xc] %vm547, %v545
      %v549 = vld [vmem:[%s404] sm:$0x3]
      %551 = vrot.lane.b32.xlu0 %v549, 16
      %v552 = vpop.permute.xlu0 %551
      %554 = vst.msk [vmem:[#allocation6 + $0x14] sm:$0x3] %vm539, %v552
      %v555 = vld [vmem:[%s413] sm:$0x3]
      %v557 = vrot.slane %v555, 6
      %558 = vrot.lane.b32.xlu0 %v557, 16
      %v559 = vpop.permute.xlu0 %558
      %561 = vst.msk [vmem:[#allocation6 + $0x14] sm:$0xc] %vm547, %v559
      %v562 = vld [vmem:[%s338] sm:$0x7]
      %v564 = vshrl.u32 %v562, 16
      %v566 = vrot.slane %v564, 4
      %v567 = vshll.u32 %v562, 16
      %v569 = vrot.slane %v567, 5
      %v570 = vor.u32 %v566, %v569
      %v571 = vrot.slane %v570, 4
      %572 = vrot.lane.b32.xlu0 %v571, 64
      %v573 = vpop.permute.xlu0 %572
      %vm575 = vcmask 910848
      %576 = vst.msk [vmem:[#allocation6 + $0x4] sm:$0x3] %vm575, %v573
      %v577 = vld [vmem:[%s392] sm:$0x7]
      %v579 = vshrl.u32 %v577, 16
      %v581 = vrot.slane %v579, 6
      %v582 = vshll.u32 %v577, 16
      %v584 = vrot.slane %v582, 7
      %v585 = vor.u32 %v581, %v584
      %586 = vrot.lane.b32.xlu0 %v585, 64
      %v587 = vpop.permute.xlu0 %586
      %vm589 = vcmask 912898
      %590 = vst.msk [vmem:[#allocation6 + $0x4] sm:$0xc] %vm589, %v587
      %v591 = vld [vmem:[%s404] sm:$0x7]
      %v593 = vshrl.u32 %v591, 16
      %v595 = vrot.slane %v593, 4
      %v596 = vshll.u32 %v591, 16
      %v598 = vrot.slane %v596, 5
      %v599 = vor.u32 %v595, %v598
      %v600 = vrot.slane %v599, 4
      %601 = vrot.lane.b32.xlu0 %v600, 64
      %v602 = vpop.permute.xlu0 %601
      %604 = vst.msk [vmem:[#allocation6 + $0x14] sm:$0x3] %vm575, %v602
      %v605 = vld [vmem:[%s413] sm:$0x7]
      %v607 = vshrl.u32 %v605, 16
      %v609 = vrot.slane %v607, 6
      %v610 = vshll.u32 %v605, 16
      %v612 = vrot.slane %v610, 7
      %v613 = vor.u32 %v609, %v612
      %614 = vrot.lane.b32.xlu0 %v613, 64
      %v615 = vpop.permute.xlu0 %614
      %617 = vst.msk [vmem:[#allocation6 + $0x14] sm:$0xc] %vm589, %v615
      %v618 = vld [vmem:[%s338] sm:$0x6]
      %v620 = vrot.slane %v618, 5
      %v621 = vrot.slane %v620, 4
      %622 = vrot.lane.b32.xlu0 %v621, 112
      %v623 = vpop.permute.xlu0 %622
      %v624 = vrot.slane %v623, 4
      %vm625 = vcmask 916480
      %v626 = vsel %vm625, %v624, %v623
      %vm628 = vcmask 1042304
      %vm629 = vcmask 259076
      %vm630 = vmor %vm629, %vm628
      %631 = vst.msk [vmem:[#allocation6 + $0x4] sm:$0x33] %vm630, %v626
      %v632 = vld [vmem:[%s392] sm:$0x6]
      %v634 = vrot.slane %v632, 7
      %635 = vrot.lane.b32.xlu0 %v634, 112
      %v636 = vpop.permute.xlu0 %635
      %v637 = vrot.slane %v636, 4
      %v638 = vsel %vm625, %v637, %v636
      %vm640 = vcmask 1044354
      %vm641 = vcmask 261126
      %vm642 = vmor %vm641, %vm640
      %643 = vst.msk [vmem:[#allocation6 + $0x4] sm:$0xcc] %vm642, %v638
      %v644 = vld [vmem:[%s404] sm:$0x6]
      %v646 = vrot.slane %v644, 5
      %v647 = vrot.slane %v646, 4
      %648 = vrot.lane.b32.xlu0 %v647, 112
      %v649 = vpop.permute.xlu0 %648
      %v650 = vrot.slane %v649, 4
      %v651 = vsel %vm625, %v650, %v649
      %653 = vst.msk [vmem:[#allocation6 + $0x14] sm:$0x33] %vm630, %v651
      %v654 = vld [vmem:[%s413] sm:$0x6]
      %v656 = vrot.slane %v654, 7
      %657 = vrot.lane.b32.xlu0 %v656, 112
      %v658 = vpop.permute.xlu0 %657
      %v659 = vrot.slane %v658, 4
      %v660 = vsel %vm625, %v659, %v658
      %662 = vst.msk [vmem:[#allocation6 + $0x14] sm:$0xcc] %vm642, %v660
      %v663 = vld [vmem:[%s392] sm:$0x3]
      %665 = vrot.lane.b32.xlu0 %v663, 32
      %v666 = vpop.permute.xlu0 %665
      %vm668 = vcmask 648448
      %669 = vst.msk [vmem:[#allocation6 + $0x8] sm:$0x3] %vm668, %v666
      %v670 = vld [vmem:[%s404] sm:$0x3]
      %v672 = vrot.slane %v670, 6
      %673 = vrot.lane.b32.xlu0 %v672, 32
      %v674 = vpop.permute.xlu0 %673
      %vm676 = vcmask 650498
      %677 = vst.msk [vmem:[#allocation6 + $0x8] sm:$0xc] %vm676, %v674
      %v678 = vld [vmem:[%s413] sm:$0x3]
      %680 = vrot.lane.b32.xlu0 %v678, 32
      %v681 = vpop.permute.xlu0 %680
      %683 = vst.msk [vmem:[#allocation6 + $0x18] sm:$0x3] %vm668, %v681
      %v684 = vld [vmem:[%s336] sm:$0x3]
      %v686 = vrot.slane %v684, 6
      %687 = vrot.lane.b32.xlu0 %v686, 32
      %v688 = vpop.permute.xlu0 %687
      %690 = vst.msk [vmem:[#allocation6 + $0x18] sm:$0xc] %vm676, %v688
      %v691 = vld [vmem:[%s392] sm:$0x7]
      %v693 = vshrl.u32 %v691, 16
      %v695 = vrot.slane %v693, 4
      %v696 = vshll.u32 %v691, 16
      %v698 = vrot.slane %v696, 5
      %v699 = vor.u32 %v695, %v698
      %v700 = vrot.slane %v699, 4
      %701 = vrot.lane.b32.xlu0 %v700, 80
      %v702 = vpop.permute.xlu0 %701
      %vm704 = vcmask 1042048
      %705 = vst.msk [vmem:[#allocation6 + $0x8] sm:$0x3] %vm704, %v702
      %v706 = vld [vmem:[%s404] sm:$0x7]
      %v708 = vshrl.u32 %v706, 16
      %v710 = vrot.slane %v708, 6
      %v711 = vshll.u32 %v706, 16
      %v713 = vrot.slane %v711, 7
      %v714 = vor.u32 %v710, %v713
      %715 = vrot.lane.b32.xlu0 %v714, 80
      %v716 = vpop.permute.xlu0 %715
      %vm718 = vcmask 1044098
      %719 = vst.msk [vmem:[#allocation6 + $0x8] sm:$0xc] %vm718, %v716
      %v720 = vld [vmem:[%s413] sm:$0x7]
      %v722 = vshrl.u32 %v720, 16
      %v724 = vrot.slane %v722, 4
      %v725 = vshll.u32 %v720, 16
      %v727 = vrot.slane %v725, 5
      %v728 = vor.u32 %v724, %v727
      %v729 = vrot.slane %v728, 4
      %730 = vrot.lane.b32.xlu0 %v729, 80
      %v731 = vpop.permute.xlu0 %730
      %733 = vst.msk [vmem:[#allocation6 + $0x18] sm:$0x3] %vm704, %v731
      %v734 = vld [vmem:[%s336] sm:$0x7]
      %v736 = vshrl.u32 %v734, 16
      %v738 = vrot.slane %v736, 6
      %v739 = vshll.u32 %v734, 16
      %v741 = vrot.slane %v739, 7
      %v742 = vor.u32 %v738, %v741
      %743 = vrot.lane.b32.xlu0 %v742, 80
      %v744 = vpop.permute.xlu0 %743
      %746 = vst.msk [vmem:[#allocation6 + $0x18] sm:$0xc] %vm718, %v744
      %v747 = vld [vmem:[%s392] sm:$0x6]
      %v749 = vrot.slane %v747, 5
      %v750 = vrot.slane %v749, 4
      %752 = vst.msk [vmem:[#allocation6 + $0xc] sm:$0x3] %vm418, %v750
      %v753 = vld [vmem:[%s404] sm:$0x6]
      %v755 = vrot.slane %v753, 7
      %757 = vst.msk [vmem:[#allocation6 + $0xc] sm:$0xc] %vm424, %v755
      %v758 = vld [vmem:[%s413] sm:$0x6]
      %v760 = vrot.slane %v758, 5
      %v761 = vrot.slane %v760, 4
      %763 = vst.msk [vmem:[#allocation6 + $0x1c] sm:$0x3] %vm418, %v761
      %v764 = vld [vmem:[%s336] sm:$0x6]
      %v766 = vrot.slane %v764, 7
      %768 = vst.msk [vmem:[#allocation6 + $0x1c] sm:$0xc] %vm424, %v766
      %v769 = vld [vmem:[#allocation6] sm:$0xff]
      %v770 = vld [vmem:[#allocation6 + $0x8] sm:$0xff]
      %v771 = vld [vmem:[#allocation6 + $0x10] sm:$0xff]
      %v772 = vld [vmem:[#allocation6 + $0x18] sm:$0xff]
      %v773 = vld [vmem:[%s1] sm:$0xf]
      %v774 = vld [vmem:[%s1 + $0x4] sm:$0xf]
      %v775 = vld [vmem:[%s1 + $0x8] sm:$0xf]
      %v776 = vld [vmem:[%s1 + $0xc] sm:$0xf]
      %v777 = vld [vmem:[%s1 + $0x10] sm:$0xf]
      %v778 = vld [vmem:[%s1 + $0x14] sm:$0xf]
      %v779 = vld [vmem:[%s1 + $0x18] sm:$0xf]
      %v780 = vld [vmem:[%s1 + $0x1c] sm:$0xf]
      %v781 = vld [vmem:[%s1 + $0x20] sm:$0xf]
      %v782 = vld [vmem:[%s1 + $0x24] sm:$0xf]
      %v783 = vld [vmem:[%s1 + $0x28] sm:$0xf]
      %v784 = vld [vmem:[%s1 + $0x2c] sm:$0xf]
      %v785 = vld [vmem:[%s1 + $0x30] sm:$0xf]
      %v786 = vld [vmem:[%s1 + $0x34] sm:$0xf]
      %v787 = vld [vmem:[%s1 + $0x38] sm:$0xf]
      %v788 = vld [vmem:[%s1 + $0x3c] sm:$0xf]
      %v789 = vld [vmem:[%s1 + $0x40] sm:$0xf]
      %v790 = vld [vmem:[%s1 + $0x44] sm:$0xf]
      %v791 = vld [vmem:[%s1 + $0x48] sm:$0xf]
      %v792 = vld [vmem:[%s1 + $0x4c] sm:$0xf]
      %v793 = vld [vmem:[%s1 + $0x50] sm:$0xf]
      %v794 = vld [vmem:[%s1 + $0x54] sm:$0xf]
      %v795 = vld [vmem:[%s1 + $0x58] sm:$0xf]
      %v796 = vld [vmem:[%s1 + $0x5c] sm:$0xf]
      %v797 = vld [vmem:[%s1 + $0x60] sm:$0xf]
      %v798 = vld [vmem:[%s1 + $0x64] sm:$0xf]
      %v799 = vld [vmem:[%s1 + $0x68] sm:$0xf]
      %v800 = vld [vmem:[%s1 + $0x6c] sm:$0xf]
      %v801 = vld [vmem:[%s1 + $0x70] sm:$0xf]
      %v802 = vld [vmem:[%s1 + $0x74] sm:$0xf]
      %v803 = vld [vmem:[%s1 + $0x78] sm:$0xf]
      %v804 = vld [vmem:[%s1 + $0x7c] sm:$0xf]
      %v805 = vld [vmem:[%s1 + $0x80] sm:$0xf]
      %v806 = vld [vmem:[%s1 + $0x84] sm:$0xf]
      %v807 = vld [vmem:[%s1 + $0x88] sm:$0xf]
      %v808 = vld [vmem:[%s1 + $0x8c] sm:$0xf]
      %v809 = vld [vmem:[%s1 + $0x90] sm:$0xf]
      %v810 = vld [vmem:[%s1 + $0x94] sm:$0xf]
      %v811 = vld [vmem:[%s1 + $0x98] sm:$0xf]
      %v812 = vld [vmem:[%s1 + $0x9c] sm:$0xf]
      %v813 = vld [vmem:[%s1 + $0xa0] sm:$0xf]
      %v814 = vld [vmem:[%s1 + $0xa4] sm:$0xf]
      %v815 = vld [vmem:[%s1 + $0xa8] sm:$0xf]
      %v816 = vld [vmem:[%s1 + $0xac] sm:$0xf]
      %v817 = vld [vmem:[%s1 + $0xb0] sm:$0xf]
      %v818 = vld [vmem:[%s1 + $0xb4] sm:$0xf]
      %v819 = vld [vmem:[%s1 + $0xb8] sm:$0xf]
      %v820 = vld [vmem:[%s1 + $0xbc] sm:$0xf]
      %v821 = vld [vmem:[%s1 + $0xc0] sm:$0xf]
      %v822 = vld [vmem:[%s1 + $0xc4] sm:$0xf]
      %v823 = vld [vmem:[%s1 + $0xc8] sm:$0xf]
      %v824 = vld [vmem:[%s1 + $0xcc] sm:$0xf]
      %v825 = vld [vmem:[%s1 + $0xd0] sm:$0xf]
      %v826 = vld [vmem:[%s1 + $0xd4] sm:$0xf]
      %v827 = vld [vmem:[%s2] sm:$0x1]
      %v829 = vperm.slane %v827, 0
      %v835 = vunpack.c.l.b16 %v769
      %v836 = vunpack.c.h.b16 %v769
      %v837 = vunpack.c.l.b16 %v770
      %v838 = vunpack.c.h.b16 %v770
      %v839 = vunpack.c.l.b16 %v771
      %v840 = vunpack.c.h.b16 %v771
      %v841 = vunpack.c.l.b16 %v772
      %v842 = vunpack.c.h.b16 %v772
      %v843 = vpack.c.b16 %v839, %v835
      %v844 = vpack.c.b16 %v840, %v836
      %v845 = vpack.c.b16 %v841, %v837
      %v846 = vpack.c.b16 %v842, %v838
      %v904 = vunpack.c.l.b16 %v773
      %v905 = vunpack.c.l.b16 %v774
      %v906 = vunpack.c.l.b16 %v775
      %v907 = vunpack.c.l.b16 %v776
      %v908 = vunpack.c.l.b16 %v777
      %v909 = vunpack.c.l.b16 %v778
      %v910 = vunpack.c.l.b16 %v779
      %v911 = vunpack.c.l.b16 %v780
      %v912 = vunpack.c.l.b16 %v781
      %v913 = vunpack.c.l.b16 %v782
      %v914 = vunpack.c.l.b16 %v783
      %v915 = vunpack.c.l.b16 %v784
      %v916 = vunpack.c.l.b16 %v785
      %v917 = vunpack.c.l.b16 %v786
      %v918 = vunpack.c.l.b16 %v787
      %v919 = vunpack.c.l.b16 %v788
      %v920 = vunpack.c.l.b16 %v789
      %v921 = vunpack.c.l.b16 %v790
      %v922 = vunpack.c.l.b16 %v791
      %v923 = vunpack.c.l.b16 %v792
      %v924 = vunpack.c.l.b16 %v793
      %v925 = vunpack.c.l.b16 %v794
      %v926 = vunpack.c.l.b16 %v795
      %v927 = vunpack.c.l.b16 %v796
      %v928 = vunpack.c.l.b16 %v797
      %v929 = vunpack.c.l.b16 %v798
      %v930 = vunpack.c.l.b16 %v799
      %v931 = vunpack.c.l.b16 %v800
      %v932 = vunpack.c.l.b16 %v801
      %v933 = vunpack.c.l.b16 %v802
      %v934 = vunpack.c.l.b16 %v803
      %v935 = vunpack.c.l.b16 %v804
      %v936 = vunpack.c.l.b16 %v805
      %v937 = vunpack.c.l.b16 %v806
      %v938 = vunpack.c.l.b16 %v807
      %v939 = vunpack.c.l.b16 %v808
      %v940 = vunpack.c.l.b16 %v809
      %v941 = vunpack.c.l.b16 %v810
      %v942 = vunpack.c.l.b16 %v811
      %v943 = vunpack.c.l.b16 %v812
      %v944 = vunpack.c.l.b16 %v813
      %v945 = vunpack.c.l.b16 %v814
      %v946 = vunpack.c.l.b16 %v815
      %v947 = vunpack.c.l.b16 %v816
      %v948 = vunpack.c.l.b16 %v817
      %v949 = vunpack.c.l.b16 %v818
      %v950 = vunpack.c.l.b16 %v819
      %v951 = vunpack.c.l.b16 %v820
      %v952 = vunpack.c.l.b16 %v821
      %v953 = vunpack.c.l.b16 %v822
      %v954 = vunpack.c.l.b16 %v823
      %v955 = vunpack.c.l.b16 %v824
      %v956 = vunpack.c.l.b16 %v825
      %v957 = vunpack.c.l.b16 %v826
      %v958 = vpack.c.b16 %v905, %v904
      %v959 = vpack.c.b16 %v907, %v906
      %v960 = vpack.c.b16 %v909, %v908
      %v961 = vpack.c.b16 %v911, %v910
      %v962 = vpack.c.b16 %v913, %v912
      %v963 = vpack.c.b16 %v915, %v914
      %v964 = vpack.c.b16 %v917, %v916
      %v965 = vpack.c.b16 %v919, %v918
      %v966 = vpack.c.b16 %v921, %v920
      %v967 = vpack.c.b16 %v923, %v922
      %v968 = vpack.c.b16 %v925, %v924
      %v969 = vpack.c.b16 %v927, %v926
      %v970 = vpack.c.b16 %v929, %v928
      %v971 = vpack.c.b16 %v931, %v930
      %v972 = vpack.c.b16 %v933, %v932
      %v973 = vpack.c.b16 %v935, %v934
      %v974 = vpack.c.b16 %v937, %v936
      %v975 = vpack.c.b16 %v939, %v938
      %v976 = vpack.c.b16 %v941, %v940
      %v977 = vpack.c.b16 %v943, %v942
      %v978 = vpack.c.b16 %v945, %v944
      %v979 = vpack.c.b16 %v947, %v946
      %v980 = vpack.c.b16 %v949, %v948
      %v981 = vpack.c.b16 %v951, %v950
      %v982 = vpack.c.b16 %v953, %v952
      %v983 = vpack.c.b16 %v955, %v954
      %v984 = vpack.c.b16 %v957, %v956
      %vm1012 = vcmask 392192
      %v1014 = vsel %vm1012, %v846, 0
      %1016 = vmatpush.bf16.msra.mxu0 %v965
      %1017 = vmatpush.bf16.msra.mxu0 %v964
      %1018 = vmatpush.bf16.msra.mxu0 %v963
      %1019 = vmatpush.bf16.msra.mxu0 %v962
      %1020 = vmatpush.bf16.msra.mxu0 %v961
      %1021 = vmatpush.bf16.msra.mxu0 %v960
      %1022 = vmatpush.bf16.msra.mxu0 %v959
      %1023 = vmatpush.bf16.msra.mxu0 %v958
      %1024 = vmatmul.bf16.gmra.mxu0 %v843
      %v1025 = vpop.f32.mrf.mxu0
      %v1026 = vadd.f32 %v829, %v1025
      %v1027 = vpop.f32.mrf.mxu0
      %v1028 = vadd.f32 %v829, %v1027
      %1029 = vdwg.mxu0
      %1030 = vmatpush.bf16.msra.mxu0 %v973
      %1031 = vmatpush.bf16.msra.mxu0 %v972
      %1032 = vmatpush.bf16.msra.mxu0 %v971
      %1033 = vmatpush.bf16.msra.mxu0 %v970
      %1034 = vmatpush.bf16.msra.mxu0 %v969
      %1035 = vmatpush.bf16.msra.mxu0 %v968
      %1036 = vmatpush.bf16.msra.mxu0 %v967
      %1037 = vmatpush.bf16.msra.mxu0 %v966
      %1038 = vmatmul.bf16.gmra.mxu0 %v844
      %v1039 = vpop.f32.mrf.mxu0
      %v1040 = vadd.f32 %v1026, %v1039
      %v1041 = vpop.f32.mrf.mxu0
      %v1042 = vadd.f32 %v1028, %v1041
      %1043 = vdwg.mxu0
      %1044 = vmatpush.bf16.msra.mxu0 %v981
      %1045 = vmatpush.bf16.msra.mxu0 %v980
      %1046 = vmatpush.bf16.msra.mxu0 %v979
      %1047 = vmatpush.bf16.msra.mxu0 %v978
      %1048 = vmatpush.bf16.msra.mxu0 %v977
      %1049 = vmatpush.bf16.msra.mxu0 %v976
      %1050 = vmatpush.bf16.msra.mxu0 %v975
      %1051 = vmatpush.bf16.msra.mxu0 %v974
      %1052 = vmatmul.bf16.gmra.mxu0 %v845
      %v1053 = vpop.f32.mrf.mxu0
      %v1054 = vadd.f32 %v1040, %v1053
      %v1055 = vpop.f32.mrf.mxu0
      %v1056 = vadd.f32 %v1042, %v1055
      %1057 = vdwg.mxu0
      %1058 = vmatpush.bf16.msra.mxu0 0
      %1059 = vmatpush.bf16.msra.mxu0 0
      %1060 = vmatpush.bf16.msra.mxu0 0
      %1061 = vmatpush.bf16.msra.mxu0 0
      %1062 = vmatpush.bf16.msra.mxu0 0
      %1063 = vmatpush.bf16.msra.mxu0 %v984
      %1064 = vmatpush.bf16.msra.mxu0 %v983
      %1065 = vmatpush.bf16.msra.mxu0 %v982
      %1066 = vmatmul.bf16.gmra.mxu0 %v1014
      %v1067 = vpop.f32.mrf.mxu0
      %v1068 = vadd.f32 %v1054, %v1067
      %v1069 = vpop.f32.mrf.mxu0
      %v1070 = vadd.f32 %v1056, %v1069
      %1071 = vdwg.mxu0
      %v1072 = vmax.f32 %v1068, 0.0
      %v1073 = vmax.f32 %v1070, 0.0
      %vm1074 = vcmask 256000
      %1075 = vst.msk [vmem:[#allocation3] sm:$0x7] %vm1074, 0
      %s1076 = scalar_lea.vmem [#allocation3], 20
      %1077 = vst.msk [vmem:[%s1076] sm:$0x7] %vm1074, 0
      %s1078 = scalar_lea.vmem [#allocation3], 4
      %vm1079 = vcmask 253952
      %vm1080 = vmand %vm1079, %vm340
      %v1081 = vld [vmem:[%s1078] sm:$0x1]
      %v1082 = vsel %vm1080, 0, %v1081
      %1083 = vst [vmem:[%s1078] sm:$0x1] %v1082
      %v1084 = vld [vmem:[%s1078 + $0x4] sm:$0x1]
      %v1085 = vsel %vm1080, 0, %v1084
      %1086 = vst [vmem:[%s1078 + $0x4] sm:$0x1] %v1085
      %v1087 = vld [vmem:[%s1078 + $0x8] sm:$0x1]
      %v1088 = vsel %vm1080, 0, %v1087
      %1089 = vst [vmem:[%s1078 + $0x8] sm:$0x1] %v1088
      %v1090 = vld [vmem:[%s1078 + $0xc] sm:$0x1]
      %v1091 = vsel %vm1080, 0, %v1090
      %1092 = vst [vmem:[%s1078 + $0xc] sm:$0x1] %v1091
      %vm1093 = vcmask 256002
      %vm1094 = vmand %vm1093, %vm355
      %v1095 = vld [vmem:[%s1078] sm:$0x4]
      %v1096 = vsel %vm1094, 0, %v1095
      %1097 = vst [vmem:[%s1078] sm:$0x4] %v1096
      %v1098 = vld [vmem:[%s1078 + $0x4] sm:$0x4]
      %v1099 = vsel %vm1094, 0, %v1098
      %1100 = vst [vmem:[%s1078 + $0x4] sm:$0x4] %v1099
      %v1101 = vld [vmem:[%s1078 + $0x8] sm:$0x4]
      %v1102 = vsel %vm1094, 0, %v1101
      %1103 = vst [vmem:[%s1078 + $0x8] sm:$0x4] %v1102
      %v1104 = vld [vmem:[%s1078 + $0xc] sm:$0x4]
      %v1105 = vsel %vm1094, 0, %v1104
      %1106 = vst [vmem:[%s1078 + $0xc] sm:$0x4] %v1105
      %v1107 = vpack.c.bf16 %v1072, %v1072
      %v1108 = vpack.c.bf16 %v1073, %v1073
      %v1110 = vshrl.u32 %v1107, 16
      %v1112 = vrot.slane %v1110, 7
      %v1113 = vshll.u32 %v1107, 16
      %v1115 = vor.u32 %v1112, %v1113
      %vm1117 = vcmask 256000
      %vm1118 = vmand %vm1117, %vm382
      %v1119 = vld [vmem:[%s1078] sm:$0x7]
      %v1120 = vsel %vm1118, %v1115, %v1119
      %1121 = vst [vmem:[%s1078] sm:$0x7] %v1120
      %v1122 = vrot.slane %v1110, 5
      %v1123 = vrot.slane %v1113, 6
      %v1124 = vor.u32 %v1122, %v1123
      %v1125 = vrot.slane %v1124, 4
      %s1127 = scalar_lea.vmem [#allocation3], 8
      %v1128 = vld [vmem:[%s1127] sm:$0x7]
      %v1129 = vsel %vm1118, %v1125, %v1128
      %1130 = vst [vmem:[%s1127] sm:$0x7] %v1129
      %v1132 = vshrl.u32 %v1108, 16
      %v1134 = vrot.slane %v1132, 7
      %v1135 = vshll.u32 %v1108, 16
      %v1137 = vor.u32 %v1134, %v1135
      %s1139 = scalar_lea.vmem [#allocation3], 12
      %v1140 = vld [vmem:[%s1139] sm:$0x7]
      %v1141 = vsel %vm1118, %v1137, %v1140
      %1142 = vst [vmem:[%s1139] sm:$0x7] %v1141
      %v1143 = vrot.slane %v1132, 5
      %v1144 = vrot.slane %v1135, 6
      %v1145 = vor.u32 %v1143, %v1144
      %v1146 = vrot.slane %v1145, 4
      %s1148 = scalar_lea.vmem [#allocation3], 16
      %v1149 = vld [vmem:[%s1148] sm:$0x7]
      %v1150 = vsel %vm1118, %v1146, %v1149
      %1151 = vst [vmem:[%s1148] sm:$0x7] %v1150
      %v1152 = vld [vmem:[#allocation3] sm:$0x3]
      %vm1153 = vcmask 254976
      %1154 = vst.msk [vmem:[#allocation6] sm:$0x3] %vm1153, %v1152
      %v1155 = vld [vmem:[%s1078] sm:$0x3]
      %v1157 = vrot.slane %v1155, 6
      %vm1159 = vcmask 257026
      %1160 = vst.msk [vmem:[#allocation6] sm:$0xc] %vm1159, %v1157
      %v1161 = vld [vmem:[%s1127] sm:$0x3]
      %1162 = vst.msk [vmem:[#allocation6 + $0x10] sm:$0x3] %vm1153, %v1161
      %v1163 = vld [vmem:[%s1139] sm:$0x3]
      %v1165 = vrot.slane %v1163, 6
      %1167 = vst.msk [vmem:[#allocation6 + $0x10] sm:$0xc] %vm1159, %v1165
      %v1168 = vld [vmem:[#allocation3] sm:$0x7]
      %v1170 = vshrl.u32 %v1168, 16
      %v1172 = vrot.slane %v1170, 4
      %v1173 = vshll.u32 %v1168, 16
      %v1175 = vrot.slane %v1173, 5
      %v1176 = vor.u32 %v1172, %v1175
      %v1177 = vrot.slane %v1176, 4
      %1178 = vrot.lane.b32.xlu0 %v1177, 32
      %v1179 = vpop.permute.xlu0 %1178
      %vm1181 = vcmask 517376
      %1182 = vst.msk [vmem:[#allocation6] sm:$0x3] %vm1181, %v1179
      %v1183 = vld [vmem:[%s1078] sm:$0x7]
      %v1185 = vshrl.u32 %v1183, 16
      %v1187 = vrot.slane %v1185, 6
      %v1188 = vshll.u32 %v1183, 16
      %v1190 = vrot.slane %v1188, 7
      %v1191 = vor.u32 %v1187, %v1190
      %1192 = vrot.lane.b32.xlu0 %v1191, 32
      %v1193 = vpop.permute.xlu0 %1192
      %vm1195 = vcmask 519426
      %1196 = vst.msk [vmem:[#allocation6] sm:$0xc] %vm1195, %v1193
      %v1197 = vld [vmem:[%s1127] sm:$0x7]
      %v1199 = vshrl.u32 %v1197, 16
      %v1201 = vrot.slane %v1199, 4
      %v1202 = vshll.u32 %v1197, 16
      %v1204 = vrot.slane %v1202, 5
      %v1205 = vor.u32 %v1201, %v1204
      %v1206 = vrot.slane %v1205, 4
      %1207 = vrot.lane.b32.xlu0 %v1206, 32
      %v1208 = vpop.permute.xlu0 %1207
      %1210 = vst.msk [vmem:[#allocation6 + $0x10] sm:$0x3] %vm1181, %v1208
      %v1211 = vld [vmem:[%s1139] sm:$0x7]
      %v1213 = vshrl.u32 %v1211, 16
      %v1215 = vrot.slane %v1213, 6
      %v1216 = vshll.u32 %v1211, 16
      %v1218 = vrot.slane %v1216, 7
      %v1219 = vor.u32 %v1215, %v1218
      %1220 = vrot.lane.b32.xlu0 %v1219, 32
      %v1221 = vpop.permute.xlu0 %1220
      %1223 = vst.msk [vmem:[#allocation6 + $0x10] sm:$0xc] %vm1195, %v1221
      %v1224 = vld [vmem:[#allocation3] sm:$0x6]
      %v1226 = vrot.slane %v1224, 5
      %v1227 = vrot.slane %v1226, 4
      %1228 = vrot.lane.b32.xlu0 %v1227, 64
      %v1229 = vpop.permute.xlu0 %1228
      %vm1231 = vcmask 779776
      %1232 = vst.msk [vmem:[#allocation6] sm:$0x3] %vm1231, %v1229
      %v1233 = vld [vmem:[%s1078] sm:$0x6]
      %v1235 = vrot.slane %v1233, 7
      %1236 = vrot.lane.b32.xlu0 %v1235, 64
      %v1237 = vpop.permute.xlu0 %1236
      %vm1239 = vcmask 781826
      %1240 = vst.msk [vmem:[#allocation6] sm:$0xc] %vm1239, %v1237
      %v1241 = vld [vmem:[%s1127] sm:$0x6]
      %v1243 = vrot.slane %v1241, 5
      %v1244 = vrot.slane %v1243, 4
      %1245 = vrot.lane.b32.xlu0 %v1244, 64
      %v1246 = vpop.permute.xlu0 %1245
      %1248 = vst.msk [vmem:[#allocation6 + $0x10] sm:$0x3] %vm1231, %v1246
      %v1249 = vld [vmem:[%s1139] sm:$0x6]
      %v1251 = vrot.slane %v1249, 7
      %1252 = vrot.lane.b32.xlu0 %v1251, 64
      %v1253 = vpop.permute.xlu0 %1252
      %1255 = vst.msk [vmem:[#allocation6 + $0x10] sm:$0xc] %vm1239, %v1253
      %v1256 = vld [vmem:[%s1078] sm:$0x3]
      %1258 = vrot.lane.b32.xlu0 %v1256, 96
      %v1259 = vpop.permute.xlu0 %1258
      %1261 = vst.msk [vmem:[#allocation6] sm:$0x3] %vm499, %v1259
      %v1262 = vld [vmem:[%s1127] sm:$0x3]
      %v1264 = vrot.slane %v1262, 6
      %1265 = vrot.lane.b32.xlu0 %v1264, 96
      %v1266 = vpop.permute.xlu0 %1265
      %1268 = vst.msk [vmem:[#allocation6] sm:$0xc] %vm511, %v1266
      %v1269 = vld [vmem:[%s1139] sm:$0x3]
      %1271 = vrot.lane.b32.xlu0 %v1269, 96
      %v1272 = vpop.permute.xlu0 %1271
      %1274 = vst.msk [vmem:[#allocation6 + $0x10] sm:$0x3] %vm499, %v1272
      %v1275 = vld [vmem:[%s1148] sm:$0x3]
      %v1277 = vrot.slane %v1275, 6
      %1278 = vrot.lane.b32.xlu0 %v1277, 96
      %v1279 = vpop.permute.xlu0 %1278
      %1281 = vst.msk [vmem:[#allocation6 + $0x10] sm:$0xc] %vm511, %v1279
      %v1282 = vld [vmem:[%s1078] sm:$0x7]
      %v1284 = vshrl.u32 %v1282, 16
      %v1286 = vrot.slane %v1284, 4
      %v1287 = vshll.u32 %v1282, 16
      %v1289 = vrot.slane %v1287, 5
      %v1290 = vor.u32 %v1286, %v1289
      %v1291 = vrot.slane %v1290, 4
      %1293 = vst.msk [vmem:[#allocation6 + $0x4] sm:$0x3] %vm1153, %v1291
      %v1294 = vld [vmem:[%s1127] sm:$0x7]
      %v1296 = vshrl.u32 %v1294, 16
      %v1298 = vrot.slane %v1296, 6
      %v1299 = vshll.u32 %v1294, 16
      %v1301 = vrot.slane %v1299, 7
      %v1302 = vor.u32 %v1298, %v1301
      %1304 = vst.msk [vmem:[#allocation6 + $0x4] sm:$0xc] %vm1159, %v1302
      %v1305 = vld [vmem:[%s1139] sm:$0x7]
      %v1307 = vshrl.u32 %v1305, 16
      %v1309 = vrot.slane %v1307, 4
      %v1310 = vshll.u32 %v1305, 16
      %v1312 = vrot.slane %v1310, 5
      %v1313 = vor.u32 %v1309, %v1312
      %v1314 = vrot.slane %v1313, 4
      %1316 = vst.msk [vmem:[#allocation6 + $0x14] sm:$0x3] %vm1153, %v1314
      %v1317 = vld [vmem:[%s1148] sm:$0x7]
      %v1319 = vshrl.u32 %v1317, 16
      %v1321 = vrot.slane %v1319, 6
      %v1322 = vshll.u32 %v1317, 16
      %v1324 = vrot.slane %v1322, 7
      %v1325 = vor.u32 %v1321, %v1324
      %1327 = vst.msk [vmem:[#allocation6 + $0x14] sm:$0xc] %vm1159, %v1325
      %v1328 = vld [vmem:[%s1078] sm:$0x6]
      %v1330 = vrot.slane %v1328, 5
      %v1331 = vrot.slane %v1330, 4
      %1332 = vrot.lane.b32.xlu0 %v1331, 32
      %v1333 = vpop.permute.xlu0 %1332
      %1335 = vst.msk [vmem:[#allocation6 + $0x4] sm:$0x3] %vm1181, %v1333
      %v1336 = vld [vmem:[%s1127] sm:$0x6]
      %v1338 = vrot.slane %v1336, 7
      %1339 = vrot.lane.b32.xlu0 %v1338, 32
      %v1340 = vpop.permute.xlu0 %1339
      %1342 = vst.msk [vmem:[#allocation6 + $0x4] sm:$0xc] %vm1195, %v1340
      %v1343 = vld [vmem:[%s1139] sm:$0x6]
      %v1345 = vrot.slane %v1343, 5
      %v1346 = vrot.slane %v1345, 4
      %1347 = vrot.lane.b32.xlu0 %v1346, 32
      %v1348 = vpop.permute.xlu0 %1347
      %1350 = vst.msk [vmem:[#allocation6 + $0x14] sm:$0x3] %vm1181, %v1348
      %v1351 = vld [vmem:[%s1148] sm:$0x6]
      %v1353 = vrot.slane %v1351, 7
      %1354 = vrot.lane.b32.xlu0 %v1353, 32
      %v1355 = vpop.permute.xlu0 %1354
      %1357 = vst.msk [vmem:[#allocation6 + $0x14] sm:$0xc] %vm1195, %v1355
      %v1358 = vld [vmem:[%s1127] sm:$0x3]
      %1360 = vrot.lane.b32.xlu0 %v1358, 64
      %v1361 = vpop.permute.xlu0 %1360
      %1363 = vst.msk [vmem:[#allocation6 + $0x4] sm:$0x3] %vm1231, %v1361
      %v1364 = vld [vmem:[%s1139] sm:$0x3]
      %v1366 = vrot.slane %v1364, 6
      %1367 = vrot.lane.b32.xlu0 %v1366, 64
      %v1368 = vpop.permute.xlu0 %1367
      %1370 = vst.msk [vmem:[#allocation6 + $0x4] sm:$0xc] %vm1239, %v1368
      %v1371 = vld [vmem:[%s1148] sm:$0x3]
      %1373 = vrot.lane.b32.xlu0 %v1371, 64
      %v1374 = vpop.permute.xlu0 %1373
      %1376 = vst.msk [vmem:[#allocation6 + $0x14] sm:$0x3] %vm1231, %v1374
      %v1377 = vld [vmem:[%s1076] sm:$0x3]
      %v1379 = vrot.slane %v1377, 6
      %1380 = vrot.lane.b32.xlu0 %v1379, 64
      %v1381 = vpop.permute.xlu0 %1380
      %1383 = vst.msk [vmem:[#allocation6 + $0x14] sm:$0xc] %vm1239, %v1381
      %v1384 = vld [vmem:[%s1127] sm:$0x7]
      %v1386 = vshrl.u32 %v1384, 16
      %v1388 = vrot.slane %v1386, 4
      %v1389 = vshll.u32 %v1384, 16
      %v1391 = vrot.slane %v1389, 5
      %v1392 = vor.u32 %v1388, %v1391
      %v1393 = vrot.slane %v1392, 4
      %1394 = vrot.lane.b32.xlu0 %v1393, 96
      %v1395 = vpop.permute.xlu0 %1394
      %1397 = vst.msk [vmem:[#allocation6 + $0x4] sm:$0x3] %vm499, %v1395
      %v1398 = vld [vmem:[%s1139] sm:$0x7]
      %v1400 = vshrl.u32 %v1398, 16
      %v1402 = vrot.slane %v1400, 6
      %v1403 = vshll.u32 %v1398, 16
      %v1405 = vrot.slane %v1403, 7
      %v1406 = vor.u32 %v1402, %v1405
      %1407 = vrot.lane.b32.xlu0 %v1406, 96
      %v1408 = vpop.permute.xlu0 %1407
      %1410 = vst.msk [vmem:[#allocation6 + $0x4] sm:$0xc] %vm511, %v1408
      %v1411 = vld [vmem:[%s1148] sm:$0x7]
      %v1413 = vshrl.u32 %v1411, 16
      %v1415 = vrot.slane %v1413, 4
      %v1416 = vshll.u32 %v1411, 16
      %v1418 = vrot.slane %v1416, 5
      %v1419 = vor.u32 %v1415, %v1418
      %v1420 = vrot.slane %v1419, 4
      %1421 = vrot.lane.b32.xlu0 %v1420, 96
      %v1422 = vpop.permute.xlu0 %1421
      %1424 = vst.msk [vmem:[#allocation6 + $0x14] sm:$0x3] %vm499, %v1422
      %v1425 = vld [vmem:[%s1076] sm:$0x7]
      %v1427 = vshrl.u32 %v1425, 16
      %v1429 = vrot.slane %v1427, 6
      %v1430 = vshll.u32 %v1425, 16
      %v1432 = vrot.slane %v1430, 7
      %v1433 = vor.u32 %v1429, %v1432
      %1434 = vrot.lane.b32.xlu0 %v1433, 96
      %v1435 = vpop.permute.xlu0 %1434
      %1437 = vst.msk [vmem:[#allocation6 + $0x14] sm:$0xc] %vm511, %v1435
      %v1438 = vld [vmem:[%s1127] sm:$0x6]
      %v1440 = vrot.slane %v1438, 5
      %v1441 = vrot.slane %v1440, 4
      %1443 = vst.msk [vmem:[#allocation6 + $0x8] sm:$0x3] %vm1153, %v1441
      %v1444 = vld [vmem:[%s1139] sm:$0x6]
      %v1446 = vrot.slane %v1444, 7
      %1448 = vst.msk [vmem:[#allocation6 + $0x8] sm:$0xc] %vm1159, %v1446
      %v1449 = vld [vmem:[%s1148] sm:$0x6]
      %v1451 = vrot.slane %v1449, 5
      %v1452 = vrot.slane %v1451, 4
      %1454 = vst.msk [vmem:[#allocation6 + $0x18] sm:$0x3] %vm1153, %v1452
      %v1455 = vld [vmem:[%s1076] sm:$0x6]
      %v1457 = vrot.slane %v1455, 7
      %1459 = vst.msk [vmem:[#allocation6 + $0x18] sm:$0xc] %vm1159, %v1457
      %v1460 = vld [vmem:[#allocation6] sm:$0xff]
      %v1461 = vld [vmem:[#allocation6 + $0x8] sm:$0xf]
      %v1462 = vld [vmem:[#allocation6 + $0x10] sm:$0xff]
      %v1463 = vld [vmem:[#allocation6 + $0x18] sm:$0xf]
      %v1464 = vld [vmem:[%s3] sm:$0xf]
      %v1465 = vld [vmem:[%s3 + $0x4] sm:$0xf]
      %v1466 = vld [vmem:[%s3 + $0x8] sm:$0xf]
      %v1467 = vld [vmem:[%s3 + $0xc] sm:$0xf]
      %v1468 = vld [vmem:[%s3 + $0x10] sm:$0xf]
      %v1469 = vld [vmem:[%s3 + $0x14] sm:$0xf]
      %v1470 = vld [vmem:[%s3 + $0x18] sm:$0xf]
      %v1471 = vld [vmem:[%s3 + $0x1c] sm:$0xf]
      %v1472 = vld [vmem:[%s3 + $0x20] sm:$0xf]
      %v1473 = vld [vmem:[%s3 + $0x24] sm:$0xf]
      %v1474 = vld [vmem:[%s3 + $0x28] sm:$0xf]
      %v1475 = vld [vmem:[%s3 + $0x2c] sm:$0xf]
      %v1476 = vld [vmem:[%s3 + $0x30] sm:$0xf]
      %v1477 = vld [vmem:[%s3 + $0x34] sm:$0xf]
      %v1478 = vld [vmem:[%s3 + $0x38] sm:$0xf]
      %v1479 = vld [vmem:[%s3 + $0x3c] sm:$0xf]
      %v1480 = vld [vmem:[%s3 + $0x40] sm:$0xf]
      %v1481 = vld [vmem:[%s3 + $0x44] sm:$0xf]
      %v1482 = vld [vmem:[%s3 + $0x48] sm:$0xf]
      %v1483 = vld [vmem:[%s3 + $0x4c] sm:$0xf]
      %v1484 = vld [vmem:[%s3 + $0x50] sm:$0xf]
      %v1485 = vld [vmem:[%s3 + $0x54] sm:$0xf]
      %v1486 = vld [vmem:[%s3 + $0x58] sm:$0xf]
      %v1487 = vld [vmem:[%s3 + $0x5c] sm:$0xf]
      %v1488 = vld [vmem:[%s3 + $0x60] sm:$0xf]
      %v1489 = vld [vmem:[%s3 + $0x64] sm:$0xf]
      %v1490 = vld [vmem:[%s3 + $0x68] sm:$0xf]
      %v1491 = vld [vmem:[%s3 + $0x6c] sm:$0xf]
      %v1492 = vld [vmem:[%s3 + $0x70] sm:$0xf]
      %v1493 = vld [vmem:[%s3 + $0x74] sm:$0xf]
      %v1494 = vld [vmem:[%s3 + $0x78] sm:$0xf]
      %v1495 = vld [vmem:[%s3 + $0x7c] sm:$0xf]
      %v1496 = vld [vmem:[%s3 + $0x80] sm:$0xf]
      %v1497 = vld [vmem:[%s3 + $0x84] sm:$0xf]
      %v1498 = vld [vmem:[%s3 + $0x88] sm:$0xf]
      %v1499 = vld [vmem:[%s3 + $0x8c] sm:$0xf]
      %v1500 = vld [vmem:[%s4] sm:$0x1]
      %v1502 = vperm.slane %v1500, 0
      %v1508 = vunpack.c.l.b16 %v1460
      %v1509 = vunpack.c.h.b16 %v1460
      %v1510 = vunpack.c.l.b16 %v1461
      %v1511 = vunpack.c.l.b16 %v1462
      %v1512 = vunpack.c.h.b16 %v1462
      %v1513 = vunpack.c.l.b16 %v1463
      %v1514 = vpack.c.b16 %v1511, %v1508
      %v1515 = vpack.c.b16 %v1512, %v1509
      %v1516 = vpack.c.b16 %v1513, %v1510
      %v1555 = vunpack.c.l.b16 %v1464
      %v1556 = vunpack.c.l.b16 %v1465
      %v1557 = vunpack.c.l.b16 %v1466
      %v1558 = vunpack.c.l.b16 %v1467
      %v1559 = vunpack.c.l.b16 %v1468
      %v1560 = vunpack.c.l.b16 %v1469
      %v1561 = vunpack.c.l.b16 %v1470
      %v1562 = vunpack.c.l.b16 %v1471
      %v1563 = vunpack.c.l.b16 %v1472
      %v1564 = vunpack.c.l.b16 %v1473
      %v1565 = vunpack.c.l.b16 %v1474
      %v1566 = vunpack.c.l.b16 %v1475
      %v1567 = vunpack.c.l.b16 %v1476
      %v1568 = vunpack.c.l.b16 %v1477
      %v1569 = vunpack.c.l.b16 %v1478
      %v1570 = vunpack.c.l.b16 %v1479
      %v1571 = vunpack.c.l.b16 %v1480
      %v1572 = vunpack.c.l.b16 %v1481
      %v1573 = vunpack.c.l.b16 %v1482
      %v1574 = vunpack.c.l.b16 %v1483
      %v1575 = vunpack.c.l.b16 %v1484
      %v1576 = vunpack.c.l.b16 %v1485
      %v1577 = vunpack.c.l.b16 %v1486
      %v1578 = vunpack.c.l.b16 %v1487
      %v1579 = vunpack.c.l.b16 %v1488
      %v1580 = vunpack.c.l.b16 %v1489
      %v1581 = vunpack.c.l.b16 %v1490
      %v1582 = vunpack.c.l.b16 %v1491
      %v1583 = vunpack.c.l.b16 %v1492
      %v1584 = vunpack.c.l.b16 %v1493
      %v1585 = vunpack.c.l.b16 %v1494
      %v1586 = vunpack.c.l.b16 %v1495
      %v1587 = vunpack.c.l.b16 %v1496
      %v1588 = vunpack.c.l.b16 %v1497
      %v1589 = vunpack.c.l.b16 %v1498
      %v1590 = vunpack.c.l.b16 %v1499
      %v1591 = vpack.c.b16 %v1556, %v1555
      %v1592 = vpack.c.b16 %v1558, %v1557
      %v1593 = vpack.c.b16 %v1560, %v1559
      %v1594 = vpack.c.b16 %v1562, %v1561
      %v1595 = vpack.c.b16 %v1564, %v1563
      %v1596 = vpack.c.b16 %v1566, %v1565
      %v1597 = vpack.c.b16 %v1568, %v1567
      %v1598 = vpack.c.b16 %v1570, %v1569
      %v1599 = vpack.c.b16 %v1572, %v1571
      %v1600 = vpack.c.b16 %v1574, %v1573
      %v1601 = vpack.c.b16 %v1576, %v1575
      %v1602 = vpack.c.b16 %v1578, %v1577
      %v1603 = vpack.c.b16 %v1580, %v1579
      %v1604 = vpack.c.b16 %v1582, %v1581
      %v1605 = vpack.c.b16 %v1584, %v1583
      %v1606 = vpack.c.b16 %v1586, %v1585
      %v1607 = vpack.c.b16 %v1588, %v1587
      %v1608 = vpack.c.b16 %v1590, %v1589
      %vm1627 = vcmask 261120
      %v1629 = vsel %vm1627, %v1516, 0
      %1631 = vmatpush.bf16.msra.mxu0 %v1598
      %1632 = vmatpush.bf16.msra.mxu0 %v1597
      %1633 = vmatpush.bf16.msra.mxu0 %v1596
      %1634 = vmatpush.bf16.msra.mxu0 %v1595
      %1635 = vmatpush.bf16.msra.mxu0 %v1594
      %1636 = vmatpush.bf16.msra.mxu0 %v1593
      %1637 = vmatpush.bf16.msra.mxu0 %v1592
      %1638 = vmatpush.bf16.msra.mxu0 %v1591
      %1639 = vmatmul.bf16.gmra.mxu0 %v1514
      %v1640 = vpop.f32.mrf.mxu0
      %v1641 = vadd.f32 %v1502, %v1640
      %v1642 = vpop.f32.mrf.mxu0
      %v1643 = vadd.f32 %v1502, %v1642
      %1644 = vdwg.mxu0
      %1645 = vmatpush.bf16.msra.mxu0 %v1606
      %1646 = vmatpush.bf16.msra.mxu0 %v1605
      %1647 = vmatpush.bf16.msra.mxu0 %v1604
      %1648 = vmatpush.bf16.msra.mxu0 %v1603
      %1649 = vmatpush.bf16.msra.mxu0 %v1602
      %1650 = vmatpush.bf16.msra.mxu0 %v1601
      %1651 = vmatpush.bf16.msra.mxu0 %v1600
      %1652 = vmatpush.bf16.msra.mxu0 %v1599
      %1653 = vmatmul.bf16.gmra.mxu0 %v1515
      %v1654 = vpop.f32.mrf.mxu0
      %v1655 = vadd.f32 %v1641, %v1654
      %v1656 = vpop.f32.mrf.mxu0
      %v1657 = vadd.f32 %v1643, %v1656
      %1658 = vdwg.mxu0
      %1659 = vmatpush.bf16.msra.mxu0 0
      %1660 = vmatpush.bf16.msra.mxu0 0
      %1661 = vmatpush.bf16.msra.mxu0 0
      %1662 = vmatpush.bf16.msra.mxu0 0
      %1663 = vmatpush.bf16.msra.mxu0 0
      %1664 = vmatpush.bf16.msra.mxu0 0
      %1665 = vmatpush.bf16.msra.mxu0 %v1608
      %1666 = vmatpush.bf16.msra.mxu0 %v1607
      %1667 = vmatmul.bf16.gmra.mxu0 %v1629
      %v1668 = vpop.f32.mrf.mxu0
      %v1669 = vadd.f32 %v1655, %v1668
      %v1670 = vpop.f32.mrf.mxu0
      %v1671 = vadd.f32 %v1657, %v1670
      %1672 = vdwg.mxu0
      %v1673 = vmax.f32 %v1669, 0.0
      %v1674 = vmax.f32 %v1671, 0.0
      %vm1675 = vcmask 124928
      %1676 = vst.msk [vmem:[#allocation4] sm:$0x7] %vm1675, 0
      %s1677 = scalar_lea.vmem [#allocation4], 20
      %1678 = vst.msk [vmem:[%s1677] sm:$0x7] %vm1675, 0
      %s1679 = scalar_lea.vmem [#allocation4], 4
      %vm1680 = vcmask 122880
      %vm1681 = vmand %vm1680, %vm340
      %v1682 = vld [vmem:[%s1679] sm:$0x1]
      %v1683 = vsel %vm1681, 0, %v1682
      %1684 = vst [vmem:[%s1679] sm:$0x1] %v1683
      %v1685 = vld [vmem:[%s1679 + $0x4] sm:$0x1]
      %v1686 = vsel %vm1681, 0, %v1685
      %1687 = vst [vmem:[%s1679 + $0x4] sm:$0x1] %v1686
      %v1688 = vld [vmem:[%s1679 + $0x8] sm:$0x1]
      %v1689 = vsel %vm1681, 0, %v1688
      %1690 = vst [vmem:[%s1679 + $0x8] sm:$0x1] %v1689
      %v1691 = vld [vmem:[%s1679 + $0xc] sm:$0x1]
      %v1692 = vsel %vm1681, 0, %v1691
      %1693 = vst [vmem:[%s1679 + $0xc] sm:$0x1] %v1692
      %vm1694 = vcmask 124930
      %vm1695 = vmand %vm1694, %vm355
      %v1696 = vld [vmem:[%s1679] sm:$0x4]
      %v1697 = vsel %vm1695, 0, %v1696
      %1698 = vst [vmem:[%s1679] sm:$0x4] %v1697
      %v1699 = vld [vmem:[%s1679 + $0x4] sm:$0x4]
      %v1700 = vsel %vm1695, 0, %v1699
      %1701 = vst [vmem:[%s1679 + $0x4] sm:$0x4] %v1700
      %v1702 = vld [vmem:[%s1679 + $0x8] sm:$0x4]
      %v1703 = vsel %vm1695, 0, %v1702
      %1704 = vst [vmem:[%s1679 + $0x8] sm:$0x4] %v1703
      %v1705 = vld [vmem:[%s1679 + $0xc] sm:$0x4]
      %v1706 = vsel %vm1695, 0, %v1705
      %1707 = vst [vmem:[%s1679 + $0xc] sm:$0x4] %v1706
      %v1708 = vpack.c.bf16 %v1673, %v1673
      %v1709 = vpack.c.bf16 %v1674, %v1674
      %v1711 = vshrl.u32 %v1708, 16
      %v1713 = vrot.slane %v1711, 7
      %v1714 = vshll.u32 %v1708, 16
      %v1716 = vor.u32 %v1713, %v1714
      %vm1718 = vcmask 124928
      %vm1719 = vmand %vm1718, %vm382
      %v1720 = vld [vmem:[%s1679] sm:$0x7]
      %v1721 = vsel %vm1719, %v1716, %v1720
      %1722 = vst [vmem:[%s1679] sm:$0x7] %v1721
      %v1723 = vrot.slane %v1711, 5
      %v1724 = vrot.slane %v1714, 6
      %v1725 = vor.u32 %v1723, %v1724
      %v1726 = vrot.slane %v1725, 4
      %s1728 = scalar_lea.vmem [#allocation4], 8
      %v1729 = vld [vmem:[%s1728] sm:$0x7]
      %v1730 = vsel %vm1719, %v1726, %v1729
      %1731 = vst [vmem:[%s1728] sm:$0x7] %v1730
      %v1733 = vshrl.u32 %v1709, 16
      %v1735 = vrot.slane %v1733, 7
      %v1736 = vshll.u32 %v1709, 16
      %v1738 = vor.u32 %v1735, %v1736
      %s1740 = scalar_lea.vmem [#allocation4], 12
      %v1741 = vld [vmem:[%s1740] sm:$0x7]
      %v1742 = vsel %vm1719, %v1738, %v1741
      %1743 = vst [vmem:[%s1740] sm:$0x7] %v1742
      %v1744 = vrot.slane %v1733, 5
      %v1745 = vrot.slane %v1736, 6
      %v1746 = vor.u32 %v1744, %v1745
      %v1747 = vrot.slane %v1746, 4
      %s1749 = scalar_lea.vmem [#allocation4], 16
      %v1750 = vld [vmem:[%s1749] sm:$0x7]
      %v1751 = vsel %vm1719, %v1747, %v1750
      %1752 = vst [vmem:[%s1749] sm:$0x7] %v1751
      %v1753 = vld [vmem:[#allocation4] sm:$0x3]
      %vm1754 = vcmask 123904
      %1755 = vst.msk [vmem:[#allocation6] sm:$0x3] %vm1754, %v1753
      %v1756 = vld [vmem:[%s1679] sm:$0x3]
      %v1758 = vrot.slane %v1756, 6
      %vm1760 = vcmask 125954
      %1761 = vst.msk [vmem:[#allocation6] sm:$0xc] %vm1760, %v1758
      %v1762 = vld [vmem:[%s1728] sm:$0x3]
      %1763 = vst.msk [vmem:[#allocation6 + $0x10] sm:$0x3] %vm1754, %v1762
      %v1764 = vld [vmem:[%s1740] sm:$0x3]
      %v1766 = vrot.slane %v1764, 6
      %1768 = vst.msk [vmem:[#allocation6 + $0x10] sm:$0xc] %vm1760, %v1766
      %v1769 = vld [vmem:[#allocation4] sm:$0x7]
      %v1771 = vshrl.u32 %v1769, 16
      %v1773 = vrot.slane %v1771, 4
      %v1774 = vshll.u32 %v1769, 16
      %v1776 = vrot.slane %v1774, 5
      %v1777 = vor.u32 %v1773, %v1776
      %v1778 = vrot.slane %v1777, 4
      %1779 = vrot.lane.b32.xlu0 %v1778, 16
      %v1780 = vpop.permute.xlu0 %1779
      %vm1782 = vcmask 255104
      %1783 = vst.msk [vmem:[#allocation6] sm:$0x3] %vm1782, %v1780
      %v1784 = vld [vmem:[%s1679] sm:$0x7]
      %v1786 = vshrl.u32 %v1784, 16
      %v1788 = vrot.slane %v1786, 6
      %v1789 = vshll.u32 %v1784, 16
      %v1791 = vrot.slane %v1789, 7
      %v1792 = vor.u32 %v1788, %v1791
      %1793 = vrot.lane.b32.xlu0 %v1792, 16
      %v1794 = vpop.permute.xlu0 %1793
      %vm1796 = vcmask 257154
      %1797 = vst.msk [vmem:[#allocation6] sm:$0xc] %vm1796, %v1794
      %v1798 = vld [vmem:[%s1728] sm:$0x7]
      %v1800 = vshrl.u32 %v1798, 16
      %v1802 = vrot.slane %v1800, 4
      %v1803 = vshll.u32 %v1798, 16
      %v1805 = vrot.slane %v1803, 5
      %v1806 = vor.u32 %v1802, %v1805
      %v1807 = vrot.slane %v1806, 4
      %1808 = vrot.lane.b32.xlu0 %v1807, 16
      %v1809 = vpop.permute.xlu0 %1808
      %1811 = vst.msk [vmem:[#allocation6 + $0x10] sm:$0x3] %vm1782, %v1809
      %v1812 = vld [vmem:[%s1740] sm:$0x7]
      %v1814 = vshrl.u32 %v1812, 16
      %v1816 = vrot.slane %v1814, 6
      %v1817 = vshll.u32 %v1812, 16
      %v1819 = vrot.slane %v1817, 7
      %v1820 = vor.u32 %v1816, %v1819
      %1821 = vrot.lane.b32.xlu0 %v1820, 16
      %v1822 = vpop.permute.xlu0 %1821
      %1824 = vst.msk [vmem:[#allocation6 + $0x10] sm:$0xc] %vm1796, %v1822
      %v1825 = vld [vmem:[#allocation4] sm:$0x6]
      %v1827 = vrot.slane %v1825, 5
      %v1828 = vrot.slane %v1827, 4
      %1829 = vrot.lane.b32.xlu0 %v1828, 32
      %v1830 = vpop.permute.xlu0 %1829
      %vm1832 = vcmask 386304
      %1833 = vst.msk [vmem:[#allocation6] sm:$0x3] %vm1832, %v1830
      %v1834 = vld [vmem:[%s1679] sm:$0x6]
      %v1836 = vrot.slane %v1834, 7
      %1837 = vrot.lane.b32.xlu0 %v1836, 32
      %v1838 = vpop.permute.xlu0 %1837
      %vm1840 = vcmask 388354
      %1841 = vst.msk [vmem:[#allocation6] sm:$0xc] %vm1840, %v1838
      %v1842 = vld [vmem:[%s1728] sm:$0x6]
      %v1844 = vrot.slane %v1842, 5
      %v1845 = vrot.slane %v1844, 4
      %1846 = vrot.lane.b32.xlu0 %v1845, 32
      %v1847 = vpop.permute.xlu0 %1846
      %1849 = vst.msk [vmem:[#allocation6 + $0x10] sm:$0x3] %vm1832, %v1847
      %v1850 = vld [vmem:[%s1740] sm:$0x6]
      %v1852 = vrot.slane %v1850, 7
      %1853 = vrot.lane.b32.xlu0 %v1852, 32
      %v1854 = vpop.permute.xlu0 %1853
      %1856 = vst.msk [vmem:[#allocation6 + $0x10] sm:$0xc] %vm1840, %v1854
      %v1857 = vld [vmem:[%s1679] sm:$0x3]
      %1859 = vrot.lane.b32.xlu0 %v1857, 48
      %v1860 = vpop.permute.xlu0 %1859
      %vm1862 = vcmask 517504
      %1863 = vst.msk [vmem:[#allocation6] sm:$0x3] %vm1862, %v1860
      %v1864 = vld [vmem:[%s1728] sm:$0x3]
      %v1866 = vrot.slane %v1864, 6
      %1867 = vrot.lane.b32.xlu0 %v1866, 48
      %v1868 = vpop.permute.xlu0 %1867
      %vm1870 = vcmask 519554
      %1871 = vst.msk [vmem:[#allocation6] sm:$0xc] %vm1870, %v1868
      %v1872 = vld [vmem:[%s1740] sm:$0x3]
      %1874 = vrot.lane.b32.xlu0 %v1872, 48
      %v1875 = vpop.permute.xlu0 %1874
      %1877 = vst.msk [vmem:[#allocation6 + $0x10] sm:$0x3] %vm1862, %v1875
      %v1878 = vld [vmem:[%s1749] sm:$0x3]
      %v1880 = vrot.slane %v1878, 6
      %1881 = vrot.lane.b32.xlu0 %v1880, 48
      %v1882 = vpop.permute.xlu0 %1881
      %1884 = vst.msk [vmem:[#allocation6 + $0x10] sm:$0xc] %vm1870, %v1882
      %v1885 = vld [vmem:[%s1679] sm:$0x7]
      %v1887 = vshrl.u32 %v1885, 16
      %v1889 = vrot.slane %v1887, 4
      %v1890 = vshll.u32 %v1885, 16
      %v1892 = vrot.slane %v1890, 5
      %v1893 = vor.u32 %v1889, %v1892
      %v1894 = vrot.slane %v1893, 4
      %1895 = vrot.lane.b32.xlu0 %v1894, 64
      %v1896 = vpop.permute.xlu0 %1895
      %vm1898 = vcmask 648704
      %1899 = vst.msk [vmem:[#allocation6] sm:$0x3] %vm1898, %v1896
      %v1900 = vld [vmem:[%s1728] sm:$0x7]
      %v1902 = vshrl.u32 %v1900, 16
      %v1904 = vrot.slane %v1902, 6
      %v1905 = vshll.u32 %v1900, 16
      %v1907 = vrot.slane %v1905, 7
      %v1908 = vor.u32 %v1904, %v1907
      %1909 = vrot.lane.b32.xlu0 %v1908, 64
      %v1910 = vpop.permute.xlu0 %1909
      %vm1912 = vcmask 650754
      %1913 = vst.msk [vmem:[#allocation6] sm:$0xc] %vm1912, %v1910
      %v1914 = vld [vmem:[%s1740] sm:$0x7]
      %v1916 = vshrl.u32 %v1914, 16
      %v1918 = vrot.slane %v1916, 4
      %v1919 = vshll.u32 %v1914, 16
      %v1921 = vrot.slane %v1919, 5
      %v1922 = vor.u32 %v1918, %v1921
      %v1923 = vrot.slane %v1922, 4
      %1924 = vrot.lane.b32.xlu0 %v1923, 64
      %v1925 = vpop.permute.xlu0 %1924
      %1927 = vst.msk [vmem:[#allocation6 + $0x10] sm:$0x3] %vm1898, %v1925
      %v1928 = vld [vmem:[%s1749] sm:$0x7]
      %v1930 = vshrl.u32 %v1928, 16
      %v1932 = vrot.slane %v1930, 6
      %v1933 = vshll.u32 %v1928, 16
      %v1935 = vrot.slane %v1933, 7
      %v1936 = vor.u32 %v1932, %v1935
      %1937 = vrot.lane.b32.xlu0 %v1936, 64
      %v1938 = vpop.permute.xlu0 %1937
      %1940 = vst.msk [vmem:[#allocation6 + $0x10] sm:$0xc] %vm1912, %v1938
      %v1941 = vld [vmem:[%s1679] sm:$0x6]
      %v1943 = vrot.slane %v1941, 5
      %v1944 = vrot.slane %v1943, 4
      %1945 = vrot.lane.b32.xlu0 %v1944, 80
      %v1946 = vpop.permute.xlu0 %1945
      %vm1948 = vcmask 779904
      %1949 = vst.msk [vmem:[#allocation6] sm:$0x3] %vm1948, %v1946
      %v1950 = vld [vmem:[%s1728] sm:$0x6]
      %v1952 = vrot.slane %v1950, 7
      %1953 = vrot.lane.b32.xlu0 %v1952, 80
      %v1954 = vpop.permute.xlu0 %1953
      %vm1956 = vcmask 781954
      %1957 = vst.msk [vmem:[#allocation6] sm:$0xc] %vm1956, %v1954
      %v1958 = vld [vmem:[%s1740] sm:$0x6]
      %v1960 = vrot.slane %v1958, 5
      %v1961 = vrot.slane %v1960, 4
      %1962 = vrot.lane.b32.xlu0 %v1961, 80
      %v1963 = vpop.permute.xlu0 %1962
      %1965 = vst.msk [vmem:[#allocation6 + $0x10] sm:$0x3] %vm1948, %v1963
      %v1966 = vld [vmem:[%s1749] sm:$0x6]
      %v1968 = vrot.slane %v1966, 7
      %1969 = vrot.lane.b32.xlu0 %v1968, 80
      %v1970 = vpop.permute.xlu0 %1969
      %1972 = vst.msk [vmem:[#allocation6 + $0x10] sm:$0xc] %vm1956, %v1970
      %v1973 = vld [vmem:[%s1728] sm:$0x3]
      %1975 = vrot.lane.b32.xlu0 %v1973, 96
      %v1976 = vpop.permute.xlu0 %1975
      %vm1978 = vcmask 911104
      %1979 = vst.msk [vmem:[#allocation6] sm:$0x3] %vm1978, %v1976
      %v1980 = vld [vmem:[%s1740] sm:$0x3]
      %v1982 = vrot.slane %v1980, 6
      %1983 = vrot.lane.b32.xlu0 %v1982, 96
      %v1984 = vpop.permute.xlu0 %1983
      %vm1986 = vcmask 913154
      %1987 = vst.msk [vmem:[#allocation6] sm:$0xc] %vm1986, %v1984
      %v1988 = vld [vmem:[%s1749] sm:$0x3]
      %1990 = vrot.lane.b32.xlu0 %v1988, 96
      %v1991 = vpop.permute.xlu0 %1990
      %1993 = vst.msk [vmem:[#allocation6 + $0x10] sm:$0x3] %vm1978, %v1991
      %v1994 = vld [vmem:[%s1677] sm:$0x3]
      %v1996 = vrot.slane %v1994, 6
      %1997 = vrot.lane.b32.xlu0 %v1996, 96
      %v1998 = vpop.permute.xlu0 %1997
      %2000 = vst.msk [vmem:[#allocation6 + $0x10] sm:$0xc] %vm1986, %v1998
      %v2001 = vld [vmem:[%s1728] sm:$0x7]
      %v2003 = vshrl.u32 %v2001, 16
      %v2005 = vrot.slane %v2003, 4
      %v2006 = vshll.u32 %v2001, 16
      %v2008 = vrot.slane %v2006, 5
      %v2009 = vor.u32 %v2005, %v2008
      %v2010 = vrot.slane %v2009, 4
      %2011 = vrot.lane.b32.xlu0 %v2010, 112
      %v2012 = vpop.permute.xlu0 %2011
      %2014 = vst.msk [vmem:[#allocation6] sm:$0x3] %vm628, %v2012
      %v2015 = vld [vmem:[%s1740] sm:$0x7]
      %v2017 = vshrl.u32 %v2015, 16
      %v2019 = vrot.slane %v2017, 6
      %v2020 = vshll.u32 %v2015, 16
      %v2022 = vrot.slane %v2020, 7
      %v2023 = vor.u32 %v2019, %v2022
      %2024 = vrot.lane.b32.xlu0 %v2023, 112
      %v2025 = vpop.permute.xlu0 %2024
      %2027 = vst.msk [vmem:[#allocation6] sm:$0xc] %vm640, %v2025
      %v2028 = vld [vmem:[%s1749] sm:$0x7]
      %v2030 = vshrl.u32 %v2028, 16
      %v2032 = vrot.slane %v2030, 4
      %v2033 = vshll.u32 %v2028, 16
      %v2035 = vrot.slane %v2033, 5
      %v2036 = vor.u32 %v2032, %v2035
      %v2037 = vrot.slane %v2036, 4
      %2038 = vrot.lane.b32.xlu0 %v2037, 112
      %v2039 = vpop.permute.xlu0 %2038
      %2041 = vst.msk [vmem:[#allocation6 + $0x10] sm:$0x3] %vm628, %v2039
      %v2042 = vld [vmem:[%s1677] sm:$0x7]
      %v2044 = vshrl.u32 %v2042, 16
      %v2046 = vrot.slane %v2044, 6
      %v2047 = vshll.u32 %v2042, 16
      %v2049 = vrot.slane %v2047, 7
      %v2050 = vor.u32 %v2046, %v2049
      %2051 = vrot.lane.b32.xlu0 %v2050, 112
      %v2052 = vpop.permute.xlu0 %2051
      %2054 = vst.msk [vmem:[#allocation6 + $0x10] sm:$0xc] %vm640, %v2052
      %v2055 = vld [vmem:[%s1728] sm:$0x6]
      %v2057 = vrot.slane %v2055, 5
      %v2058 = vrot.slane %v2057, 4
      %2060 = vst.msk [vmem:[#allocation6 + $0x4] sm:$0x3] %vm1754, %v2058
      %v2061 = vld [vmem:[%s1740] sm:$0x6]
      %v2063 = vrot.slane %v2061, 7
      %2065 = vst.msk [vmem:[#allocation6 + $0x4] sm:$0xc] %vm1760, %v2063
      %v2066 = vld [vmem:[%s1749] sm:$0x6]
      %v2068 = vrot.slane %v2066, 5
      %v2069 = vrot.slane %v2068, 4
      %2071 = vst.msk [vmem:[#allocation6 + $0x14] sm:$0x3] %vm1754, %v2069
      %v2072 = vld [vmem:[%s1677] sm:$0x6]
      %v2074 = vrot.slane %v2072, 7
      %2076 = vst.msk [vmem:[#allocation6 + $0x14] sm:$0xc] %vm1760, %v2074
      %v2077 = vld [vmem:[#allocation6] sm:$0xff]
      %v2078 = vld [vmem:[#allocation6 + $0x10] sm:$0xff]
      %v2079 = vld [vmem:[%s5] sm:$0xf]
      %v2080 = vld [vmem:[%s5 + $0x4] sm:$0xf]
      %v2081 = vld [vmem:[%s5 + $0x8] sm:$0xf]
      %v2082 = vld [vmem:[%s5 + $0xc] sm:$0xf]
      %v2083 = vld [vmem:[%s5 + $0x10] sm:$0xf]
      %v2084 = vld [vmem:[%s5 + $0x14] sm:$0xf]
      %v2085 = vld [vmem:[%s5 + $0x18] sm:$0xf]
      %v2086 = vld [vmem:[%s5 + $0x1c] sm:$0xf]
      %v2087 = vld [vmem:[%s5 + $0x20] sm:$0xf]
      %v2088 = vld [vmem:[%s5 + $0x24] sm:$0xf]
      %v2089 = vld [vmem:[%s5 + $0x28] sm:$0xf]
      %v2090 = vld [vmem:[%s5 + $0x2c] sm:$0xf]
      %v2091 = vld [vmem:[%s5 + $0x30] sm:$0xf]
      %v2092 = vld [vmem:[%s5 + $0x34] sm:$0xf]
      %v2093 = vld [vmem:[%s5 + $0x38] sm:$0xf]
      %v2094 = vld [vmem:[%s5 + $0x3c] sm:$0xf]
      %v2095 = vld [vmem:[%s5 + $0x40] sm:$0xf]
      %v2096 = vld [vmem:[%s5 + $0x44] sm:$0xf]
      %v2097 = vld [vmem:[%s6] sm:$0x1]
      %v2099 = vperm.slane %v2097, 0
      %v2103 = vunpack.c.l.b16 %v2077
      %v2104 = vunpack.c.h.b16 %v2077
      %v2105 = vunpack.c.l.b16 %v2078
      %v2106 = vunpack.c.h.b16 %v2078
      %v2107 = vpack.c.b16 %v2105, %v2103
      %v2108 = vpack.c.b16 %v2106, %v2104
      %v2128 = vunpack.c.l.b16 %v2079
      %v2129 = vunpack.c.l.b16 %v2080
      %v2130 = vunpack.c.l.b16 %v2081
      %v2131 = vunpack.c.l.b16 %v2082
      %v2132 = vunpack.c.l.b16 %v2083
      %v2133 = vunpack.c.l.b16 %v2084
      %v2134 = vunpack.c.l.b16 %v2085
      %v2135 = vunpack.c.l.b16 %v2086
      %v2136 = vunpack.c.l.b16 %v2087
      %v2137 = vunpack.c.l.b16 %v2088
      %v2138 = vunpack.c.l.b16 %v2089
      %v2139 = vunpack.c.l.b16 %v2090
      %v2140 = vunpack.c.l.b16 %v2091
      %v2141 = vunpack.c.l.b16 %v2092
      %v2142 = vunpack.c.l.b16 %v2093
      %v2143 = vunpack.c.l.b16 %v2094
      %v2144 = vunpack.c.l.b16 %v2095
      %v2145 = vunpack.c.l.b16 %v2096
      %v2146 = vpack.c.b16 %v2129, %v2128
      %v2147 = vpack.c.b16 %v2131, %v2130
      %v2148 = vpack.c.b16 %v2133, %v2132
      %v2149 = vpack.c.b16 %v2135, %v2134
      %v2150 = vpack.c.b16 %v2137, %v2136
      %v2151 = vpack.c.b16 %v2139, %v2138
      %v2152 = vpack.c.b16 %v2141, %v2140
      %v2153 = vpack.c.b16 %v2143, %v2142
      %v2154 = vpack.c.b16 %v2145, %v2144
      %vm2164 = vcmask 130048
      %v2166 = vsel %vm2164, %v2108, 0
      %2168 = vmatpush.bf16.msra.mxu0 %v2153
      %2169 = vmatpush.bf16.msra.mxu0 %v2152
      %2170 = vmatpush.bf16.msra.mxu0 %v2151
      %2171 = vmatpush.bf16.msra.mxu0 %v2150
      %2172 = vmatpush.bf16.msra.mxu0 %v2149
      %2173 = vmatpush.bf16.msra.mxu0 %v2148
      %2174 = vmatpush.bf16.msra.mxu0 %v2147
      %2175 = vmatpush.bf16.msra.mxu0 %v2146
      %2176 = vmatmul.bf16.gmra.mxu0 %v2107
      %v2177 = vpop.f32.mrf.mxu0
      %v2178 = vadd.f32 %v2099, %v2177
      %v2179 = vpop.f32.mrf.mxu0
      %v2180 = vadd.f32 %v2099, %v2179
      %2181 = vdwg.mxu0
      %2182 = vmatpush.bf16.msra.mxu0 0
      %2183 = vmatpush.bf16.msra.mxu0 0
      %2184 = vmatpush.bf16.msra.mxu0 0
      %2185 = vmatpush.bf16.msra.mxu0 0
      %2186 = vmatpush.bf16.msra.mxu0 0
      %2187 = vmatpush.bf16.msra.mxu0 0
      %2188 = vmatpush.bf16.msra.mxu0 0
      %2189 = vmatpush.bf16.msra.mxu0 %v2154
      %2190 = vmatmul.bf16.gmra.mxu0 %v2166
      %v2191 = vpop.f32.mrf.mxu0
      %v2192 = vadd.f32 %v2178, %v2191
      %v2193 = vpop.f32.mrf.mxu0
      %v2194 = vadd.f32 %v2180, %v2193
      %2195 = vdwg.mxu0
      %v2196 = vmax.f32 %v2192, 0.0
      %v2197 = vmax.f32 %v2194, 0.0
      %2198 = vst.msk [vmem:[#allocation5] sm:$0x7] %vm1074, 0
      %s2199 = scalar_lea.vmem [#allocation5], 20
      %2200 = vst.msk [vmem:[%s2199] sm:$0x7] %vm1074, 0
      %s2201 = scalar_lea.vmem [#allocation5], 4
      %v2202 = vld [vmem:[%s2201] sm:$0x1]
      %v2203 = vsel %vm1080, 0, %v2202
      %2204 = vst [vmem:[%s2201] sm:$0x1] %v2203
      %v2205 = vld [vmem:[%s2201 + $0x4] sm:$0x1]
      %v2206 = vsel %vm1080, 0, %v2205
      %2207 = vst [vmem:[%s2201 + $0x4] sm:$0x1] %v2206
      %v2208 = vld [vmem:[%s2201 + $0x8] sm:$0x1]
      %v2209 = vsel %vm1080, 0, %v2208
      %2210 = vst [vmem:[%s2201 + $0x8] sm:$0x1] %v2209
      %v2211 = vld [vmem:[%s2201 + $0xc] sm:$0x1]
      %v2212 = vsel %vm1080, 0, %v2211
      %2213 = vst [vmem:[%s2201 + $0xc] sm:$0x1] %v2212
      %v2214 = vld [vmem:[%s2201] sm:$0x4]
      %v2215 = vsel %vm1094, 0, %v2214
      %2216 = vst [vmem:[%s2201] sm:$0x4] %v2215
      %v2217 = vld [vmem:[%s2201 + $0x4] sm:$0x4]
      %v2218 = vsel %vm1094, 0, %v2217
      %2219 = vst [vmem:[%s2201 + $0x4] sm:$0x4] %v2218
      %v2220 = vld [vmem:[%s2201 + $0x8] sm:$0x4]
      %v2221 = vsel %vm1094, 0, %v2220
      %2222 = vst [vmem:[%s2201 + $0x8] sm:$0x4] %v2221
      %v2223 = vld [vmem:[%s2201 + $0xc] sm:$0x4]
      %v2224 = vsel %vm1094, 0, %v2223
      %2225 = vst [vmem:[%s2201 + $0xc] sm:$0x4] %v2224
      %v2226 = vpack.c.bf16 %v2196, %v2196
      %v2227 = vpack.c.bf16 %v2197, %v2197
      %v2229 = vshrl.u32 %v2226, 16
      %v2231 = vrot.slane %v2229, 7
      %v2232 = vshll.u32 %v2226, 16
      %v2234 = vor.u32 %v2231, %v2232
      %v2236 = vld [vmem:[%s2201] sm:$0x7]
      %v2237 = vsel %vm1118, %v2234, %v2236
      %2238 = vst [vmem:[%s2201] sm:$0x7] %v2237
      %v2239 = vrot.slane %v2229, 5
      %v2240 = vrot.slane %v2232, 6
      %v2241 = vor.u32 %v2239, %v2240
      %v2242 = vrot.slane %v2241, 4
      %s2244 = scalar_lea.vmem [#allocation5], 8
      %v2245 = vld [vmem:[%s2244] sm:$0x7]
      %v2246 = vsel %vm1118, %v2242, %v2245
      %2247 = vst [vmem:[%s2244] sm:$0x7] %v2246
      %v2249 = vshrl.u32 %v2227, 16
      %v2251 = vrot.slane %v2249, 7
      %v2252 = vshll.u32 %v2227, 16
      %v2254 = vor.u32 %v2251, %v2252
      %s2256 = scalar_lea.vmem [#allocation5], 12
      %v2257 = vld [vmem:[%s2256] sm:$0x7]
      %v2258 = vsel %vm1118, %v2254, %v2257
      %2259 = vst [vmem:[%s2256] sm:$0x7] %v2258
      %v2260 = vrot.slane %v2249, 5
      %v2261 = vrot.slane %v2252, 6
      %v2262 = vor.u32 %v2260, %v2261
      %v2263 = vrot.slane %v2262, 4
      %s2265 = scalar_lea.vmem [#allocation5], 16
      %v2266 = vld [vmem:[%s2265] sm:$0x7]
      %v2267 = vsel %vm1118, %v2263, %v2266
      %2268 = vst [vmem:[%s2265] sm:$0x7] %v2267
      %v2269 = vld [vmem:[#allocation5] sm:$0x3]
      %2270 = vst.msk [vmem:[#allocation6] sm:$0x3] %vm1153, %v2269
      %v2271 = vld [vmem:[%s2201] sm:$0x3]
      %v2273 = vrot.slane %v2271, 6
      %2275 = vst.msk [vmem:[#allocation6] sm:$0xc] %vm1159, %v2273
      %v2276 = vld [vmem:[%s2244] sm:$0x3]
      %2277 = vst.msk [vmem:[#allocation6 + $0x10] sm:$0x3] %vm1153, %v2276
      %v2278 = vld [vmem:[%s2256] sm:$0x3]
      %v2280 = vrot.slane %v2278, 6
      %2282 = vst.msk [vmem:[#allocation6 + $0x10] sm:$0xc] %vm1159, %v2280
      %v2283 = vld [vmem:[#allocation5] sm:$0x7]
      %v2285 = vshrl.u32 %v2283, 16
      %v2287 = vrot.slane %v2285, 4
      %v2288 = vshll.u32 %v2283, 16
      %v2290 = vrot.slane %v2288, 5
      %v2291 = vor.u32 %v2287, %v2290
      %v2292 = vrot.slane %v2291, 4
      %2293 = vrot.lane.b32.xlu0 %v2292, 32
      %v2294 = vpop.permute.xlu0 %2293
      %2296 = vst.msk [vmem:[#allocation6] sm:$0x3] %vm1181, %v2294
      %v2297 = vld [vmem:[%s2201] sm:$0x7]
      %v2299 = vshrl.u32 %v2297, 16
      %v2301 = vrot.slane %v2299, 6
      %v2302 = vshll.u32 %v2297, 16
      %v2304 = vrot.slane %v2302, 7
      %v2305 = vor.u32 %v2301, %v2304
      %2306 = vrot.lane.b32.xlu0 %v2305, 32
      %v2307 = vpop.permute.xlu0 %2306
      %2309 = vst.msk [vmem:[#allocation6] sm:$0xc] %vm1195, %v2307
      %v2310 = vld [vmem:[%s2244] sm:$0x7]
      %v2312 = vshrl.u32 %v2310, 16
      %v2314 = vrot.slane %v2312, 4
      %v2315 = vshll.u32 %v2310, 16
      %v2317 = vrot.slane %v2315, 5
      %v2318 = vor.u32 %v2314, %v2317
      %v2319 = vrot.slane %v2318, 4
      %2320 = vrot.lane.b32.xlu0 %v2319, 32
      %v2321 = vpop.permute.xlu0 %2320
      %2323 = vst.msk [vmem:[#allocation6 + $0x10] sm:$0x3] %vm1181, %v2321
      %v2324 = vld [vmem:[%s2256] sm:$0x7]
      %v2326 = vshrl.u32 %v2324, 16
      %v2328 = vrot.slane %v2326, 6
      %v2329 = vshll.u32 %v2324, 16
      %v2331 = vrot.slane %v2329, 7
      %v2332 = vor.u32 %v2328, %v2331
      %2333 = vrot.lane.b32.xlu0 %v2332, 32
      %v2334 = vpop.permute.xlu0 %2333
      %2336 = vst.msk [vmem:[#allocation6 + $0x10] sm:$0xc] %vm1195, %v2334
      %v2337 = vld [vmem:[#allocation5] sm:$0x6]
      %v2339 = vrot.slane %v2337, 5
      %v2340 = vrot.slane %v2339, 4
      %2341 = vrot.lane.b32.xlu0 %v2340, 64
      %v2342 = vpop.permute.xlu0 %2341
      %2344 = vst.msk [vmem:[#allocation6] sm:$0x3] %vm1231, %v2342
      %v2345 = vld [vmem:[%s2201] sm:$0x6]
      %v2347 = vrot.slane %v2345, 7
      %2348 = vrot.lane.b32.xlu0 %v2347, 64
      %v2349 = vpop.permute.xlu0 %2348
      %2351 = vst.msk [vmem:[#allocation6] sm:$0xc] %vm1239, %v2349
      %v2352 = vld [vmem:[%s2244] sm:$0x6]
      %v2354 = vrot.slane %v2352, 5
      %v2355 = vrot.slane %v2354, 4
      %2356 = vrot.lane.b32.xlu0 %v2355, 64
      %v2357 = vpop.permute.xlu0 %2356
      %2359 = vst.msk [vmem:[#allocation6 + $0x10] sm:$0x3] %vm1231, %v2357
      %v2360 = vld [vmem:[%s2256] sm:$0x6]
      %v2362 = vrot.slane %v2360, 7
      %2363 = vrot.lane.b32.xlu0 %v2362, 64
      %v2364 = vpop.permute.xlu0 %2363
      %2366 = vst.msk [vmem:[#allocation6 + $0x10] sm:$0xc] %vm1239, %v2364
      %v2367 = vld [vmem:[%s2201] sm:$0x3]
      %2369 = vrot.lane.b32.xlu0 %v2367, 96
      %v2370 = vpop.permute.xlu0 %2369
      %2372 = vst.msk [vmem:[#allocation6] sm:$0x3] %vm499, %v2370
      %v2373 = vld [vmem:[%s2244] sm:$0x3]
      %v2375 = vrot.slane %v2373, 6
      %2376 = vrot.lane.b32.xlu0 %v2375, 96
      %v2377 = vpop.permute.xlu0 %2376
      %2379 = vst.msk [vmem:[#allocation6] sm:$0xc] %vm511, %v2377
      %v2380 = vld [vmem:[%s2256] sm:$0x3]
      %2382 = vrot.lane.b32.xlu0 %v2380, 96
      %v2383 = vpop.permute.xlu0 %2382
      %2385 = vst.msk [vmem:[#allocation6 + $0x10] sm:$0x3] %vm499, %v2383
      %v2386 = vld [vmem:[%s2265] sm:$0x3]
      %v2388 = vrot.slane %v2386, 6
      %2389 = vrot.lane.b32.xlu0 %v2388, 96
      %v2390 = vpop.permute.xlu0 %2389
      %2392 = vst.msk [vmem:[#allocation6 + $0x10] sm:$0xc] %vm511, %v2390
      %v2393 = vld [vmem:[%s2201] sm:$0x7]
      %v2395 = vshrl.u32 %v2393, 16
      %v2397 = vrot.slane %v2395, 4
      %v2398 = vshll.u32 %v2393, 16
      %v2400 = vrot.slane %v2398, 5
      %v2401 = vor.u32 %v2397, %v2400
      %v2402 = vrot.slane %v2401, 4
      %2404 = vst.msk [vmem:[#allocation6 + $0x4] sm:$0x3] %vm1153, %v2402
      %v2405 = vld [vmem:[%s2244] sm:$0x7]
      %v2407 = vshrl.u32 %v2405, 16
      %v2409 = vrot.slane %v2407, 6
      %v2410 = vshll.u32 %v2405, 16
      %v2412 = vrot.slane %v2410, 7
      %v2413 = vor.u32 %v2409, %v2412
      %2415 = vst.msk [vmem:[#allocation6 + $0x4] sm:$0xc] %vm1159, %v2413
      %v2416 = vld [vmem:[%s2256] sm:$0x7]
      %v2418 = vshrl.u32 %v2416, 16
      %v2420 = vrot.slane %v2418, 4
      %v2421 = vshll.u32 %v2416, 16
      %v2423 = vrot.slane %v2421, 5
      %v2424 = vor.u32 %v2420, %v2423
      %v2425 = vrot.slane %v2424, 4
      %2427 = vst.msk [vmem:[#allocation6 + $0x14] sm:$0x3] %vm1153, %v2425
      %v2428 = vld [vmem:[%s2265] sm:$0x7]
      %v2430 = vshrl.u32 %v2428, 16
      %v2432 = vrot.slane %v2430, 6
      %v2433 = vshll.u32 %v2428, 16
      %v2435 = vrot.slane %v2433, 7
      %v2436 = vor.u32 %v2432, %v2435
      %2438 = vst.msk [vmem:[#allocation6 + $0x14] sm:$0xc] %vm1159, %v2436
      %v2439 = vld [vmem:[%s2201] sm:$0x6]
      %v2441 = vrot.slane %v2439, 5
      %v2442 = vrot.slane %v2441, 4
      %2443 = vrot.lane.b32.xlu0 %v2442, 32
      %v2444 = vpop.permute.xlu0 %2443
      %2446 = vst.msk [vmem:[#allocation6 + $0x4] sm:$0x3] %vm1181, %v2444
      %v2447 = vld [vmem:[%s2244] sm:$0x6]
      %v2449 = vrot.slane %v2447, 7
      %2450 = vrot.lane.b32.xlu0 %v2449, 32
      %v2451 = vpop.permute.xlu0 %2450
      %2453 = vst.msk [vmem:[#allocation6 + $0x4] sm:$0xc] %vm1195, %v2451
      %v2454 = vld [vmem:[%s2256] sm:$0x6]
      %v2456 = vrot.slane %v2454, 5
      %v2457 = vrot.slane %v2456, 4
      %2458 = vrot.lane.b32.xlu0 %v2457, 32
      %v2459 = vpop.permute.xlu0 %2458
      %2461 = vst.msk [vmem:[#allocation6 + $0x14] sm:$0x3] %vm1181, %v2459
      %v2462 = vld [vmem:[%s2265] sm:$0x6]
      %v2464 = vrot.slane %v2462, 7
      %2465 = vrot.lane.b32.xlu0 %v2464, 32
      %v2466 = vpop.permute.xlu0 %2465
      %2468 = vst.msk [vmem:[#allocation6 + $0x14] sm:$0xc] %vm1195, %v2466
      %v2469 = vld [vmem:[%s2244] sm:$0x3]
      %2471 = vrot.lane.b32.xlu0 %v2469, 64
      %v2472 = vpop.permute.xlu0 %2471
      %2474 = vst.msk [vmem:[#allocation6 + $0x4] sm:$0x3] %vm1231, %v2472
      %v2475 = vld [vmem:[%s2256] sm:$0x3]
      %v2477 = vrot.slane %v2475, 6
      %2478 = vrot.lane.b32.xlu0 %v2477, 64
      %v2479 = vpop.permute.xlu0 %2478
      %2481 = vst.msk [vmem:[#allocation6 + $0x4] sm:$0xc] %vm1239, %v2479
      %v2482 = vld [vmem:[%s2265] sm:$0x3]
      %2484 = vrot.lane.b32.xlu0 %v2482, 64
      %v2485 = vpop.permute.xlu0 %2484
      %2487 = vst.msk [vmem:[#allocation6 + $0x14] sm:$0x3] %vm1231, %v2485
      %v2488 = vld [vmem:[%s2199] sm:$0x3]
      %v2490 = vrot.slane %v2488, 6
      %2491 = vrot.lane.b32.xlu0 %v2490, 64
      %v2492 = vpop.permute.xlu0 %2491
      %2494 = vst.msk [vmem:[#allocation6 + $0x14] sm:$0xc] %vm1239, %v2492
      %v2495 = vld [vmem:[%s2244] sm:$0x7]
      %v2497 = vshrl.u32 %v2495, 16
      %v2499 = vrot.slane %v2497, 4
      %v2500 = vshll.u32 %v2495, 16
      %v2502 = vrot.slane %v2500, 5
      %v2503 = vor.u32 %v2499, %v2502
      %v2504 = vrot.slane %v2503, 4
      %2505 = vrot.lane.b32.xlu0 %v2504, 96
      %v2506 = vpop.permute.xlu0 %2505
      %2508 = vst.msk [vmem:[#allocation6 + $0x4] sm:$0x3] %vm499, %v2506
      %v2509 = vld [vmem:[%s2256] sm:$0x7]
      %v2511 = vshrl.u32 %v2509, 16
      %v2513 = vrot.slane %v2511, 6
      %v2514 = vshll.u32 %v2509, 16
      %v2516 = vrot.slane %v2514, 7
      %v2517 = vor.u32 %v2513, %v2516
      %2518 = vrot.lane.b32.xlu0 %v2517, 96
      %v2519 = vpop.permute.xlu0 %2518
      %2521 = vst.msk [vmem:[#allocation6 + $0x4] sm:$0xc] %vm511, %v2519
      %v2522 = vld [vmem:[%s2265] sm:$0x7]
      %v2524 = vshrl.u32 %v2522, 16
      %v2526 = vrot.slane %v2524, 4
      %v2527 = vshll.u32 %v2522, 16
      %v2529 = vrot.slane %v2527, 5
      %v2530 = vor.u32 %v2526, %v2529
      %v2531 = vrot.slane %v2530, 4
      %2532 = vrot.lane.b32.xlu0 %v2531, 96
      %v2533 = vpop.permute.xlu0 %2532
      %2535 = vst.msk [vmem:[#allocation6 + $0x14] sm:$0x3] %vm499, %v2533
      %v2536 = vld [vmem:[%s2199] sm:$0x7]
      %v2538 = vshrl.u32 %v2536, 16
      %v2540 = vrot.slane %v2538, 6
      %v2541 = vshll.u32 %v2536, 16
      %v2543 = vrot.slane %v2541, 7
      %v2544 = vor.u32 %v2540, %v2543
      %2545 = vrot.lane.b32.xlu0 %v2544, 96
      %v2546 = vpop.permute.xlu0 %2545
      %2548 = vst.msk [vmem:[#allocation6 + $0x14] sm:$0xc] %vm511, %v2546
      %v2549 = vld [vmem:[%s2244] sm:$0x6]
      %v2551 = vrot.slane %v2549, 5
      %v2552 = vrot.slane %v2551, 4
      %2554 = vst.msk [vmem:[#allocation6 + $0x8] sm:$0x3] %vm1153, %v2552
      %v2555 = vld [vmem:[%s2256] sm:$0x6]
      %v2557 = vrot.slane %v2555, 7
      %2559 = vst.msk [vmem:[#allocation6 + $0x8] sm:$0xc] %vm1159, %v2557
      %v2560 = vld [vmem:[%s2265] sm:$0x6]
      %v2562 = vrot.slane %v2560, 5
      %v2563 = vrot.slane %v2562, 4
      %2565 = vst.msk [vmem:[#allocation6 + $0x18] sm:$0x3] %vm1153, %v2563
      %v2566 = vld [vmem:[%s2199] sm:$0x6]
      %v2568 = vrot.slane %v2566, 7
      %2570 = vst.msk [vmem:[#allocation6 + $0x18] sm:$0xc] %vm1159, %v2568
      %v2571 = vld [vmem:[#allocation6] sm:$0xff]
      %v2572 = vld [vmem:[#allocation6 + $0x8] sm:$0xf]
      %v2573 = vld [vmem:[#allocation6 + $0x10] sm:$0xff]
      %v2574 = vld [vmem:[#allocation6 + $0x18] sm:$0xf]
      %v2575 = vld [vmem:[%s7] sm:$0xf]
      %v2576 = vld [vmem:[%s7 + $0x4] sm:$0xf]
      %v2577 = vld [vmem:[%s7 + $0x8] sm:$0xf]
      %v2578 = vld [vmem:[%s7 + $0xc] sm:$0xf]
      %v2579 = vld [vmem:[%s7 + $0x10] sm:$0xf]
      %v2580 = vld [vmem:[%s7 + $0x14] sm:$0xf]
      %v2581 = vld [vmem:[%s7 + $0x18] sm:$0xf]
      %v2582 = vld [vmem:[%s7 + $0x1c] sm:$0xf]
      %v2583 = vld [vmem:[%s7 + $0x20] sm:$0xf]
      %v2584 = vld [vmem:[%s7 + $0x24] sm:$0xf]
      %v2585 = vld [vmem:[%s7 + $0x28] sm:$0xf]
      %v2586 = vld [vmem:[%s7 + $0x2c] sm:$0xf]
      %v2587 = vld [vmem:[%s7 + $0x30] sm:$0xf]
      %v2588 = vld [vmem:[%s7 + $0x34] sm:$0xf]
      %v2589 = vld [vmem:[%s7 + $0x38] sm:$0xf]
      %v2590 = vld [vmem:[%s7 + $0x3c] sm:$0xf]
      %v2591 = vld [vmem:[%s7 + $0x40] sm:$0xf]
      %v2592 = vld [vmem:[%s7 + $0x44] sm:$0xf]
      %v2593 = vld [vmem:[%s7 + $0x48] sm:$0xf]
      %v2594 = vld [vmem:[%s7 + $0x4c] sm:$0xf]
      %v2595 = vld [vmem:[%s7 + $0x50] sm:$0xf]
      %v2596 = vld [vmem:[%s7 + $0x54] sm:$0xf]
      %v2597 = vld [vmem:[%s7 + $0x58] sm:$0xf]
      %v2598 = vld [vmem:[%s7 + $0x5c] sm:$0xf]
      %v2599 = vld [vmem:[%s7 + $0x60] sm:$0xf]
      %v2600 = vld [vmem:[%s7 + $0x64] sm:$0xf]
      %v2601 = vld [vmem:[%s7 + $0x68] sm:$0xf]
      %v2602 = vld [vmem:[%s7 + $0x6c] sm:$0xf]
      %v2603 = vld [vmem:[%s7 + $0x70] sm:$0xf]
      %v2604 = vld [vmem:[%s7 + $0x74] sm:$0xf]
      %v2605 = vld [vmem:[%s7 + $0x78] sm:$0xf]
      %v2606 = vld [vmem:[%s7 + $0x7c] sm:$0xf]
      %v2607 = vld [vmem:[%s7 + $0x80] sm:$0xf]
      %v2608 = vld [vmem:[%s7 + $0x84] sm:$0xf]
      %v2609 = vld [vmem:[%s7 + $0x88] sm:$0xf]
      %v2610 = vld [vmem:[%s7 + $0x8c] sm:$0xf]
      %v2611 = vld [vmem:[%s8] sm:$0x1]
      %v2613 = vperm.slane %v2611, 0
      %v2619 = vunpack.c.l.b16 %v2571
      %v2620 = vunpack.c.h.b16 %v2571
      %v2621 = vunpack.c.l.b16 %v2572
      %v2622 = vunpack.c.l.b16 %v2573
      %v2623 = vunpack.c.h.b16 %v2573
      %v2624 = vunpack.c.l.b16 %v2574
      %v2625 = vpack.c.b16 %v2622, %v2619
      %v2626 = vpack.c.b16 %v2623, %v2620
      %v2627 = vpack.c.b16 %v2624, %v2621
      %v2666 = vunpack.c.l.b16 %v2575
      %v2667 = vunpack.c.l.b16 %v2576
      %v2668 = vunpack.c.l.b16 %v2577
      %v2669 = vunpack.c.l.b16 %v2578
      %v2670 = vunpack.c.l.b16 %v2579
      %v2671 = vunpack.c.l.b16 %v2580
      %v2672 = vunpack.c.l.b16 %v2581
      %v2673 = vunpack.c.l.b16 %v2582
      %v2674 = vunpack.c.l.b16 %v2583
      %v2675 = vunpack.c.l.b16 %v2584
      %v2676 = vunpack.c.l.b16 %v2585
      %v2677 = vunpack.c.l.b16 %v2586
      %v2678 = vunpack.c.l.b16 %v2587
      %v2679 = vunpack.c.l.b16 %v2588
      %v2680 = vunpack.c.l.b16 %v2589
      %v2681 = vunpack.c.l.b16 %v2590
      %v2682 = vunpack.c.l.b16 %v2591
      %v2683 = vunpack.c.l.b16 %v2592
      %v2684 = vunpack.c.l.b16 %v2593
      %v2685 = vunpack.c.l.b16 %v2594
      %v2686 = vunpack.c.l.b16 %v2595
      %v2687 = vunpack.c.l.b16 %v2596
      %v2688 = vunpack.c.l.b16 %v2597
      %v2689 = vunpack.c.l.b16 %v2598
      %v2690 = vunpack.c.l.b16 %v2599
      %v2691 = vunpack.c.l.b16 %v2600
      %v2692 = vunpack.c.l.b16 %v2601
      %v2693 = vunpack.c.l.b16 %v2602
      %v2694 = vunpack.c.l.b16 %v2603
      %v2695 = vunpack.c.l.b16 %v2604
      %v2696 = vunpack.c.l.b16 %v2605
      %v2697 = vunpack.c.l.b16 %v2606
      %v2698 = vunpack.c.l.b16 %v2607
      %v2699 = vunpack.c.l.b16 %v2608
      %v2700 = vunpack.c.l.b16 %v2609
      %v2701 = vunpack.c.l.b16 %v2610
      %v2702 = vpack.c.b16 %v2667, %v2666
      %v2703 = vpack.c.b16 %v2669, %v2668
      %v2704 = vpack.c.b16 %v2671, %v2670
      %v2705 = vpack.c.b16 %v2673, %v2672
      %v2706 = vpack.c.b16 %v2675, %v2674
      %v2707 = vpack.c.b16 %v2677, %v2676
      %v2708 = vpack.c.b16 %v2679, %v2678
      %v2709 = vpack.c.b16 %v2681, %v2680
      %v2710 = vpack.c.b16 %v2683, %v2682
      %v2711 = vpack.c.b16 %v2685, %v2684
      %v2712 = vpack.c.b16 %v2687, %v2686
      %v2713 = vpack.c.b16 %v2689, %v2688
      %v2714 = vpack.c.b16 %v2691, %v2690
      %v2715 = vpack.c.b16 %v2693, %v2692
      %v2716 = vpack.c.b16 %v2695, %v2694
      %v2717 = vpack.c.b16 %v2697, %v2696
      %v2718 = vpack.c.b16 %v2699, %v2698
      %v2719 = vpack.c.b16 %v2701, %v2700
      %v2739 = vsel %vm1627, %v2627, 0
      %2741 = vmatpush.bf16.msra.mxu0 %v2709
      %2742 = vmatpush.bf16.msra.mxu0 %v2708
      %2743 = vmatpush.bf16.msra.mxu0 %v2707
      %2744 = vmatpush.bf16.msra.mxu0 %v2706
      %2745 = vmatpush.bf16.msra.mxu0 %v2705
      %2746 = vmatpush.bf16.msra.mxu0 %v2704
      %2747 = vmatpush.bf16.msra.mxu0 %v2703
      %2748 = vmatpush.bf16.msra.mxu0 %v2702
      %2749 = vmatmul.bf16.gmra.mxu0 %v2625
      %v2750 = vpop.f32.mrf.mxu0
      %v2751 = vadd.f32 %v2613, %v2750
      %v2752 = vpop.f32.mrf.mxu0
      %v2753 = vadd.f32 %v2613, %v2752
      %2754 = vdwg.mxu0
      %2755 = vmatpush.bf16.msra.mxu0 %v2717
      %2756 = vmatpush.bf16.msra.mxu0 %v2716
      %2757 = vmatpush.bf16.msra.mxu0 %v2715
      %2758 = vmatpush.bf16.msra.mxu0 %v2714
      %2759 = vmatpush.bf16.msra.mxu0 %v2713
      %2760 = vmatpush.bf16.msra.mxu0 %v2712
      %2761 = vmatpush.bf16.msra.mxu0 %v2711
      %2762 = vmatpush.bf16.msra.mxu0 %v2710
      %2763 = vmatmul.bf16.gmra.mxu0 %v2626
      %v2764 = vpop.f32.mrf.mxu0
      %v2765 = vadd.f32 %v2751, %v2764
      %v2766 = vpop.f32.mrf.mxu0
      %v2767 = vadd.f32 %v2753, %v2766
      %2768 = vdwg.mxu0
      %2769 = vmatpush.bf16.msra.mxu0 0
      %2770 = vmatpush.bf16.msra.mxu0 0
      %2771 = vmatpush.bf16.msra.mxu0 0
      %2772 = vmatpush.bf16.msra.mxu0 0
      %2773 = vmatpush.bf16.msra.mxu0 0
      %2774 = vmatpush.bf16.msra.mxu0 0
      %2775 = vmatpush.bf16.msra.mxu0 %v2719
      %2776 = vmatpush.bf16.msra.mxu0 %v2718
      %2777 = vmatmul.bf16.gmra.mxu0 %v2739
      %v2778 = vpop.f32.mrf.mxu0
      %v2779 = vadd.f32 %v2765, %v2778
      %v2780 = vpop.f32.mrf.mxu0
      %v2781 = vadd.f32 %v2767, %v2780
      %2782 = vdwg.mxu0
      %v2783 = vxor.u32 %v2779, 2147483648
      %v2784 = vxor.u32 %v2781, 2147483648
      %v2785 = vmul.f32 %v2783, 1.442695
      %v2786 = vpow.pop %v2785
      %v2787 = vmul.f32 %v2784, 1.442695
      %v2788 = vpow.pop %v2787
      %v2789 = vadd.f32 %v2786, 1.0
      %v2790 = vadd.f32 %v2788, 1.0
      %v2791 = vrcp.pop %v2789
      %v2792 = vmul.f32 %v2789, %v2791
      %v2793 = vsub.f32 1.0, %v2792
      %v2794 = vmul.f32 %v2791, %v2793
      %v2795 = vadd.f32 %v2791, %v2794
      %vm2796 = vweird.f32 %v2789
      %vm2797 = vweird.f32 %v2791
      %vm2798 = vmor %vm2796, %vm2797
      %v2799 = vsel %vm2798, %v2791, %v2795
      %v2800 = vand.u32 2147483647, %v2789
      %vm2801 = vcmp.eq.f32.partialorder %v2800, 8.507059e+37
      %v2802 = vand.u32 %v2789, 2147483648
      %v2803 = vor.u32 1.1754944e-38, %v2802
      %v2804 = vsel %vm2801, %v2803, %v2799
      %v2805 = vmul.f32 1.0, %v2804
      %v2806 = vrcp.pop %v2790
      %v2807 = vmul.f32 %v2790, %v2806
      %v2808 = vsub.f32 1.0, %v2807
      %v2809 = vmul.f32 %v2806, %v2808
      %v2810 = vadd.f32 %v2806, %v2809
      %vm2811 = vweird.f32 %v2790
      %vm2812 = vweird.f32 %v2806
      %vm2813 = vmor %vm2811, %vm2812
      %v2814 = vsel %vm2813, %v2806, %v2810
      %v2815 = vand.u32 2147483647, %v2790
      %vm2816 = vcmp.eq.f32.partialorder %v2815, 8.507059e+37
      %v2817 = vand.u32 %v2790, 2147483648
      %v2818 = vor.u32 1.1754944e-38, %v2817
      %v2819 = vsel %vm2816, %v2818, %v2814
      %v2820 = vmul.f32 1.0, %v2819
      %2821 = vst.msk [vmem:[%s332] sm:$0xff] %vm2164, %v2805
      %2822 = vst.msk [vmem:[%s332 + $0x8] sm:$0xff] %vm2164, %v2820
      %p2823 = scmp.lt.s32.totalorder %s20, 1
      %s2824 = scalar_select %p2823, %s20, 1
      %s2825 = smul.addr %s2824, 2
      %s2826 = smul.addr %s2825, 8
      %s2827 = scalar_lea.vmem %s9, %s2826
      // Predicated region
      $region57: #{depth_model_forward.1} parent=55 // pred_check
        %p2828 = pneg %p232
      $region58: #{depth_model_forward.1} parent=55 // pred_check_branch
        %2830 = sbr.rel (%p2828) target = $region60
      $region59: #{depth_model_forward.1} parent=55 // pred_region
        _
      $region60: #{depth_model_forward.1} parent=55 // pred_fallthru
        _
    $region56: #{depth_model_forward.1} parent=5 // pred_fallthru
      _
    %p2831 = scmp.le.s32.totalorder 2, %s15
    // Predicated region
    $region61: #{depth_model_forward.1} parent=5 // pred_check
      %p2832 = pneg %p2831
    $region62: #{depth_model_forward.1} parent=5 // pred_check_branch
      %2834 = sbr.rel (%p2832) target = $region64
    $region63: #{depth_model_forward.1} parent=5 // pred_region
      %s2835 = ssub.s32 %s15, 2
      // Predicated region
      $region65: #{depth_model_forward.1} parent=63 // pred_check
        %p2836 = pneg %p238
      $region66: #{depth_model_forward.1} parent=63 // pred_check_branch
        %2838 = sbr.rel (%p2836) target = $region68
      $region67: #{depth_model_forward.1} parent=63 // pred_region
        %p2839 = scmp.lt.s32.totalorder %s21, 1
        %s2840 = scalar_select %p2839, %s21, 1
        %s2841 = smul.addr %s2840, 2
        %s2842 = smul.addr %s2841, 8
        %s2843 = scalar_lea.vmem %s9, %s2842
      $region68: #{depth_model_forward.1} parent=63 // pred_fallthru
        _
    $region64: #{depth_model_forward.1} parent=5 // pred_fallthru
      _
  $region6: #{depth_model_forward.1} parent=0 // loop_footer
    %s19 = sadd.s32 1, %s15
  $region7: #{depth_model_forward.1} parent=0 // loop_footer_branch
    %14 = sbr.rel target = $region3
  $region8: #{depth_model_forward.1} parent=0 // loop_exit
    _

</llo_original>
